<compile_context>
chip_gen: v5e
topology: v5e:2x2
jax: 0.10.0
libtpu: 0.0.40
codegen_flags: <defaults>
</compile_context>

<pallas_src>
import math
from functools import partial

import jax
import jax.numpy as jnp
from jax.experimental import pallas as pl
from jax.experimental.pallas import tpu as pltpu

EPS = 1e-6
NEG_INF = -1e20
FFN_ROW_CHUNK = 512                   # rows of the flattened (S*B, C) activation per FFN slab
VMEM_LIMIT = 48 * 1024 * 1024         # safe on v5e/v6e/v7x, above the 16/32 MiB defaults


# ----------------------------- shared math helpers -----------------------------

def _bf16(x):
    return x.astype(jnp.bfloat16)


def _mm(a, b):
    """MXU matmul: bf16 operands, f32 accumulation."""
    return jnp.dot(_bf16(a), _bf16(b), preferred_element_type=jnp.float32)


def _layernorm(x, scale, bias):
    # Matches the torch module: unbiased std, normalize by (std + eps).
    mean = jnp.mean(x, axis=-1, keepdims=True)
    d = x - mean
    var = jnp.sum(d * d, axis=-1, keepdims=True) / (x.shape[-1] - 1)
    inv = pl.reciprocal(jnp.sqrt(var) + EPS, approx=True)      # EUP slot
    return scale * (d * inv) + bias


def _attn_row(q_in, k_in, v_in, keep, fill, w_attn, bq, bk, bv, bo, num_heads, fuse_qk):
    """Multi-head attention on the single sequence "row" the callers consume (`[0]`).

    q_in / k_in / v_in: (B, C).  w_attn = [Wq | Wk | Wv | Wo] packed as (C, 4C), bf16.
    keep / fill: precomputed {0,1} / {0,-1e20} mask slabs (exact masked_fill via mul+add).
    """
    B, C = q_in.shape
    H = num_heads
    hd = C // H
    scale = 1.0 / math.sqrt(hd)

    if fuse_qk:
        # Self-attention: fused Q|K projection - one matmul on the shared input.
        qk = _mm(q_in, w_attn[:, :2 * C])
        Q = qk[:, :C] + bq
        K = qk[:, C:] + bk
    else:
        Q = _mm(q_in, w_attn[:, :C]) + bq
        K = _mm(k_in, w_attn[:, C:2 * C]) + bk
    V = _mm(v_in, w_attn[:, 2 * C:3 * C]) + bv
    wo = w_attn[:, 3 * C:]

    # Head split via static lane slices stacked on a new leading (batch) axis.
    Qh = jnp.stack([Q[:, h * hd:(h + 1) * hd] for h in range(H)], axis=0)    # (H,B,hd)
    Kh = jnp.stack([K[:, h * hd:(h + 1) * hd] for h in range(H)], axis=0)
    Vh = jnp.stack([V[:, h * hd:(h + 1) * hd] for h in range(H)], axis=0)

    logits = jnp.einsum('hqd,hkd->hqk', _bf16(Qh), _bf16(Kh),
                        preferred_element_type=jnp.float32) * scale          # (H,B,B)
    if keep is not None:
        # exact masked_fill(mask == 0, -1e20): keep in {0,1}, fill in {0,-1e20}
        logits = logits * keep[None, :, :] + fill[None, :, :]
    m = jnp.max(logits, axis=-1, keepdims=True)
    e = jnp.exp(logits - m)
    p = e * pl.reciprocal(jnp.sum(e, axis=-1, keepdims=True), approx=True)
    ctx = jnp.einsum('hqk,hkd->hqd', _bf16(p), _bf16(Vh),
                     preferred_element_type=jnp.float32)                     # (H,B,hd)
    # Merge heads along lanes and project with the unsplit Wo in ONE (B,C)@(C,C) matmul
    # (replaces H small (hd,C) matmuls + a cross-head reduce).
    ctx_flat = jnp.concatenate([ctx[h] for h in range(H)], axis=-1)          # (B, C)
    return _mm(ctx_flat, wo) + bo


# ------------------------------- Pallas kernels -------------------------------

def _encoder_stack_kernel(num_heads, x_ref, pos0_ref, maskkf_ref,
                          wattn_ref, w1_ref, w2_ref, vec_ref, b1_ref,
                          out_ref, enc0_ref):
    l = pl.program_id(0)

    @pl.when(l == 0)
    def _():
        out_ref[...] = x_ref[...]       # activation stays resident in VMEM across layers

    x = out_ref[...]                    # (R, C), R = S*B, rows are s-major
    R, C = x.shape
    B = pos0_ref.shape[0]
    S = R // B

    pos0 = pos0_ref[...]                # (B, C)  == pos row 0
    keep = maskkf_ref[0]                # (B, S)  {0,1}
    fill = maskkf_ref[1]                # (B, S)  {0,-1e20}

    w_attn = wattn_ref[0]               # (C, 4C) bf16 = [Wq|Wk|Wv|Wo]
    w1 = w1_ref[0]                      # (C, F)  bf16
    w2 = w2_ref[0]                      # (F, C)  bf16
    b1 = b1_ref[0]                      # (1, F)  f32
    vecs = vec_ref[0]                   # (9, C)  f32: LN params + biases, packed
    ln1s, ln1b = vecs[0:1], vecs[1:2]
    ln2s, ln2b = vecs[2:3], vecs[3:4]
    bq, bk, bv, bo, b2 = vecs[4:5], vecs[5:6], vecs[6:7], vecs[7:8], vecs[8:9]

    # --- self attention: only row 0 of the MHA output is consumed (`[0]`) ---
    x0 = x[0:B, :]                                       # rows for s == 0
    qk0 = _layernorm(x0, ln1s, ln1b) + pos0
    attn0 = _attn_row(qk0, qk0, x0, keep, fill, w_attn, bq, bk, bv, bo,
                      num_heads, fuse_qk=True)

    # --- residual + LN over all rows (row s*B+b gets attn0[b]) ---
    attn_rows = jnp.broadcast_to(attn0[None, :, :], (S, B, C)).reshape(R, C)
    skip = _layernorm(x + attn_rows, ln2s, ln2b)

    # --- row-chunked FFN: bounds the (rows, F) f32 hidden intermediate in VMEM ---
    chunk = min(R, FFN_ROW_CHUNK)
    for r0 in range(0, R, chunk):
        r1 = min(R, r0 + chunk)
        sk = skip[r0:r1, :]
        hid = jnp.maximum(_mm(sk, w1) + b1, 0.0)
        out_ref[r0:r1, :] = sk + _mm(hid, w2) + b2

    # Final row-0 slab handed straight to the decoder kernel (last layer's value lands).
    enc0_ref[...] = out_ref[0:B, :]


def _decoder_stack_kernel(num_heads, enc0_ref, pos0_ref, qpos0_ref, maskkf_ref,
                          wattn_ref, w1_ref, w2_ref, vec_ref, b1_ref, out_ref):
    l = pl.program_id(0)

    @pl.when(l == 0)
    def _():
        out_ref[...] = jnp.zeros_like(out_ref)   # target = torch.zeros_like(query_embed)

    # out_ref carries the single (B, C) row-representative of the (nq, B, C) decoder
    # state (all rows are identical since the target is zero; see header notes).
    x = out_ref[...]                    # (B, C)
    enc0 = enc0_ref[...]                # (B, C)  == encoder output row 0
    pos0 = pos0_ref[...]                # (B, C)
    qpos0 = qpos0_ref[...]              # (B, C)
    keep = maskkf_ref[0]                # (B, S)
    fill = maskkf_ref[1]

    C = x.shape[1]
    w_all = wattn_ref[0]                # (C, 8C) bf16 = [self-attn | cross-attn]
    w_self = w_all[:, :4 * C]
    w_cross = w_all[:, 4 * C:]
    w1 = w1_ref[0]
    w2 = w2_ref[0]
    b1 = b1_ref[0]
    vecs = vec_ref[0]                   # (15, C)
    ln1s, ln1b = vecs[0:1], vecs[1:2]
    ln2s, ln2b = vecs[2:3], vecs[3:4]
    ln3s, ln3b = vecs[4:5], vecs[5:6]
    m_bq, m_bk, m_bv, m_bo = vecs[6:7], vecs[7:8], vecs[8:9], vecs[9:10]
    c_bq, c_bk, c_bv, c_bo = vecs[10:11], vecs[11:12], vecs[12:13], vecs[13:14]
    b2 = vecs[14:15]

    # masked self-attention (look_ahead_mask is None in the reference Transformer)
    qk0 = _layernorm(x, ln1s, ln1b) + pos0
    mha1 = _attn_row(qk0, qk0, x, None, None, w_self, m_bq, m_bk, m_bv, m_bo,
                     num_heads, fuse_qk=True)
    s1 = _layernorm(x + mha1, ln2s, ln2b)

    # cross-attention against (row 0 of) the encoder output, with padding mask
    mha2 = _attn_row(s1 + qpos0, enc0 + pos0, enc0, keep, fill, w_cross,
                     c_bq, c_bk, c_bv, c_bo, num_heads, fuse_qk=False)
    skip2 = _layernorm(x + mha2, ln3s, ln3b)   # residual from original x (as in torch)

    hid = jnp.maximum(_mm(skip2, w1) + b1, 0.0)
    out_ref[...] = skip2 + _mm(hid, w2) + b2


# ------------------------------ pallas_call wrappers ----------------------------

def _encoder_stack(p, src2d, pos0, maskkf, num_heads):
    L, C, _ = p["w_attn"].shape
    R = src2d.shape[0]
    B = pos0.shape[0]
    S = maskkf.shape[-1]
    F = p["w1"].shape[-1]
    act, enc0 = pl.pallas_call(
        partial(_encoder_stack_kernel, num_heads),
        out_shape=(jax.ShapeDtypeStruct((R, C), jnp.float32),
                   jax.ShapeDtypeStruct((B, C), jnp.float32)),
        grid=(L,),
        in_specs=[
            pl.BlockSpec((R, C), lambda l: (0, 0)),            # initial activation
            pl.BlockSpec((B, C), lambda l: (0, 0)),            # pos row 0
            pl.BlockSpec((2, B, S), lambda l: (0, 0, 0)),      # keep / fill mask slabs
            pl.BlockSpec((1, C, 4 * C), lambda l: (l, 0, 0)),  # [Wq|Wk|Wv|Wo] (bf16)
            pl.BlockSpec((1, C, F), lambda l: (l, 0, 0)),      # FFN W1 (bf16)
            pl.BlockSpec((1, F, C), lambda l: (l, 0, 0)),      # FFN W2 (bf16)
            pl.BlockSpec((1, 9, C), lambda l: (l, 0, 0)),      # LN params + biases (f32)
            pl.BlockSpec((1, 1, F), lambda l: (l, 0, 0)),      # FFN b1 (f32)
        ],
        out_specs=(pl.BlockSpec((R, C), lambda l: (0, 0)),     # resident accumulator
                   pl.BlockSpec((B, C), lambda l: (0, 0))),    # final row-0 slab
        input_output_aliases={0: 0},                           # src buffer reused as output
        compiler_params=pltpu.CompilerParams(
            dimension_semantics=("arbitrary",),
            vmem_limit_bytes=VMEM_LIMIT),
    )(src2d, pos0, maskkf, p["w_attn"], p["w1"], p["w2"], p["vecs"], p["b1"])
    return act, enc0


def _decoder_stack(p, enc0, pos0, qpos0, maskkf, num_heads):
    L, C, _ = p["w_attn"].shape
    B = enc0.shape[0]
    S = maskkf.shape[-1]
    F = p["w1"].shape[-1]
    return pl.pallas_call(
        partial(_decoder_stack_kernel, num_heads),
        out_shape=jax.ShapeDtypeStruct((B, C), jnp.float32),
        grid=(L,),
        in_specs=[
            pl.BlockSpec((B, C), lambda l: (0, 0)),            # encoder output row 0
            pl.BlockSpec((B, C), lambda l: (0, 0)),            # pos row 0
            pl.BlockSpec((B, C), lambda l: (0, 0)),            # query_pos row 0
            pl.BlockSpec((2, B, S), lambda l: (0, 0, 0)),      # keep / fill mask slabs
            pl.BlockSpec((1, C, 8 * C), lambda l: (l, 0, 0)),  # [self | cross] (bf16)
            pl.BlockSpec((1, C, F), lambda l: (l, 0, 0)),      # FFN W1 (bf16)
            pl.BlockSpec((1, F, C), lambda l: (l, 0, 0)),      # FFN W2 (bf16)
            pl.BlockSpec((1, 15, C), lambda l: (l, 0, 0)),     # LN params + biases (f32)
            pl.BlockSpec((1, 1, F), lambda l: (l, 0, 0)),      # FFN b1 (f32)
        ],
        out_specs=pl.BlockSpec((B, C), lambda l: (0, 0)),      # resident accumulator
        compiler_params=pltpu.CompilerParams(
            dimension_semantics=("arbitrary",),
            vmem_limit_bytes=VMEM_LIMIT),
    )(enc0, pos0, qpos0, maskkf,
      p["w_attn"], p["w1"], p["w2"], p["vecs"], p["b1"])


# ------------------------------ parameter init ---------------------------------

def _linear_params(key, fan_in, fan_out):
    kw, kb = jax.random.split(key)
    bound = 1.0 / math.sqrt(fan_in)
    w = jax.random.uniform(kw, (fan_in, fan_out), jnp.float32, -bound, bound)
    b = jax.random.uniform(kb, (fan_out,), jnp.float32, -bound, bound)
    return w, b


def _encoder_layer_params(key, d_model, dff):
    keys = jax.random.split(key, 6)
    wq, bq = _linear_params(keys[0], d_model, d_model)
    wk, bk = _linear_params(keys[1], d_model, d_model)
    wv, bv = _linear_params(keys[2], d_model, d_model)
    wo, bo = _linear_params(keys[3], d_model, d_model)
    w1, b1 = _linear_params(keys[4], d_model, dff)
    w2, b2 = _linear_params(keys[5], dff, d_model)
    ones = jnp.ones((d_model,), jnp.float32)
    zeros = jnp.zeros((d_model,), jnp.float32)
    w_attn = jnp.concatenate([wq, wk, wv, wo], axis=1).astype(jnp.bfloat16)   # (C, 4C)
    vecs = jnp.stack([ones, zeros, ones, zeros, bq, bk, bv, bo, b2])          # (9, C)
    return (w_attn, w1.astype(jnp.bfloat16), w2.astype(jnp.bfloat16), vecs, b1[None, :])


def _decoder_layer_params(key, d_model, dff):
    keys = jax.random.split(key, 10)
    m_wq, m_bq = _linear_params(keys[0], d_model, d_model)
    m_wk, m_bk = _linear_params(keys[1], d_model, d_model)
    m_wv, m_bv = _linear_params(keys[2], d_model, d_model)
    m_wo, m_bo = _linear_params(keys[3], d_model, d_model)
    c_wq, c_bq = _linear_params(keys[4], d_model, d_model)
    c_wk, c_bk = _linear_params(keys[5], d_model, d_model)
    c_wv, c_bv = _linear_params(keys[6], d_model, d_model)
    c_wo, c_bo = _linear_params(keys[7], d_model, d_model)
    w1, b1 = _linear_params(keys[8], d_model, dff)
    w2, b2 = _linear_params(keys[9], dff, d_model)
    ones = jnp.ones((d_model,), jnp.float32)
    zeros = jnp.zeros((d_model,), jnp.float32)
    w_attn = jnp.concatenate([m_wq, m_wk, m_wv, m_wo,
                              c_wq, c_wk, c_wv, c_wo], axis=1).astype(jnp.bfloat16)  # (C, 8C)
    vecs = jnp.stack([ones, zeros, ones, zeros, ones, zeros,
                      m_bq, m_bk, m_bv, m_bo, c_bq, c_bk, c_bv, c_bo, b2])            # (15, C)
    return (w_attn, w1.astype(jnp.bfloat16), w2.astype(jnp.bfloat16), vecs, b1[None, :])


def init_transformer_params(key, num_enc, num_dec, d_model, dff):
    keys = jax.random.split(key, num_enc + num_dec)
    enc = [_encoder_layer_params(keys[i], d_model, dff) for i in range(num_enc)]
    dec = [_decoder_layer_params(keys[num_enc + i], d_model, dff) for i in range(num_dec)]
    names = ("w_attn", "w1", "w2", "vecs", "b1")
    return {
        "encoder": {n: jnp.stack([lp[i] for lp in enc]) for i, n in enumerate(names)},
        "decoder": {n: jnp.stack([lp[i] for lp in dec]) for i, n in enumerate(names)},
    }


# ------------------------------ forward wrapper ---------------------------------

def transformer_forward(params, src, mask, query_embed, pos_embed, num_heads):
    bs, c, h, w = src.shape
    S = h * w
    nq = query_embed.shape[0]
    # The reference module's broadcasts / views are only valid under these constraints.
    assert S == bs and nq == S, "reference semantics require h*w == bs == num_queries"

    # Flattened, lane-dense (rows = S*bs, c) activation, rows s-major (row = s*bs + b).
    src2d = jnp.transpose(src.reshape(bs, c, S), (2, 0, 1)).reshape(S * bs, c)
    pos0 = pos_embed.reshape(bs, c, S)[:, :, 0]                  # (bs, c)  == pos_seq[0]
    qpos0 = jnp.broadcast_to(query_embed[0:1, :], (bs, c))       # (bs, c)  == query_pos[0]
    mask_f = mask.reshape(bs, S).astype(jnp.float32)
    keep = (mask_f != 0.0).astype(jnp.float32)                   # {0,1}
    maskkf = jnp.stack([keep, (1.0 - keep) * NEG_INF])           # (2, bs, S): keep / fill

    enc2d, enc0 = _encoder_stack(params["encoder"], src2d, pos0, maskkf, num_heads)

    # Decoder state has identical rows along nq (zero target), so only one row is
    # computed in-kernel and broadcast back here (exact algebra vs. the reference).
    dec_row = _decoder_stack(params["decoder"], enc0, pos0, qpos0, maskkf, num_heads)
    dec_out = jnp.broadcast_to(dec_row[None, :, :], (nq, bs, c))[None]   # (1, nq, bs, c)

    out1 = jnp.transpose(dec_out, (0, 2, 1, 3))                          # (1, bs, nq, c)
    out2 = jnp.transpose(enc2d.reshape(S, bs, c), (1, 2, 0)).reshape(bs, c, h, w)
    return out1, out2


# ---------------- pure-JAX literal reference (for a numeric self-check) ----------------
# Same bf16-operand / f32-accumulation matmul policy as the kernel; exact softmax / LN
# division (the kernel uses approx reciprocals), full S / all heads / full decoder state.

def _ref_layernorm(x, scale, bias):
    mean = jnp.mean(x, axis=-1, keepdims=True)
    d = x - mean
    var = jnp.sum(d * d, axis=-1, keepdims=True) / (x.shape[-1] - 1)
    return scale * (d / (jnp.sqrt(var) + EPS)) + bias


def _ref_mha(q, k, v, mask, w_attn, bq, bk, bv, bo, num_heads):
    S, B, C = q.shape
    H = num_heads
    hd = C // H
    wq, wk, wv, wo = (w_attn[:, i * C:(i + 1) * C] for i in range(4))
    Q = (_mm(q.reshape(-1, C), wq) + bq).reshape(S, B, H, hd)
    K = (_mm(k.reshape(-1, C), wk) + bk).reshape(S, B, H, hd)
    V = (_mm(v.reshape(-1, C), wv) + bv).reshape(S, B, H, hd)
    logits = jnp.einsum('sqhd,skhd->shqk', _bf16(Q), _bf16(K),
                        preferred_element_type=jnp.float32) / math.sqrt(hd)
    if mask is not None:
        logits = jnp.where(mask[None, None, :, :] == 0.0, NEG_INF, logits)
    p = jax.nn.softmax(logits, axis=-1)
    ctx = jnp.einsum('shqk,skhd->sqhd', _bf16(p), _bf16(V),
                     preferred_element_type=jnp.float32).reshape(S, B, C)
    return (_mm(ctx.reshape(-1, C), wo) + bo).reshape(S, B, C)


def _ref_encoder_layer(x, pos, mask, w_attn, w1, w2, vecs, b1, num_heads):
    S, B, C = x.shape
    qk = _ref_layernorm(x, vecs[0], vecs[1]) + pos
    mha = _ref_mha(qk, qk, x, mask, w_attn, vecs[4], vecs[5], vecs[6], vecs[7], num_heads)[0]
    skip = _ref_layernorm(x + mha[None, :, :], vecs[2], vecs[3])
    hidden = jnp.maximum(_mm(skip.reshape(-1, C), w1) + b1, 0.0)
    ffn = (_mm(hidden, w2) + vecs[8]).reshape(S, B, C)
    return skip + ffn


def _ref_decoder_layer(x, enc, pos, qpos, mask, w_slab, w1, w2, vecs, b1, num_heads):
    S, B, C = x.shape
    w_self = w_slab[:, :4 * C]
    w_cross = w_slab[:, 4 * C:]
    qk = _ref_layernorm(x, vecs[0], vecs[1]) + pos
    mha1 = _ref_mha(qk, qk, x, None, w_self,
                    vecs[6], vecs[7], vecs[8], vecs[9], num_heads)[0]
    s1 = _ref_layernorm(x + mha1[None, :, :], vecs[2], vecs[3])
    mha2 = _ref_mha(s1 + qpos, enc + pos, enc, mask, w_cross,
                    vecs[10], vecs[11], vecs[12], vecs[13], num_heads)[0]
    s2 = _ref_layernorm(x + mha2[None, :, :], vecs[4], vecs[5])
    hidden = jnp.maximum(_mm(s2.reshape(-1, C), w1) + b1, 0.0)
    ffn = (_mm(hidden, w2) + vecs[14]).reshape(S, B, C)
    return s2 + ffn


def reference_forward(params, src, mask, query_embed, pos_embed, num_heads):
    bs, c, h, w = src.shape
    S = h * w
    nq = query_embed.shape[0]
    src_seq = jnp.transpose(src.reshape(bs, c, S), (2, 0, 1))
    pos_seq = jnp.transpose(pos_embed.reshape(bs, c, S), (2, 0, 1))
    qpos = jnp.broadcast_to(query_embed[:, None, :], (nq, bs, c))
    mask_f = mask.reshape(bs, S).astype(jnp.float32)

    ep = params["encoder"]
    x = src_seq
    for l in range(ep["w_attn"].shape[0]):
        x = _ref_encoder_layer(x, pos_seq, mask_f, ep["w_attn"][l], ep["w1"][l],
                               ep["w2"][l], ep["vecs"][l], ep["b1"][l], num_heads)
    encoded = x

    dp = params["decoder"]
    y = jnp.zeros((nq, bs, c), jnp.float32)
    for l in range(dp["w_attn"].shape[0]):
        y = _ref_decoder_layer(y, encoded, pos_seq, qpos, mask_f,
                               dp["w_attn"][l], dp["w1"][l], dp["w2"][l],
                               dp["vecs"][l], dp["b1"][l], num_heads)
    out1 = jnp.transpose(y[None], (0, 2, 1, 3))
    out2 = jnp.transpose(encoded, (1, 2, 0)).reshape(bs, c, h, w)
    return out1, out2


# ----------------------------------- main ---------------------------------------

if __name__ == "__main__":
    key = jax.random.PRNGKey(0)
    bs, d_model, h, w = 4, 128, 2, 2       # h*w == bs (required by reference semantics)
    num_heads, dff = 8, 256
    num_enc_layers, num_dec_layers = 2, 2
    num_queries = h * w                    # == h*w == bs (required by reference semantics)

    k_src, k_pos, k_q, k_p = jax.random.split(key, 4)
    src = jax.random.normal(k_src, (bs, d_model, h, w), jnp.float32)
    pos_embed = jax.random.normal(k_pos, (bs, d_model, h, w), jnp.float32)
    query_embed = jax.random.normal(k_q, (num_queries, d_model), jnp.float32)
    mask = jnp.ones((bs, h, w), jnp.float32).at[0, 0, 0].set(0.0)    # one padded position

    params = init_transformer_params(k_p, num_enc_layers, num_dec_layers, d_model, dff)

    fwd = jax.jit(partial(transformer_forward, num_heads=num_heads))
    out, enc = fwd(params, src, mask, query_embed, pos_embed)
    jax.block_until_ready((out, enc))

    assert out.shape == (1, bs, num_queries, d_model)
    assert enc.shape == (bs, d_model, h, w)
    assert bool(jnp.all(jnp.isfinite(out))) and bool(jnp.all(jnp.isfinite(enc)))

    # Numeric self-check against a literal pure-JAX port of the PyTorch graph with the
    # same bf16/f32 matmul policy (validates the row-0 / identical-row restructuring;
    # tolerance absorbs the kernel's approx reciprocals in softmax / LayerNorm).
    ref_out, ref_enc = reference_forward(params, src, mask, query_embed, pos_embed, num_heads)
    assert bool(jnp.allclose(out, ref_out, rtol=5e-2, atol=1e-1)), "decoder output mismatch"
    assert bool(jnp.allclose(enc, ref_enc, rtol=5e-2, atol=1e-1)), "encoder output mismatch"

    print("KERNEL_OK")
</pallas_src>

<mosaic_0001>
module attributes {stable_mosaic.version = 11 : i64} {
  func.func @_encoder_stack_kernel(%arg0: i32, %arg1: memref<16x128xf32, #tpu.memory_space<vmem>>, %arg2: memref<4x128xf32, #tpu.memory_space<vmem>>, %arg3: memref<2x4x4xf32, #tpu.memory_space<vmem>>, %arg4: memref<1x128x512xbf16, #tpu.memory_space<vmem>>, %arg5: memref<1x128x256xbf16, #tpu.memory_space<vmem>>, %arg6: memref<1x256x128xbf16, #tpu.memory_space<vmem>>, %arg7: memref<1x9x128xf32, #tpu.memory_space<vmem>>, %arg8: memref<1x1x256xf32, #tpu.memory_space<vmem>>, %arg9: memref<16x128xf32, #tpu.memory_space<vmem>>, %arg10: memref<4x128xf32, #tpu.memory_space<vmem>>) attributes {dimension_semantics = [#tpu.dimension_semantics<arbitrary>], iteration_bounds = array<i64: 2>, scalar_prefetch = 0 : i64, scratch_operands = 0 : i64, tpu.core_type = #tpu.core_type<tc>, window_params = [{pipeline_mode = #tpu.pipeline_mode<synchronous>, transform_indices = @transform_0, window_bounds = array<i64: 16, 128>}, {pipeline_mode = #tpu.pipeline_mode<synchronous>, transform_indices = @transform_1, window_bounds = array<i64: 4, 128>}, {pipeline_mode = #tpu.pipeline_mode<synchronous>, transform_indices = @transform_2, window_bounds = array<i64: 2, 4, 4>}, {transform_indices = @transform_3, window_bounds = array<i64: 1, 128, 512>}, {transform_indices = @transform_4, window_bounds = array<i64: 1, 128, 256>}, {transform_indices = @transform_5, window_bounds = array<i64: 1, 256, 128>}, {transform_indices = @transform_6, window_bounds = array<i64: 1, 9, 128>}, {transform_indices = @transform_7, window_bounds = array<i64: 1, 1, 256>}, {pipeline_mode = #tpu.pipeline_mode<synchronous>, transform_indices = @transform_8, window_bounds = array<i64: 16, 128>}, {pipeline_mode = #tpu.pipeline_mode<synchronous>, transform_indices = @transform_9, window_bounds = array<i64: 4, 128>}]} {
    %c0_i32 = arith.constant 0 : i32
    %0 = arith.cmpi eq, %arg0, %c0_i32 : i32
    %1 = arith.extui %0 : i1 to i32
    %c0_i32_0 = arith.constant 0 : i32
    %2 = arith.cmpi ne, %1, %c0_i32_0 : i32
    scf.if %2 {
      %c0_50 = arith.constant 0 : index
      %c0_51 = arith.constant 0 : index
      %202 = vector.load %arg1[%c0_50, %c0_51] : memref<16x128xf32, #tpu.memory_space<vmem>>, vector<16x128xf32>
      %c0_52 = arith.constant 0 : index
      %c0_53 = arith.constant 0 : index
      %203 = vector.load %arg9[%c0_52, %c0_53] : memref<16x128xf32, #tpu.memory_space<vmem>>, vector<16x128xf32>
      tpu.vector_store %arg9[%c0_52, %c0_53], %202 {strides = array<i32>} : memref<16x128xf32, #tpu.memory_space<vmem>>, vector<16x128xf32>,
    } else {
    }
    %c0 = arith.constant 0 : index
    %c0_1 = arith.constant 0 : index
    %3 = vector.load %arg9[%c0, %c0_1] : memref<16x128xf32, #tpu.memory_space<vmem>>, vector<16x128xf32>
    %c0_2 = arith.constant 0 : index
    %c0_3 = arith.constant 0 : index
    %4 = vector.load %arg2[%c0_2, %c0_3] : memref<4x128xf32, #tpu.memory_space<vmem>>, vector<4x128xf32>
    %c0_4 = arith.constant 0 : index
    %c0_5 = arith.constant 0 : index
    %c0_6 = arith.constant 0 : index
    %5 = vector.load %arg3[%c0_4, %c0_5, %c0_6] : memref<2x4x4xf32, #tpu.memory_space<vmem>>, vector<1x4x4xf32>
    %6 = vector.shape_cast %5 : vector<1x4x4xf32> to vector<4x4xf32>
    %c1 = arith.constant 1 : index
    %c0_7 = arith.constant 0 : index
    %c0_8 = arith.constant 0 : index
    %7 = vector.load %arg3[%c1, %c0_7, %c0_8] : memref<2x4x4xf32, #tpu.memory_space<vmem>>, vector<1x4x4xf32>
    %8 = vector.shape_cast %7 : vector<1x4x4xf32> to vector<4x4xf32>
    %c0_9 = arith.constant 0 : index
    %c0_10 = arith.constant 0 : index
    %c0_11 = arith.constant 0 : index
    %9 = vector.load %arg4[%c0_9, %c0_10, %c0_11] : memref<1x128x512xbf16, #tpu.memory_space<vmem>>, vector<1x128x512xbf16>
    %10 = vector.shape_cast %9 : vector<1x128x512xbf16> to vector<128x512xbf16>
    %c0_12 = arith.constant 0 : index
    %c0_13 = arith.constant 0 : index
    %c0_14 = arith.constant 0 : index
    %11 = vector.load %arg5[%c0_12, %c0_13, %c0_14] : memref<1x128x256xbf16, #tpu.memory_space<vmem>>, vector<1x128x256xbf16>
    %12 = vector.shape_cast %11 : vector<1x128x256xbf16> to vector<128x256xbf16>
    %c0_15 = arith.constant 0 : index
    %c0_16 = arith.constant 0 : index
    %c0_17 = arith.constant 0 : index
    %13 = vector.load %arg6[%c0_15, %c0_16, %c0_17] : memref<1x256x128xbf16, #tpu.memory_space<vmem>>, vector<1x256x128xbf16>
    %14 = vector.shape_cast %13 : vector<1x256x128xbf16> to vector<256x128xbf16>
    %c0_18 = arith.constant 0 : index
    %c0_19 = arith.constant 0 : index
    %c0_20 = arith.constant 0 : index
    %15 = vector.load %arg8[%c0_18, %c0_19, %c0_20] : memref<1x1x256xf32, #tpu.memory_space<vmem>>, vector<1x1x256xf32>
    %16 = vector.shape_cast %15 : vector<1x1x256xf32> to vector<1x256xf32>
    %c0_21 = arith.constant 0 : index
    %c0_22 = arith.constant 0 : index
    %c0_23 = arith.constant 0 : index
    %17 = vector.load %arg7[%c0_21, %c0_22, %c0_23] : memref<1x9x128xf32, #tpu.memory_space<vmem>>, vector<1x9x128xf32>
    %18 = vector.shape_cast %17 : vector<1x9x128xf32> to vector<9x128xf32>
    %19 = vector.extract_strided_slice %18 {offsets = [0, 0], sizes = [1, 128], strides = [1, 1]} : vector<9x128xf32> to vector<1x128xf32>
    %20 = vector.extract_strided_slice %18 {offsets = [1, 0], sizes = [1, 128], strides = [1, 1]} : vector<9x128xf32> to vector<1x128xf32>
    %21 = vector.extract_strided_slice %18 {offsets = [2, 0], sizes = [1, 128], strides = [1, 1]} : vector<9x128xf32> to vector<1x128xf32>
    %22 = vector.extract_strided_slice %18 {offsets = [3, 0], sizes = [1, 128], strides = [1, 1]} : vector<9x128xf32> to vector<1x128xf32>
    %23 = vector.extract_strided_slice %18 {offsets = [4, 0], sizes = [1, 128], strides = [1, 1]} : vector<9x128xf32> to vector<1x128xf32>
    %24 = vector.extract_strided_slice %18 {offsets = [5, 0], sizes = [1, 128], strides = [1, 1]} : vector<9x128xf32> to vector<1x128xf32>
    %25 = vector.extract_strided_slice %18 {offsets = [6, 0], sizes = [1, 128], strides = [1, 1]} : vector<9x128xf32> to vector<1x128xf32>
    %26 = vector.extract_strided_slice %18 {offsets = [7, 0], sizes = [1, 128], strides = [1, 1]} : vector<9x128xf32> to vector<1x128xf32>
    %27 = vector.extract_strided_slice %18 {offsets = [8, 0], sizes = [1, 128], strides = [1, 1]} : vector<9x128xf32> to vector<1x128xf32>
    %28 = vector.extract_strided_slice %3 {offsets = [0, 0], sizes = [4, 128], strides = [1, 1]} : vector<16x128xf32> to vector<4x128xf32>
    %cst = arith.constant dense<0.000000e+00> : vector<4xf32>
    %29 = vector.multi_reduction <add>, %28, %cst [1] : vector<4x128xf32> to vector<4xf32>
    %30 = vector.shape_cast %29 : vector<4xf32> to vector<4x1xf32>
    %cst_24 = arith.constant 1.280000e+02 : f32
    %31 = vector.broadcast %cst_24 : f32 to vector<4x1xf32>
    %32 = arith.divf %30, %31 : vector<4x1xf32>
    %33 = vector.broadcast %32 : vector<4x1xf32> to vector<4x128xf32>
    %34 = arith.subf %28, %33 : vector<4x128xf32>
    %35 = arith.mulf %34, %34 : vector<4x128xf32>
    %cst_25 = arith.constant dense<0.000000e+00> : vector<4xf32>
    %36 = vector.multi_reduction <add>, %35, %cst_25 [1] : vector<4x128xf32> to vector<4xf32>
    %37 = vector.shape_cast %36 : vector<4xf32> to vector<4x1xf32>
    %cst_26 = arith.constant 1.270000e+02 : f32
    %38 = vector.broadcast %cst_26 : f32 to vector<4x1xf32>
    %39 = arith.divf %37, %38 : vector<4x1xf32>
    %40 = math.sqrt %39 : vector<4x1xf32>
    %cst_27 = arith.constant 9.99999997E-7 : f32
    %41 = vector.broadcast %cst_27 : f32 to vector<4x1xf32>
    %42 = arith.addf %40, %41 : vector<4x1xf32>
    %43 = tpu.reciprocal %42 {approx = true} : vector<4x1xf32> -> vector<4x1xf32>
    %44 = vector.broadcast %43 : vector<4x1xf32> to vector<4x128xf32>
    %45 = arith.mulf %34, %44 : vector<4x128xf32>
    %46 = vector.broadcast %19 : vector<1x128xf32> to vector<4x128xf32>
    %47 = arith.mulf %46, %45 : vector<4x128xf32>
    %48 = vector.broadcast %20 : vector<1x128xf32> to vector<4x128xf32>
    %49 = arith.addf %47, %48 : vector<4x128xf32>
    %50 = arith.addf %49, %4 : vector<4x128xf32>
    %51 = vector.extract_strided_slice %10 {offsets = [0, 0], sizes = [128, 256], strides = [1, 1]} : vector<128x512xbf16> to vector<128x256xbf16>
    %52 = arith.truncf %50 : vector<4x128xf32> to vector<4x128xbf16>
    %cst_28 = arith.constant dense<0.000000e+00> : vector<4x256xf32>
    %53 = tpu.matmul %52, %51, %cst_28 {dimension_numbers = #tpu.dot_dimension_numbers<[1], [0], [0], [1], [0, 0, 1, 1], [], []>} : vector<4x128xbf16>, vector<128x256xbf16>, vector<4x256xf32> -> vector<4x256xf32>
    %54 = vector.extract_strided_slice %53 {offsets = [0, 0], sizes = [4, 128], strides = [1, 1]} : vector<4x256xf32> to vector<4x128xf32>
    %55 = vector.broadcast %23 : vector<1x128xf32> to vector<4x128xf32>
    %56 = arith.addf %54, %55 : vector<4x128xf32>
    %57 = vector.extract_strided_slice %53 {offsets = [0, 128], sizes = [4, 128], strides = [1, 1]} : vector<4x256xf32> to vector<4x128xf32>
    %58 = vector.broadcast %24 : vector<1x128xf32> to vector<4x128xf32>
    %59 = arith.addf %57, %58 : vector<4x128xf32>
    %60 = vector.extract_strided_slice %10 {offsets = [0, 256], sizes = [128, 128], strides = [1, 1]} : vector<128x512xbf16> to vector<128x128xbf16>
    %61 = arith.truncf %28 : vector<4x128xf32> to vector<4x128xbf16>
    %cst_29 = arith.constant dense<0.000000e+00> : vector<4x128xf32>
    %62 = tpu.matmul %61, %60, %cst_29 {dimension_numbers = #tpu.dot_dimension_numbers<[1], [0], [0], [1], [0, 0, 1, 1], [], []>} : vector<4x128xbf16>, vector<128x128xbf16>, vector<4x128xf32> -> vector<4x128xf32>
    %63 = vector.broadcast %25 : vector<1x128xf32> to vector<4x128xf32>
    %64 = arith.addf %62, %63 : vector<4x128xf32>
    %65 = vector.extract_strided_slice %10 {offsets = [0, 384], sizes = [128, 128], strides = [1, 1]} : vector<128x512xbf16> to vector<128x128xbf16>
    %66 = vector.extract_strided_slice %56 {offsets = [0, 0], sizes = [4, 16], strides = [1, 1]} : vector<4x128xf32> to vector<4x16xf32>
    %67 = vector.extract_strided_slice %56 {offsets = [0, 16], sizes = [4, 16], strides = [1, 1]} : vector<4x128xf32> to vector<4x16xf32>
    %68 = vector.extract_strided_slice %56 {offsets = [0, 32], sizes = [4, 16], strides = [1, 1]} : vector<4x128xf32> to vector<4x16xf32>
    %69 = vector.extract_strided_slice %56 {offsets = [0, 48], sizes = [4, 16], strides = [1, 1]} : vector<4x128xf32> to vector<4x16xf32>
    %70 = vector.extract_strided_slice %56 {offsets = [0, 64], sizes = [4, 16], strides = [1, 1]} : vector<4x128xf32> to vector<4x16xf32>
    %71 = vector.extract_strided_slice %56 {offsets = [0, 80], sizes = [4, 16], strides = [1, 1]} : vector<4x128xf32> to vector<4x16xf32>
    %72 = vector.extract_strided_slice %56 {offsets = [0, 96], sizes = [4, 16], strides = [1, 1]} : vector<4x128xf32> to vector<4x16xf32>
    %73 = vector.extract_strided_slice %56 {offsets = [0, 112], sizes = [4, 16], strides = [1, 1]} : vector<4x128xf32> to vector<4x16xf32>
    %74 = vector.shape_cast %66 : vector<4x16xf32> to vector<1x4x16xf32>
    %75 = vector.shape_cast %67 : vector<4x16xf32> to vector<1x4x16xf32>
    %76 = vector.shape_cast %68 : vector<4x16xf32> to vector<1x4x16xf32>
    %77 = vector.shape_cast %69 : vector<4x16xf32> to vector<1x4x16xf32>
    %78 = vector.shape_cast %70 : vector<4x16xf32> to vector<1x4x16xf32>
    %79 = vector.shape_cast %71 : vector<4x16xf32> to vector<1x4x16xf32>
    %80 = vector.shape_cast %72 : vector<4x16xf32> to vector<1x4x16xf32>
    %81 = vector.shape_cast %73 : vector<4x16xf32> to vector<1x4x16xf32>
    %82 = tpu.concatenate %74, %75, %76, %77, %78, %79, %80, %81 in 0 : vector<1x4x16xf32>, vector<1x4x16xf32>, vector<1x4x16xf32>, vector<1x4x16xf32>, vector<1x4x16xf32>, vector<1x4x16xf32>, vector<1x4x16xf32>, vector<1x4x16xf32> -> vector<8x4x16xf32>
    %83 = vector.extract_strided_slice %59 {offsets = [0, 0], sizes = [4, 16], strides = [1, 1]} : vector<4x128xf32> to vector<4x16xf32>
    %84 = vector.extract_strided_slice %59 {offsets = [0, 16], sizes = [4, 16], strides = [1, 1]} : vector<4x128xf32> to vector<4x16xf32>
    %85 = vector.extract_strided_slice %59 {offsets = [0, 32], sizes = [4, 16], strides = [1, 1]} : vector<4x128xf32> to vector<4x16xf32>
    %86 = vector.extract_strided_slice %59 {offsets = [0, 48], sizes = [4, 16], strides = [1, 1]} : vector<4x128xf32> to vector<4x16xf32>
    %87 = vector.extract_strided_slice %59 {offsets = [0, 64], sizes = [4, 16], strides = [1, 1]} : vector<4x128xf32> to vector<4x16xf32>
    %88 = vector.extract_strided_slice %59 {offsets = [0, 80], sizes = [4, 16], strides = [1, 1]} : vector<4x128xf32> to vector<4x16xf32>
    %89 = vector.extract_strided_slice %59 {offsets = [0, 96], sizes = [4, 16], strides = [1, 1]} : vector<4x128xf32> to vector<4x16xf32>
    %90 = vector.extract_strided_slice %59 {offsets = [0, 112], sizes = [4, 16], strides = [1, 1]} : vector<4x128xf32> to vector<4x16xf32>
    %91 = vector.shape_cast %83 : vector<4x16xf32> to vector<1x4x16xf32>
    %92 = vector.shape_cast %84 : vector<4x16xf32> to vector<1x4x16xf32>
    %93 = vector.shape_cast %85 : vector<4x16xf32> to vector<1x4x16xf32>
    %94 = vector.shape_cast %86 : vector<4x16xf32> to vector<1x4x16xf32>
    %95 = vector.shape_cast %87 : vector<4x16xf32> to vector<1x4x16xf32>
    %96 = vector.shape_cast %88 : vector<4x16xf32> to vector<1x4x16xf32>
    %97 = vector.shape_cast %89 : vector<4x16xf32> to vector<1x4x16xf32>
    %98 = vector.shape_cast %90 : vector<4x16xf32> to vector<1x4x16xf32>
    %99 = tpu.concatenate %91, %92, %93, %94, %95, %96, %97, %98 in 0 : vector<1x4x16xf32>, vector<1x4x16xf32>, vector<1x4x16xf32>, vector<1x4x16xf32>, vector<1x4x16xf32>, vector<1x4x16xf32>, vector<1x4x16xf32>, vector<1x4x16xf32> -> vector<8x4x16xf32>
    %100 = vector.extract_strided_slice %64 {offsets = [0, 0], sizes = [4, 16], strides = [1, 1]} : vector<4x128xf32> to vector<4x16xf32>
    %101 = vector.extract_strided_slice %64 {offsets = [0, 16], sizes = [4, 16], strides = [1, 1]} : vector<4x128xf32> to vector<4x16xf32>
    %102 = vector.extract_strided_slice %64 {offsets = [0, 32], sizes = [4, 16], strides = [1, 1]} : vector<4x128xf32> to vector<4x16xf32>
    %103 = vector.extract_strided_slice %64 {offsets = [0, 48], sizes = [4, 16], strides = [1, 1]} : vector<4x128xf32> to vector<4x16xf32>
    %104 = vector.extract_strided_slice %64 {offsets = [0, 64], sizes = [4, 16], strides = [1, 1]} : vector<4x128xf32> to vector<4x16xf32>
    %105 = vector.extract_strided_slice %64 {offsets = [0, 80], sizes = [4, 16], strides = [1, 1]} : vector<4x128xf32> to vector<4x16xf32>
    %106 = vector.extract_strided_slice %64 {offsets = [0, 96], sizes = [4, 16], strides = [1, 1]} : vector<4x128xf32> to vector<4x16xf32>
    %107 = vector.extract_strided_slice %64 {offsets = [0, 112], sizes = [4, 16], strides = [1, 1]} : vector<4x128xf32> to vector<4x16xf32>
    %108 = vector.shape_cast %100 : vector<4x16xf32> to vector<1x4x16xf32>
    %109 = vector.shape_cast %101 : vector<4x16xf32> to vector<1x4x16xf32>
    %110 = vector.shape_cast %102 : vector<4x16xf32> to vector<1x4x16xf32>
    %111 = vector.shape_cast %103 : vector<4x16xf32> to vector<1x4x16xf32>
    %112 = vector.shape_cast %104 : vector<4x16xf32> to vector<1x4x16xf32>
    %113 = vector.shape_cast %105 : vector<4x16xf32> to vector<1x4x16xf32>
    %114 = vector.shape_cast %106 : vector<4x16xf32> to vector<1x4x16xf32>
    %115 = vector.shape_cast %107 : vector<4x16xf32> to vector<1x4x16xf32>
    %116 = tpu.concatenate %108, %109, %110, %111, %112, %113, %114, %115 in 0 : vector<1x4x16xf32>, vector<1x4x16xf32>, vector<1x4x16xf32>, vector<1x4x16xf32>, vector<1x4x16xf32>, vector<1x4x16xf32>, vector<1x4x16xf32>, vector<1x4x16xf32> -> vector<8x4x16xf32>
    %117 = arith.truncf %82 : vector<8x4x16xf32> to vector<8x4x16xbf16>
    %118 = arith.truncf %99 : vector<8x4x16xf32> to vector<8x4x16xbf16>
    "tpu.trace_start"() <{level = 10 : i32, message = "hqd,hkd->hqk"}> : () -> ()
    %cst_30 = arith.constant dense<0.000000e+00> : vector<8x4x4xf32>
    %119 = tpu.matmul %117, %118, %cst_30 {dimension_numbers = #tpu.dot_dimension_numbers<[2], [2], [1], [1], [0, 0, 0, 1, 1, 1], [0], [0]>} : vector<8x4x16xbf16>, vector<8x4x16xbf16>, vector<8x4x4xf32> -> vector<8x4x4xf32>
    "tpu.trace_stop"() : () -> ()
    %cst_31 = arith.constant 2.500000e-01 : f32
    %120 = vector.broadcast %cst_31 : f32 to vector<8x4x4xf32>
    %121 = arith.mulf %119, %120 : vector<8x4x4xf32>
    %122 = vector.shape_cast %6 : vector<4x4xf32> to vector<1x4x4xf32>
    %123 = vector.broadcast %122 : vector<1x4x4xf32> to vector<8x4x4xf32>
    %124 = arith.mulf %121, %123 : vector<8x4x4xf32>
    %125 = vector.shape_cast %8 : vector<4x4xf32> to vector<1x4x4xf32>
    %126 = vector.broadcast %125 : vector<1x4x4xf32> to vector<8x4x4xf32>
    %127 = arith.addf %124, %126 : vector<8x4x4xf32>
    %cst_32 = arith.constant dense<0xFF800000> : vector<8x4xf32>
    %128 = vector.multi_reduction <maximumf>, %127, %cst_32 [2] : vector<8x4x4xf32> to vector<8x4xf32>
    %129 = vector.shape_cast %128 : vector<8x4xf32> to vector<8x4x1xf32>
    %130 = vector.broadcast %129 : vector<8x4x1xf32> to vector<8x4x4xf32>
    %131 = arith.subf %127, %130 : vector<8x4x4xf32>
    %132 = math.exp %131 : vector<8x4x4xf32>
    %cst_33 = arith.constant dense<0.000000e+00> : vector<8x4xf32>
    %133 = vector.multi_reduction <add>, %132, %cst_33 [2] : vector<8x4x4xf32> to vector<8x4xf32>
    %134 = vector.shape_cast %133 : vector<8x4xf32> to vector<8x4x1xf32>
    %135 = tpu.reciprocal %134 {approx = true} : vector<8x4x1xf32> -> vector<8x4x1xf32>
    %136 = vector.broadcast %135 : vector<8x4x1xf32> to vector<8x4x4xf32>
    %137 = arith.mulf %132, %136 : vector<8x4x4xf32>
    %138 = arith.truncf %137 : vector<8x4x4xf32> to vector<8x4x4xbf16>
    %139 = arith.truncf %116 : vector<8x4x16xf32> to vector<8x4x16xbf16>
    "tpu.trace_start"() <{level = 10 : i32, message = "hqk,hkd->hqd"}> : () -> ()
    %cst_34 = arith.constant dense<0.000000e+00> : vector<8x4x16xf32>
    %140 = tpu.matmul %138, %139, %cst_34 {dimension_numbers = #tpu.dot_dimension_numbers<[2], [1], [1], [2], [0, 0, 0, 1, 1, 2], [0], [0]>} : vector<8x4x4xbf16>, vector<8x4x16xbf16>, vector<8x4x16xf32> -> vector<8x4x16xf32>
    "tpu.trace_stop"() : () -> ()
    %141 = vector.extract_strided_slice %140 {offsets = [0, 0, 0], sizes = [1, 4, 16], strides = [1, 1, 1]} : vector<8x4x16xf32> to vector<1x4x16xf32>
    %142 = vector.shape_cast %141 : vector<1x4x16xf32> to vector<4x16xf32>
    %143 = vector.extract_strided_slice %140 {offsets = [1, 0, 0], sizes = [1, 4, 16], strides = [1, 1, 1]} : vector<8x4x16xf32> to vector<1x4x16xf32>
    %144 = vector.shape_cast %143 : vector<1x4x16xf32> to vector<4x16xf32>
    %145 = vector.extract_strided_slice %140 {offsets = [2, 0, 0], sizes = [1, 4, 16], strides = [1, 1, 1]} : vector<8x4x16xf32> to vector<1x4x16xf32>
    %146 = vector.shape_cast %145 : vector<1x4x16xf32> to vector<4x16xf32>
    %147 = vector.extract_strided_slice %140 {offsets = [3, 0, 0], sizes = [1, 4, 16], strides = [1, 1, 1]} : vector<8x4x16xf32> to vector<1x4x16xf32>
    %148 = vector.shape_cast %147 : vector<1x4x16xf32> to vector<4x16xf32>
    %149 = vector.extract_strided_slice %140 {offsets = [4, 0, 0], sizes = [1, 4, 16], strides = [1, 1, 1]} : vector<8x4x16xf32> to vector<1x4x16xf32>
    %150 = vector.shape_cast %149 : vector<1x4x16xf32> to vector<4x16xf32>
    %151 = vector.extract_strided_slice %140 {offsets = [5, 0, 0], sizes = [1, 4, 16], strides = [1, 1, 1]} : vector<8x4x16xf32> to vector<1x4x16xf32>
    %152 = vector.shape_cast %151 : vector<1x4x16xf32> to vector<4x16xf32>
    %153 = vector.extract_strided_slice %140 {offsets = [6, 0, 0], sizes = [1, 4, 16], strides = [1, 1, 1]} : vector<8x4x16xf32> to vector<1x4x16xf32>
    %154 = vector.shape_cast %153 : vector<1x4x16xf32> to vector<4x16xf32>
    %155 = vector.extract_strided_slice %140 {offsets = [7, 0, 0], sizes = [1, 4, 16], strides = [1, 1, 1]} : vector<8x4x16xf32> to vector<1x4x16xf32>
    %156 = vector.shape_cast %155 : vector<1x4x16xf32> to vector<4x16xf32>
    %157 = tpu.concatenate %142, %144, %146, %148, %150, %152, %154, %156 in 1 : vector<4x16xf32>, vector<4x16xf32>, vector<4x16xf32>, vector<4x16xf32>, vector<4x16xf32>, vector<4x16xf32>, vector<4x16xf32>, vector<4x16xf32> -> vector<4x128xf32>
    %158 = arith.truncf %157 : vector<4x128xf32> to vector<4x128xbf16>
    %cst_35 = arith.constant dense<0.000000e+00> : vector<4x128xf32>
    %159 = tpu.matmul %158, %65, %cst_35 {dimension_numbers = #tpu.dot_dimension_numbers<[1], [0], [0], [1], [0, 0, 1, 1], [], []>} : vector<4x128xbf16>, vector<128x128xbf16>, vector<4x128xf32> -> vector<4x128xf32>
    %160 = vector.broadcast %26 : vector<1x128xf32> to vector<4x128xf32>
    %161 = arith.addf %159, %160 : vector<4x128xf32>
    %162 = vector.shape_cast %161 : vector<4x128xf32> to vector<1x4x128xf32>
    %163 = vector.shape_cast %162 : vector<1x4x128xf32> to vector<1x4x128xf32>
    %164 = vector.broadcast %163 : vector<1x4x128xf32> to vector<4x4x128xf32>
    %165 = vector.shape_cast %164 : vector<4x4x128xf32> to vector<16x128xf32>
    %166 = arith.addf %3, %165 : vector<16x128xf32>
    %cst_36 = arith.constant dense<0.000000e+00> : vector<16xf32>
    %167 = vector.multi_reduction <add>, %166, %cst_36 [1] : vector<16x128xf32> to vector<16xf32>
    %168 = vector.shape_cast %167 : vector<16xf32> to vector<16x1xf32>
    %cst_37 = arith.constant 1.280000e+02 : f32
    %169 = vector.broadcast %cst_37 : f32 to vector<16x1xf32>
    %170 = arith.divf %168, %169 : vector<16x1xf32>
    %171 = vector.broadcast %170 : vector<16x1xf32> to vector<16x128xf32>
    %172 = arith.subf %166, %171 : vector<16x128xf32>
    %173 = arith.mulf %172, %172 : vector<16x128xf32>
    %cst_38 = arith.constant dense<0.000000e+00> : vector<16xf32>
    %174 = vector.multi_reduction <add>, %173, %cst_38 [1] : vector<16x128xf32> to vector<16xf32>
    %175 = vector.shape_cast %174 : vector<16xf32> to vector<16x1xf32>
    %cst_39 = arith.constant 1.270000e+02 : f32
    %176 = vector.broadcast %cst_39 : f32 to vector<16x1xf32>
    %177 = arith.divf %175, %176 : vector<16x1xf32>
    %178 = math.sqrt %177 : vector<16x1xf32>
    %cst_40 = arith.constant 9.99999997E-7 : f32
    %179 = vector.broadcast %cst_40 : f32 to vector<16x1xf32>
    %180 = arith.addf %178, %179 : vector<16x1xf32>
    %181 = tpu.reciprocal %180 {approx = true} : vector<16x1xf32> -> vector<16x1xf32>
    %182 = vector.broadcast %181 : vector<16x1xf32> to vector<16x128xf32>
    %183 = arith.mulf %172, %182 : vector<16x128xf32>
    %184 = vector.broadcast %21 : vector<1x128xf32> to vector<16x128xf32>
    %185 = arith.mulf %184, %183 : vector<16x128xf32>
    %186 = vector.broadcast %22 : vector<1x128xf32> to vector<16x128xf32>
    %187 = arith.addf %185, %186 : vector<16x128xf32>
    %188 = arith.truncf %187 : vector<16x128xf32> to vector<16x128xbf16>
    %cst_41 = arith.constant dense<0.000000e+00> : vector<16x256xf32>
    %189 = tpu.matmul %188, %12, %cst_41 {dimension_numbers = #tpu.dot_dimension_numbers<[1], [0], [0], [1], [0, 0, 1, 1], [], []>} : vector<16x128xbf16>, vector<128x256xbf16>, vector<16x256xf32> -> vector<16x256xf32>
    %190 = vector.broadcast %16 : vector<1x256xf32> to vector<16x256xf32>
    %191 = arith.addf %189, %190 : vector<16x256xf32>
    %cst_42 = arith.constant 0.000000e+00 : f32
    %192 = vector.broadcast %cst_42 : f32 to vector<16x256xf32>
    %193 = arith.maximumf %191, %192 : vector<16x256xf32>
    %194 = arith.truncf %193 : vector<16x256xf32> to vector<16x256xbf16>
    %cst_43 = arith.constant dense<0.000000e+00> : vector<16x128xf32>
    %195 = tpu.matmul %194, %14, %cst_43 {dimension_numbers = #tpu.dot_dimension_numbers<[1], [0], [0], [1], [0, 0, 1, 1], [], []>} : vector<16x256xbf16>, vector<256x128xbf16>, vector<16x128xf32> -> vector<16x128xf32>
    %196 = arith.addf %187, %195 : vector<16x128xf32>
    %197 = vector.broadcast %27 : vector<1x128xf32> to vector<16x128xf32>
    %198 = arith.addf %196, %197 : vector<16x128xf32>
    %c0_44 = arith.constant 0 : index
    %c0_45 = arith.constant 0 : index
    %199 = vector.load %arg9[%c0_44, %c0_45] : memref<16x128xf32, #tpu.memory_space<vmem>>, vector<16x128xf32>
    tpu.vector_store %arg9[%c0_44, %c0_45], %198 {strides = array<i32>} : memref<16x128xf32, #tpu.memory_space<vmem>>, vector<16x128xf32>,
    %c0_46 = arith.constant 0 : index
    %c0_47 = arith.constant 0 : index
    %200 = vector.load %arg9[%c0_46, %c0_47] : memref<16x128xf32, #tpu.memory_space<vmem>>, vector<4x128xf32>
    %c0_48 = arith.constant 0 : index
    %c0_49 = arith.constant 0 : index
    %201 = vector.load %arg10[%c0_48, %c0_49] : memref<4x128xf32, #tpu.memory_space<vmem>>, vector<4x128xf32>
    tpu.vector_store %arg10[%c0_48, %c0_49], %200 {strides = array<i32>} : memref<4x128xf32, #tpu.memory_space<vmem>>, vector<4x128xf32>,
    return
  }
  func.func @transform_0(%arg0: i32) -> (i32, i32) {
    %c0_i32 = arith.constant 0 : i32
    %c0_i32_0 = arith.constant 0 : i32
    %c0_i32_1 = arith.constant 0 : i32
    return %c0_i32, %c0_i32_0 : i32, i32
  }
  func.func @transform_1(%arg0: i32) -> (i32, i32) {
    %c0_i32 = arith.constant 0 : i32
    %c0_i32_0 = arith.constant 0 : i32
    %c0_i32_1 = arith.constant 0 : i32
    return %c0_i32, %c0_i32_0 : i32, i32
  }
  func.func @transform_2(%arg0: i32) -> (i32, i32, i32) {
    %c0_i32 = arith.constant 0 : i32
    %c0_i32_0 = arith.constant 0 : i32
    %c0_i32_1 = arith.constant 0 : i32
    %c0_i32_2 = arith.constant 0 : i32
    return %c0_i32, %c0_i32_0, %c0_i32_1 : i32, i32, i32
  }
  func.func @transform_3(%arg0: i32) -> (i32, i32, i32) {
    %c0_i32 = arith.constant 0 : i32
    %c0_i32_0 = arith.constant 0 : i32
    %c0_i32_1 = arith.constant 0 : i32
    return %arg0, %c0_i32, %c0_i32_0 : i32, i32, i32
  }
  func.func @transform_4(%arg0: i32) -> (i32, i32, i32) {
    %c0_i32 = arith.constant 0 : i32
    %c0_i32_0 = arith.constant 0 : i32
    %c0_i32_1 = arith.constant 0 : i32
    return %arg0, %c0_i32, %c0_i32_0 : i32, i32, i32
  }
  func.func @transform_5(%arg0: i32) -> (i32, i32, i32) {
    %c0_i32 = arith.constant 0 : i32
    %c0_i32_0 = arith.constant 0 : i32
    %c0_i32_1 = arith.constant 0 : i32
    return %arg0, %c0_i32, %c0_i32_0 : i32, i32, i32
  }
  func.func @transform_6(%arg0: i32) -> (i32, i32, i32) {
    %c0_i32 = arith.constant 0 : i32
    %c0_i32_0 = arith.constant 0 : i32
    %c0_i32_1 = arith.constant 0 : i32
    return %arg0, %c0_i32, %c0_i32_0 : i32, i32, i32
  }
  func.func @transform_7(%arg0: i32) -> (i32, i32, i32) {
    %c0_i32 = arith.constant 0 : i32
    %c0_i32_0 = arith.constant 0 : i32
    %c0_i32_1 = arith.constant 0 : i32
    return %arg0, %c0_i32, %c0_i32_0 : i32, i32, i32
  }
  func.func @transform_8(%arg0: i32) -> (i32, i32) {
    %c0_i32 = arith.constant 0 : i32
    %c0_i32_0 = arith.constant 0 : i32
    %c0_i32_1 = arith.constant 0 : i32
    return %c0_i32, %c0_i32_0 : i32, i32
  }
  func.func @transform_9(%arg0: i32) -> (i32, i32) {
    %c0_i32 = arith.constant 0 : i32
    %c0_i32_0 = arith.constant 0 : i32
    %c0_i32_1 = arith.constant 0 : i32
    return %c0_i32, %c0_i32_0 : i32, i32
  }
}

module attributes {stable_mosaic.version = 11 : i64} {
  func.func @_decoder_stack_kernel(%arg0: i32, %arg1: memref<4x128xf32, #tpu.memory_space<vmem>>, %arg2: memref<4x128xf32, #tpu.memory_space<vmem>>, %arg3: memref<4x128xf32, #tpu.memory_space<vmem>>, %arg4: memref<2x4x4xf32, #tpu.memory_space<vmem>>, %arg5: memref<1x128x1024xbf16, #tpu.memory_space<vmem>>, %arg6: memref<1x128x256xbf16, #tpu.memory_space<vmem>>, %arg7: memref<1x256x128xbf16, #tpu.memory_space<vmem>>, %arg8: memref<1x15x128xf32, #tpu.memory_space<vmem>>, %arg9: memref<1x1x256xf32, #tpu.memory_space<vmem>>, %arg10: memref<4x128xf32, #tpu.memory_space<vmem>>) attributes {dimension_semantics = [#tpu.dimension_semantics<arbitrary>], iteration_bounds = array<i64: 2>, scalar_prefetch = 0 : i64, scratch_operands = 0 : i64, tpu.core_type = #tpu.core_type<tc>, window_params = [{pipeline_mode = #tpu.pipeline_mode<synchronous>, transform_indices = @transform_0, window_bounds = array<i64: 4, 128>}, {pipeline_mode = #tpu.pipeline_mode<synchronous>, transform_indices = @transform_1, window_bounds = array<i64: 4, 128>}, {pipeline_mode = #tpu.pipeline_mode<synchronous>, transform_indices = @transform_2, window_bounds = array<i64: 4, 128>}, {pipeline_mode = #tpu.pipeline_mode<synchronous>, transform_indices = @transform_3, window_bounds = array<i64: 2, 4, 4>}, {transform_indices = @transform_4, window_bounds = array<i64: 1, 128, 1024>}, {transform_indices = @transform_5, window_bounds = array<i64: 1, 128, 256>}, {transform_indices = @transform_6, window_bounds = array<i64: 1, 256, 128>}, {transform_indices = @transform_7, window_bounds = array<i64: 1, 15, 128>}, {transform_indices = @transform_8, window_bounds = array<i64: 1, 1, 256>}, {pipeline_mode = #tpu.pipeline_mode<synchronous>, transform_indices = @transform_9, window_bounds = array<i64: 4, 128>}]} {
    %c0_i32 = arith.constant 0 : i32
    %0 = arith.cmpi eq, %arg0, %c0_i32 : i32
    %1 = arith.extui %0 : i1 to i32
    %c0_i32_0 = arith.constant 0 : i32
    %2 = arith.cmpi ne, %1, %c0_i32_0 : i32
    scf.if %2 {
      %cst_64 = arith.constant 0.000000e+00 : f32
      %335 = vector.broadcast %cst_64 : f32 to vector<4x128xf32>
      %c0_65 = arith.constant 0 : index
      %c0_66 = arith.constant 0 : index
      %336 = vector.load %arg10[%c0_65, %c0_66] : memref<4x128xf32, #tpu.memory_space<vmem>>, vector<4x128xf32>
      tpu.vector_store %arg10[%c0_65, %c0_66], %335 {strides = array<i32>} : memref<4x128xf32, #tpu.memory_space<vmem>>, vector<4x128xf32>,
    } else {
    }
    %c0 = arith.constant 0 : index
    %c0_1 = arith.constant 0 : index
    %3 = vector.load %arg10[%c0, %c0_1] : memref<4x128xf32, #tpu.memory_space<vmem>>, vector<4x128xf32>
    %c0_2 = arith.constant 0 : index
    %c0_3 = arith.constant 0 : index
    %4 = vector.load %arg1[%c0_2, %c0_3] : memref<4x128xf32, #tpu.memory_space<vmem>>, vector<4x128xf32>
    %c0_4 = arith.constant 0 : index
    %c0_5 = arith.constant 0 : index
    %5 = vector.load %arg2[%c0_4, %c0_5] : memref<4x128xf32, #tpu.memory_space<vmem>>, vector<4x128xf32>
    %c0_6 = arith.constant 0 : index
    %c0_7 = arith.constant 0 : index
    %6 = vector.load %arg3[%c0_6, %c0_7] : memref<4x128xf32, #tpu.memory_space<vmem>>, vector<4x128xf32>
    %c0_8 = arith.constant 0 : index
    %c0_9 = arith.constant 0 : index
    %c0_10 = arith.constant 0 : index
    %7 = vector.load %arg4[%c0_8, %c0_9, %c0_10] : memref<2x4x4xf32, #tpu.memory_space<vmem>>, vector<1x4x4xf32>
    %8 = vector.shape_cast %7 : vector<1x4x4xf32> to vector<4x4xf32>
    %c1 = arith.constant 1 : index
    %c0_11 = arith.constant 0 : index
    %c0_12 = arith.constant 0 : index
    %9 = vector.load %arg4[%c1, %c0_11, %c0_12] : memref<2x4x4xf32, #tpu.memory_space<vmem>>, vector<1x4x4xf32>
    %10 = vector.shape_cast %9 : vector<1x4x4xf32> to vector<4x4xf32>
    %c0_13 = arith.constant 0 : index
    %c0_14 = arith.constant 0 : index
    %c0_15 = arith.constant 0 : index
    %11 = vector.load %arg5[%c0_13, %c0_14, %c0_15] : memref<1x128x1024xbf16, #tpu.memory_space<vmem>>, vector<1x128x1024xbf16>
    %12 = vector.shape_cast %11 : vector<1x128x1024xbf16> to vector<128x1024xbf16>
    %13 = vector.extract_strided_slice %12 {offsets = [0, 0], sizes = [128, 512], strides = [1, 1]} : vector<128x1024xbf16> to vector<128x512xbf16>
    %14 = vector.extract_strided_slice %12 {offsets = [0, 512], sizes = [128, 512], strides = [1, 1]} : vector<128x1024xbf16> to vector<128x512xbf16>
    %c0_16 = arith.constant 0 : index
    %c0_17 = arith.constant 0 : index
    %c0_18 = arith.constant 0 : index
    %15 = vector.load %arg6[%c0_16, %c0_17, %c0_18] : memref<1x128x256xbf16, #tpu.memory_space<vmem>>, vector<1x128x256xbf16>
    %16 = vector.shape_cast %15 : vector<1x128x256xbf16> to vector<128x256xbf16>
    %c0_19 = arith.constant 0 : index
    %c0_20 = arith.constant 0 : index
    %c0_21 = arith.constant 0 : index
    %17 = vector.load %arg7[%c0_19, %c0_20, %c0_21] : memref<1x256x128xbf16, #tpu.memory_space<vmem>>, vector<1x256x128xbf16>
    %18 = vector.shape_cast %17 : vector<1x256x128xbf16> to vector<256x128xbf16>
    %c0_22 = arith.constant 0 : index
    %c0_23 = arith.constant 0 : index
    %c0_24 = arith.constant 0 : index
    %19 = vector.load %arg9[%c0_22, %c0_23, %c0_24] : memref<1x1x256xf32, #tpu.memory_space<vmem>>, vector<1x1x256xf32>
    %20 = vector.shape_cast %19 : vector<1x1x256xf32> to vector<1x256xf32>
    %c0_25 = arith.constant 0 : index
    %c0_26 = arith.constant 0 : index
    %c0_27 = arith.constant 0 : index
    %21 = vector.load %arg8[%c0_25, %c0_26, %c0_27] : memref<1x15x128xf32, #tpu.memory_space<vmem>>, vector<1x15x128xf32>
    %22 = vector.shape_cast %21 : vector<1x15x128xf32> to vector<15x128xf32>
    %23 = vector.extract_strided_slice %22 {offsets = [0, 0], sizes = [1, 128], strides = [1, 1]} : vector<15x128xf32> to vector<1x128xf32>
    %24 = vector.extract_strided_slice %22 {offsets = [1, 0], sizes = [1, 128], strides = [1, 1]} : vector<15x128xf32> to vector<1x128xf32>
    %25 = vector.extract_strided_slice %22 {offsets = [2, 0], sizes = [1, 128], strides = [1, 1]} : vector<15x128xf32> to vector<1x128xf32>
    %26 = vector.extract_strided_slice %22 {offsets = [3, 0], sizes = [1, 128], strides = [1, 1]} : vector<15x128xf32> to vector<1x128xf32>
    %27 = vector.extract_strided_slice %22 {offsets = [4, 0], sizes = [1, 128], strides = [1, 1]} : vector<15x128xf32> to vector<1x128xf32>
    %28 = vector.extract_strided_slice %22 {offsets = [5, 0], sizes = [1, 128], strides = [1, 1]} : vector<15x128xf32> to vector<1x128xf32>
    %29 = vector.extract_strided_slice %22 {offsets = [6, 0], sizes = [1, 128], strides = [1, 1]} : vector<15x128xf32> to vector<1x128xf32>
    %30 = vector.extract_strided_slice %22 {offsets = [7, 0], sizes = [1, 128], strides = [1, 1]} : vector<15x128xf32> to vector<1x128xf32>
    %31 = vector.extract_strided_slice %22 {offsets = [8, 0], sizes = [1, 128], strides = [1, 1]} : vector<15x128xf32> to vector<1x128xf32>
    %32 = vector.extract_strided_slice %22 {offsets = [9, 0], sizes = [1, 128], strides = [1, 1]} : vector<15x128xf32> to vector<1x128xf32>
    %33 = vector.extract_strided_slice %22 {offsets = [10, 0], sizes = [1, 128], strides = [1, 1]} : vector<15x128xf32> to vector<1x128xf32>
    %34 = vector.extract_strided_slice %22 {offsets = [11, 0], sizes = [1, 128], strides = [1, 1]} : vector<15x128xf32> to vector<1x128xf32>
    %35 = vector.extract_strided_slice %22 {offsets = [12, 0], sizes = [1, 128], strides = [1, 1]} : vector<15x128xf32> to vector<1x128xf32>
    %36 = vector.extract_strided_slice %22 {offsets = [13, 0], sizes = [1, 128], strides = [1, 1]} : vector<15x128xf32> to vector<1x128xf32>
    %37 = vector.extract_strided_slice %22 {offsets = [14, 0], sizes = [1, 128], strides = [1, 1]} : vector<15x128xf32> to vector<1x128xf32>
    %cst = arith.constant dense<0.000000e+00> : vector<4xf32>
    %38 = vector.multi_reduction <add>, %3, %cst [1] : vector<4x128xf32> to vector<4xf32>
    %39 = vector.shape_cast %38 : vector<4xf32> to vector<4x1xf32>
    %cst_28 = arith.constant 1.280000e+02 : f32
    %40 = vector.broadcast %cst_28 : f32 to vector<4x1xf32>
    %41 = arith.divf %39, %40 : vector<4x1xf32>
    %42 = vector.broadcast %41 : vector<4x1xf32> to vector<4x128xf32>
    %43 = arith.subf %3, %42 : vector<4x128xf32>
    %44 = arith.mulf %43, %43 : vector<4x128xf32>
    %cst_29 = arith.constant dense<0.000000e+00> : vector<4xf32>
    %45 = vector.multi_reduction <add>, %44, %cst_29 [1] : vector<4x128xf32> to vector<4xf32>
    %46 = vector.shape_cast %45 : vector<4xf32> to vector<4x1xf32>
    %cst_30 = arith.constant 1.270000e+02 : f32
    %47 = vector.broadcast %cst_30 : f32 to vector<4x1xf32>
    %48 = arith.divf %46, %47 : vector<4x1xf32>
    %49 = math.sqrt %48 : vector<4x1xf32>
    %cst_31 = arith.constant 9.99999997E-7 : f32
    %50 = vector.broadcast %cst_31 : f32 to vector<4x1xf32>
    %51 = arith.addf %49, %50 : vector<4x1xf32>
    %52 = tpu.reciprocal %51 {approx = true} : vector<4x1xf32> -> vector<4x1xf32>
    %53 = vector.broadcast %52 : vector<4x1xf32> to vector<4x128xf32>
    %54 = arith.mulf %43, %53 : vector<4x128xf32>
    %55 = vector.broadcast %23 : vector<1x128xf32> to vector<4x128xf32>
    %56 = arith.mulf %55, %54 : vector<4x128xf32>
    %57 = vector.broadcast %24 : vector<1x128xf32> to vector<4x128xf32>
    %58 = arith.addf %56, %57 : vector<4x128xf32>
    %59 = arith.addf %58, %5 : vector<4x128xf32>
    %60 = vector.extract_strided_slice %13 {offsets = [0, 0], sizes = [128, 256], strides = [1, 1]} : vector<128x512xbf16> to vector<128x256xbf16>
    %61 = arith.truncf %59 : vector<4x128xf32> to vector<4x128xbf16>
    %cst_32 = arith.constant dense<0.000000e+00> : vector<4x256xf32>
    %62 = tpu.matmul %61, %60, %cst_32 {dimension_numbers = #tpu.dot_dimension_numbers<[1], [0], [0], [1], [0, 0, 1, 1], [], []>} : vector<4x128xbf16>, vector<128x256xbf16>, vector<4x256xf32> -> vector<4x256xf32>
    %63 = vector.extract_strided_slice %62 {offsets = [0, 0], sizes = [4, 128], strides = [1, 1]} : vector<4x256xf32> to vector<4x128xf32>
    %64 = vector.broadcast %29 : vector<1x128xf32> to vector<4x128xf32>
    %65 = arith.addf %63, %64 : vector<4x128xf32>
    %66 = vector.extract_strided_slice %62 {offsets = [0, 128], sizes = [4, 128], strides = [1, 1]} : vector<4x256xf32> to vector<4x128xf32>
    %67 = vector.broadcast %30 : vector<1x128xf32> to vector<4x128xf32>
    %68 = arith.addf %66, %67 : vector<4x128xf32>
    %69 = vector.extract_strided_slice %13 {offsets = [0, 256], sizes = [128, 128], strides = [1, 1]} : vector<128x512xbf16> to vector<128x128xbf16>
    %70 = arith.truncf %3 : vector<4x128xf32> to vector<4x128xbf16>
    %cst_33 = arith.constant dense<0.000000e+00> : vector<4x128xf32>
    %71 = tpu.matmul %70, %69, %cst_33 {dimension_numbers = #tpu.dot_dimension_numbers<[1], [0], [0], [1], [0, 0, 1, 1], [], []>} : vector<4x128xbf16>, vector<128x128xbf16>, vector<4x128xf32> -> vector<4x128xf32>
    %72 = vector.broadcast %31 : vector<1x128xf32> to vector<4x128xf32>
    %73 = arith.addf %71, %72 : vector<4x128xf32>
    %74 = vector.extract_strided_slice %13 {offsets = [0, 384], sizes = [128, 128], strides = [1, 1]} : vector<128x512xbf16> to vector<128x128xbf16>
    %75 = vector.extract_strided_slice %65 {offsets = [0, 0], sizes = [4, 16], strides = [1, 1]} : vector<4x128xf32> to vector<4x16xf32>
    %76 = vector.extract_strided_slice %65 {offsets = [0, 16], sizes = [4, 16], strides = [1, 1]} : vector<4x128xf32> to vector<4x16xf32>
    %77 = vector.extract_strided_slice %65 {offsets = [0, 32], sizes = [4, 16], strides = [1, 1]} : vector<4x128xf32> to vector<4x16xf32>
    %78 = vector.extract_strided_slice %65 {offsets = [0, 48], sizes = [4, 16], strides = [1, 1]} : vector<4x128xf32> to vector<4x16xf32>
    %79 = vector.extract_strided_slice %65 {offsets = [0, 64], sizes = [4, 16], strides = [1, 1]} : vector<4x128xf32> to vector<4x16xf32>
    %80 = vector.extract_strided_slice %65 {offsets = [0, 80], sizes = [4, 16], strides = [1, 1]} : vector<4x128xf32> to vector<4x16xf32>
    %81 = vector.extract_strided_slice %65 {offsets = [0, 96], sizes = [4, 16], strides = [1, 1]} : vector<4x128xf32> to vector<4x16xf32>
    %82 = vector.extract_strided_slice %65 {offsets = [0, 112], sizes = [4, 16], strides = [1, 1]} : vector<4x128xf32> to vector<4x16xf32>
    %83 = vector.shape_cast %75 : vector<4x16xf32> to vector<1x4x16xf32>
    %84 = vector.shape_cast %76 : vector<4x16xf32> to vector<1x4x16xf32>
    %85 = vector.shape_cast %77 : vector<4x16xf32> to vector<1x4x16xf32>
    %86 = vector.shape_cast %78 : vector<4x16xf32> to vector<1x4x16xf32>
    %87 = vector.shape_cast %79 : vector<4x16xf32> to vector<1x4x16xf32>
    %88 = vector.shape_cast %80 : vector<4x16xf32> to vector<1x4x16xf32>
    %89 = vector.shape_cast %81 : vector<4x16xf32> to vector<1x4x16xf32>
    %90 = vector.shape_cast %82 : vector<4x16xf32> to vector<1x4x16xf32>
    %91 = tpu.concatenate %83, %84, %85, %86, %87, %88, %89, %90 in 0 : vector<1x4x16xf32>, vector<1x4x16xf32>, vector<1x4x16xf32>, vector<1x4x16xf32>, vector<1x4x16xf32>, vector<1x4x16xf32>, vector<1x4x16xf32>, vector<1x4x16xf32> -> vector<8x4x16xf32>
    %92 = vector.extract_strided_slice %68 {offsets = [0, 0], sizes = [4, 16], strides = [1, 1]} : vector<4x128xf32> to vector<4x16xf32>
    %93 = vector.extract_strided_slice %68 {offsets = [0, 16], sizes = [4, 16], strides = [1, 1]} : vector<4x128xf32> to vector<4x16xf32>
    %94 = vector.extract_strided_slice %68 {offsets = [0, 32], sizes = [4, 16], strides = [1, 1]} : vector<4x128xf32> to vector<4x16xf32>
    %95 = vector.extract_strided_slice %68 {offsets = [0, 48], sizes = [4, 16], strides = [1, 1]} : vector<4x128xf32> to vector<4x16xf32>
    %96 = vector.extract_strided_slice %68 {offsets = [0, 64], sizes = [4, 16], strides = [1, 1]} : vector<4x128xf32> to vector<4x16xf32>
    %97 = vector.extract_strided_slice %68 {offsets = [0, 80], sizes = [4, 16], strides = [1, 1]} : vector<4x128xf32> to vector<4x16xf32>
    %98 = vector.extract_strided_slice %68 {offsets = [0, 96], sizes = [4, 16], strides = [1, 1]} : vector<4x128xf32> to vector<4x16xf32>
    %99 = vector.extract_strided_slice %68 {offsets = [0, 112], sizes = [4, 16], strides = [1, 1]} : vector<4x128xf32> to vector<4x16xf32>
    %100 = vector.shape_cast %92 : vector<4x16xf32> to vector<1x4x16xf32>
    %101 = vector.shape_cast %93 : vector<4x16xf32> to vector<1x4x16xf32>
    %102 = vector.shape_cast %94 : vector<4x16xf32> to vector<1x4x16xf32>
    %103 = vector.shape_cast %95 : vector<4x16xf32> to vector<1x4x16xf32>
    %104 = vector.shape_cast %96 : vector<4x16xf32> to vector<1x4x16xf32>
    %105 = vector.shape_cast %97 : vector<4x16xf32> to vector<1x4x16xf32>
    %106 = vector.shape_cast %98 : vector<4x16xf32> to vector<1x4x16xf32>
    %107 = vector.shape_cast %99 : vector<4x16xf32> to vector<1x4x16xf32>
    %108 = tpu.concatenate %100, %101, %102, %103, %104, %105, %106, %107 in 0 : vector<1x4x16xf32>, vector<1x4x16xf32>, vector<1x4x16xf32>, vector<1x4x16xf32>, vector<1x4x16xf32>, vector<1x4x16xf32>, vector<1x4x16xf32>, vector<1x4x16xf32> -> vector<8x4x16xf32>
    %109 = vector.extract_strided_slice %73 {offsets = [0, 0], sizes = [4, 16], strides = [1, 1]} : vector<4x128xf32> to vector<4x16xf32>
    %110 = vector.extract_strided_slice %73 {offsets = [0, 16], sizes = [4, 16], strides = [1, 1]} : vector<4x128xf32> to vector<4x16xf32>
    %111 = vector.extract_strided_slice %73 {offsets = [0, 32], sizes = [4, 16], strides = [1, 1]} : vector<4x128xf32> to vector<4x16xf32>
    %112 = vector.extract_strided_slice %73 {offsets = [0, 48], sizes = [4, 16], strides = [1, 1]} : vector<4x128xf32> to vector<4x16xf32>
    %113 = vector.extract_strided_slice %73 {offsets = [0, 64], sizes = [4, 16], strides = [1, 1]} : vector<4x128xf32> to vector<4x16xf32>
    %114 = vector.extract_strided_slice %73 {offsets = [0, 80], sizes = [4, 16], strides = [1, 1]} : vector<4x128xf32> to vector<4x16xf32>
    %115 = vector.extract_strided_slice %73 {offsets = [0, 96], sizes = [4, 16], strides = [1, 1]} : vector<4x128xf32> to vector<4x16xf32>
    %116 = vector.extract_strided_slice %73 {offsets = [0, 112], sizes = [4, 16], strides = [1, 1]} : vector<4x128xf32> to vector<4x16xf32>
    %117 = vector.shape_cast %109 : vector<4x16xf32> to vector<1x4x16xf32>
    %118 = vector.shape_cast %110 : vector<4x16xf32> to vector<1x4x16xf32>
    %119 = vector.shape_cast %111 : vector<4x16xf32> to vector<1x4x16xf32>
    %120 = vector.shape_cast %112 : vector<4x16xf32> to vector<1x4x16xf32>
    %121 = vector.shape_cast %113 : vector<4x16xf32> to vector<1x4x16xf32>
    %122 = vector.shape_cast %114 : vector<4x16xf32> to vector<1x4x16xf32>
    %123 = vector.shape_cast %115 : vector<4x16xf32> to vector<1x4x16xf32>
    %124 = vector.shape_cast %116 : vector<4x16xf32> to vector<1x4x16xf32>
    %125 = tpu.concatenate %117, %118, %119, %120, %121, %122, %123, %124 in 0 : vector<1x4x16xf32>, vector<1x4x16xf32>, vector<1x4x16xf32>, vector<1x4x16xf32>, vector<1x4x16xf32>, vector<1x4x16xf32>, vector<1x4x16xf32>, vector<1x4x16xf32> -> vector<8x4x16xf32>
    %126 = arith.truncf %91 : vector<8x4x16xf32> to vector<8x4x16xbf16>
    %127 = arith.truncf %108 : vector<8x4x16xf32> to vector<8x4x16xbf16>
    "tpu.trace_start"() <{level = 10 : i32, message = "hqd,hkd->hqk"}> : () -> ()
    %cst_34 = arith.constant dense<0.000000e+00> : vector<8x4x4xf32>
    %128 = tpu.matmul %126, %127, %cst_34 {dimension_numbers = #tpu.dot_dimension_numbers<[2], [2], [1], [1], [0, 0, 0, 1, 1, 1], [0], [0]>} : vector<8x4x16xbf16>, vector<8x4x16xbf16>, vector<8x4x4xf32> -> vector<8x4x4xf32>
    "tpu.trace_stop"() : () -> ()
    %cst_35 = arith.constant 2.500000e-01 : f32
    %129 = vector.broadcast %cst_35 : f32 to vector<8x4x4xf32>
    %130 = arith.mulf %128, %129 : vector<8x4x4xf32>
    %cst_36 = arith.constant dense<0xFF800000> : vector<8x4xf32>
    %131 = vector.multi_reduction <maximumf>, %130, %cst_36 [2] : vector<8x4x4xf32> to vector<8x4xf32>
    %132 = vector.shape_cast %131 : vector<8x4xf32> to vector<8x4x1xf32>
    %133 = vector.broadcast %132 : vector<8x4x1xf32> to vector<8x4x4xf32>
    %134 = arith.subf %130, %133 : vector<8x4x4xf32>
    %135 = math.exp %134 : vector<8x4x4xf32>
    %cst_37 = arith.constant dense<0.000000e+00> : vector<8x4xf32>
    %136 = vector.multi_reduction <add>, %135, %cst_37 [2] : vector<8x4x4xf32> to vector<8x4xf32>
    %137 = vector.shape_cast %136 : vector<8x4xf32> to vector<8x4x1xf32>
    %138 = tpu.reciprocal %137 {approx = true} : vector<8x4x1xf32> -> vector<8x4x1xf32>
    %139 = vector.broadcast %138 : vector<8x4x1xf32> to vector<8x4x4xf32>
    %140 = arith.mulf %135, %139 : vector<8x4x4xf32>
    %141 = arith.truncf %140 : vector<8x4x4xf32> to vector<8x4x4xbf16>
    %142 = arith.truncf %125 : vector<8x4x16xf32> to vector<8x4x16xbf16>
    "tpu.trace_start"() <{level = 10 : i32, message = "hqk,hkd->hqd"}> : () -> ()
    %cst_38 = arith.constant dense<0.000000e+00> : vector<8x4x16xf32>
    %143 = tpu.matmul %141, %142, %cst_38 {dimension_numbers = #tpu.dot_dimension_numbers<[2], [1], [1], [2], [0, 0, 0, 1, 1, 2], [0], [0]>} : vector<8x4x4xbf16>, vector<8x4x16xbf16>, vector<8x4x16xf32> -> vector<8x4x16xf32>
    "tpu.trace_stop"() : () -> ()
    %144 = vector.extract_strided_slice %143 {offsets = [0, 0, 0], sizes = [1, 4, 16], strides = [1, 1, 1]} : vector<8x4x16xf32> to vector<1x4x16xf32>
    %145 = vector.shape_cast %144 : vector<1x4x16xf32> to vector<4x16xf32>
    %146 = vector.extract_strided_slice %143 {offsets = [1, 0, 0], sizes = [1, 4, 16], strides = [1, 1, 1]} : vector<8x4x16xf32> to vector<1x4x16xf32>
    %147 = vector.shape_cast %146 : vector<1x4x16xf32> to vector<4x16xf32>
    %148 = vector.extract_strided_slice %143 {offsets = [2, 0, 0], sizes = [1, 4, 16], strides = [1, 1, 1]} : vector<8x4x16xf32> to vector<1x4x16xf32>
    %149 = vector.shape_cast %148 : vector<1x4x16xf32> to vector<4x16xf32>
    %150 = vector.extract_strided_slice %143 {offsets = [3, 0, 0], sizes = [1, 4, 16], strides = [1, 1, 1]} : vector<8x4x16xf32> to vector<1x4x16xf32>
    %151 = vector.shape_cast %150 : vector<1x4x16xf32> to vector<4x16xf32>
    %152 = vector.extract_strided_slice %143 {offsets = [4, 0, 0], sizes = [1, 4, 16], strides = [1, 1, 1]} : vector<8x4x16xf32> to vector<1x4x16xf32>
    %153 = vector.shape_cast %152 : vector<1x4x16xf32> to vector<4x16xf32>
    %154 = vector.extract_strided_slice %143 {offsets = [5, 0, 0], sizes = [1, 4, 16], strides = [1, 1, 1]} : vector<8x4x16xf32> to vector<1x4x16xf32>
    %155 = vector.shape_cast %154 : vector<1x4x16xf32> to vector<4x16xf32>
    %156 = vector.extract_strided_slice %143 {offsets = [6, 0, 0], sizes = [1, 4, 16], strides = [1, 1, 1]} : vector<8x4x16xf32> to vector<1x4x16xf32>
    %157 = vector.shape_cast %156 : vector<1x4x16xf32> to vector<4x16xf32>
    %158 = vector.extract_strided_slice %143 {offsets = [7, 0, 0], sizes = [1, 4, 16], strides = [1, 1, 1]} : vector<8x4x16xf32> to vector<1x4x16xf32>
    %159 = vector.shape_cast %158 : vector<1x4x16xf32> to vector<4x16xf32>
    %160 = tpu.concatenate %145, %147, %149, %151, %153, %155, %157, %159 in 1 : vector<4x16xf32>, vector<4x16xf32>, vector<4x16xf32>, vector<4x16xf32>, vector<4x16xf32>, vector<4x16xf32>, vector<4x16xf32>, vector<4x16xf32> -> vector<4x128xf32>
    %161 = arith.truncf %160 : vector<4x128xf32> to vector<4x128xbf16>
    %cst_39 = arith.constant dense<0.000000e+00> : vector<4x128xf32>
    %162 = tpu.matmul %161, %74, %cst_39 {dimension_numbers = #tpu.dot_dimension_numbers<[1], [0], [0], [1], [0, 0, 1, 1], [], []>} : vector<4x128xbf16>, vector<128x128xbf16>, vector<4x128xf32> -> vector<4x128xf32>
    %163 = vector.broadcast %32 : vector<1x128xf32> to vector<4x128xf32>
    %164 = arith.addf %162, %163 : vector<4x128xf32>
    %165 = arith.addf %3, %164 : vector<4x128xf32>
    %cst_40 = arith.constant dense<0.000000e+00> : vector<4xf32>
    %166 = vector.multi_reduction <add>, %165, %cst_40 [1] : vector<4x128xf32> to vector<4xf32>
    %167 = vector.shape_cast %166 : vector<4xf32> to vector<4x1xf32>
    %cst_41 = arith.constant 1.280000e+02 : f32
    %168 = vector.broadcast %cst_41 : f32 to vector<4x1xf32>
    %169 = arith.divf %167, %168 : vector<4x1xf32>
    %170 = vector.broadcast %169 : vector<4x1xf32> to vector<4x128xf32>
    %171 = arith.subf %165, %170 : vector<4x128xf32>
    %172 = arith.mulf %171, %171 : vector<4x128xf32>
    %cst_42 = arith.constant dense<0.000000e+00> : vector<4xf32>
    %173 = vector.multi_reduction <add>, %172, %cst_42 [1] : vector<4x128xf32> to vector<4xf32>
    %174 = vector.shape_cast %173 : vector<4xf32> to vector<4x1xf32>
    %cst_43 = arith.constant 1.270000e+02 : f32
    %175 = vector.broadcast %cst_43 : f32 to vector<4x1xf32>
    %176 = arith.divf %174, %175 : vector<4x1xf32>
    %177 = math.sqrt %176 : vector<4x1xf32>
    %cst_44 = arith.constant 9.99999997E-7 : f32
    %178 = vector.broadcast %cst_44 : f32 to vector<4x1xf32>
    %179 = arith.addf %177, %178 : vector<4x1xf32>
    %180 = tpu.reciprocal %179 {approx = true} : vector<4x1xf32> -> vector<4x1xf32>
    %181 = vector.broadcast %180 : vector<4x1xf32> to vector<4x128xf32>
    %182 = arith.mulf %171, %181 : vector<4x128xf32>
    %183 = vector.broadcast %25 : vector<1x128xf32> to vector<4x128xf32>
    %184 = arith.mulf %183, %182 : vector<4x128xf32>
    %185 = vector.broadcast %26 : vector<1x128xf32> to vector<4x128xf32>
    %186 = arith.addf %184, %185 : vector<4x128xf32>
    %187 = arith.addf %186, %6 : vector<4x128xf32>
    %188 = arith.addf %4, %5 : vector<4x128xf32>
    %189 = vector.extract_strided_slice %14 {offsets = [0, 0], sizes = [128, 128], strides = [1, 1]} : vector<128x512xbf16> to vector<128x128xbf16>
    %190 = arith.truncf %187 : vector<4x128xf32> to vector<4x128xbf16>
    %cst_45 = arith.constant dense<0.000000e+00> : vector<4x128xf32>
    %191 = tpu.matmul %190, %189, %cst_45 {dimension_numbers = #tpu.dot_dimension_numbers<[1], [0], [0], [1], [0, 0, 1, 1], [], []>} : vector<4x128xbf16>, vector<128x128xbf16>, vector<4x128xf32> -> vector<4x128xf32>
    %192 = vector.broadcast %33 : vector<1x128xf32> to vector<4x128xf32>
    %193 = arith.addf %191, %192 : vector<4x128xf32>
    %194 = vector.extract_strided_slice %14 {offsets = [0, 128], sizes = [128, 128], strides = [1, 1]} : vector<128x512xbf16> to vector<128x128xbf16>
    %195 = arith.truncf %188 : vector<4x128xf32> to vector<4x128xbf16>
    %cst_46 = arith.constant dense<0.000000e+00> : vector<4x128xf32>
    %196 = tpu.matmul %195, %194, %cst_46 {dimension_numbers = #tpu.dot_dimension_numbers<[1], [0], [0], [1], [0, 0, 1, 1], [], []>} : vector<4x128xbf16>, vector<128x128xbf16>, vector<4x128xf32> -> vector<4x128xf32>
    %197 = vector.broadcast %34 : vector<1x128xf32> to vector<4x128xf32>
    %198 = arith.addf %196, %197 : vector<4x128xf32>
    %199 = vector.extract_strided_slice %14 {offsets = [0, 256], sizes = [128, 128], strides = [1, 1]} : vector<128x512xbf16> to vector<128x128xbf16>
    %200 = arith.truncf %4 : vector<4x128xf32> to vector<4x128xbf16>
    %cst_47 = arith.constant dense<0.000000e+00> : vector<4x128xf32>
    %201 = tpu.matmul %200, %199, %cst_47 {dimension_numbers = #tpu.dot_dimension_numbers<[1], [0], [0], [1], [0, 0, 1, 1], [], []>} : vector<4x128xbf16>, vector<128x128xbf16>, vector<4x128xf32> -> vector<4x128xf32>
    %202 = vector.broadcast %35 : vector<1x128xf32> to vector<4x128xf32>
    %203 = arith.addf %201, %202 : vector<4x128xf32>
    %204 = vector.extract_strided_slice %14 {offsets = [0, 384], sizes = [128, 128], strides = [1, 1]} : vector<128x512xbf16> to vector<128x128xbf16>
    %205 = vector.extract_strided_slice %193 {offsets = [0, 0], sizes = [4, 16], strides = [1, 1]} : vector<4x128xf32> to vector<4x16xf32>
    %206 = vector.extract_strided_slice %193 {offsets = [0, 16], sizes = [4, 16], strides = [1, 1]} : vector<4x128xf32> to vector<4x16xf32>
    %207 = vector.extract_strided_slice %193 {offsets = [0, 32], sizes = [4, 16], strides = [1, 1]} : vector<4x128xf32> to vector<4x16xf32>
    %208 = vector.extract_strided_slice %193 {offsets = [0, 48], sizes = [4, 16], strides = [1, 1]} : vector<4x128xf32> to vector<4x16xf32>
    %209 = vector.extract_strided_slice %193 {offsets = [0, 64], sizes = [4, 16], strides = [1, 1]} : vector<4x128xf32> to vector<4x16xf32>
    %210 = vector.extract_strided_slice %193 {offsets = [0, 80], sizes = [4, 16], strides = [1, 1]} : vector<4x128xf32> to vector<4x16xf32>
    %211 = vector.extract_strided_slice %193 {offsets = [0, 96], sizes = [4, 16], strides = [1, 1]} : vector<4x128xf32> to vector<4x16xf32>
    %212 = vector.extract_strided_slice %193 {offsets = [0, 112], sizes = [4, 16], strides = [1, 1]} : vector<4x128xf32> to vector<4x16xf32>
    %213 = vector.shape_cast %205 : vector<4x16xf32> to vector<1x4x16xf32>
    %214 = vector.shape_cast %206 : vector<4x16xf32> to vector<1x4x16xf32>
    %215 = vector.shape_cast %207 : vector<4x16xf32> to vector<1x4x16xf32>
    %216 = vector.shape_cast %208 : vector<4x16xf32> to vector<1x4x16xf32>
    %217 = vector.shape_cast %209 : vector<4x16xf32> to vector<1x4x16xf32>
    %218 = vector.shape_cast %210 : vector<4x16xf32> to vector<1x4x16xf32>
    %219 = vector.shape_cast %211 : vector<4x16xf32> to vector<1x4x16xf32>
    %220 = vector.shape_cast %212 : vector<4x16xf32> to vector<1x4x16xf32>
    %221 = tpu.concatenate %213, %214, %215, %216, %217, %218, %219, %220 in 0 : vector<1x4x16xf32>, vector<1x4x16xf32>, vector<1x4x16xf32>, vector<1x4x16xf32>, vector<1x4x16xf32>, vector<1x4x16xf32>, vector<1x4x16xf32>, vector<1x4x16xf32> -> vector<8x4x16xf32>
    %222 = vector.extract_strided_slice %198 {offsets = [0, 0], sizes = [4, 16], strides = [1, 1]} : vector<4x128xf32> to vector<4x16xf32>
    %223 = vector.extract_strided_slice %198 {offsets = [0, 16], sizes = [4, 16], strides = [1, 1]} : vector<4x128xf32> to vector<4x16xf32>
    %224 = vector.extract_strided_slice %198 {offsets = [0, 32], sizes = [4, 16], strides = [1, 1]} : vector<4x128xf32> to vector<4x16xf32>
    %225 = vector.extract_strided_slice %198 {offsets = [0, 48], sizes = [4, 16], strides = [1, 1]} : vector<4x128xf32> to vector<4x16xf32>
    %226 = vector.extract_strided_slice %198 {offsets = [0, 64], sizes = [4, 16], strides = [1, 1]} : vector<4x128xf32> to vector<4x16xf32>
    %227 = vector.extract_strided_slice %198 {offsets = [0, 80], sizes = [4, 16], strides = [1, 1]} : vector<4x128xf32> to vector<4x16xf32>
    %228 = vector.extract_strided_slice %198 {offsets = [0, 96], sizes = [4, 16], strides = [1, 1]} : vector<4x128xf32> to vector<4x16xf32>
    %229 = vector.extract_strided_slice %198 {offsets = [0, 112], sizes = [4, 16], strides = [1, 1]} : vector<4x128xf32> to vector<4x16xf32>
    %230 = vector.shape_cast %222 : vector<4x16xf32> to vector<1x4x16xf32>
    %231 = vector.shape_cast %223 : vector<4x16xf32> to vector<1x4x16xf32>
    %232 = vector.shape_cast %224 : vector<4x16xf32> to vector<1x4x16xf32>
    %233 = vector.shape_cast %225 : vector<4x16xf32> to vector<1x4x16xf32>
    %234 = vector.shape_cast %226 : vector<4x16xf32> to vector<1x4x16xf32>
    %235 = vector.shape_cast %227 : vector<4x16xf32> to vector<1x4x16xf32>
    %236 = vector.shape_cast %228 : vector<4x16xf32> to vector<1x4x16xf32>
    %237 = vector.shape_cast %229 : vector<4x16xf32> to vector<1x4x16xf32>
    %238 = tpu.concatenate %230, %231, %232, %233, %234, %235, %236, %237 in 0 : vector<1x4x16xf32>, vector<1x4x16xf32>, vector<1x4x16xf32>, vector<1x4x16xf32>, vector<1x4x16xf32>, vector<1x4x16xf32>, vector<1x4x16xf32>, vector<1x4x16xf32> -> vector<8x4x16xf32>
    %239 = vector.extract_strided_slice %203 {offsets = [0, 0], sizes = [4, 16], strides = [1, 1]} : vector<4x128xf32> to vector<4x16xf32>
    %240 = vector.extract_strided_slice %203 {offsets = [0, 16], sizes = [4, 16], strides = [1, 1]} : vector<4x128xf32> to vector<4x16xf32>
    %241 = vector.extract_strided_slice %203 {offsets = [0, 32], sizes = [4, 16], strides = [1, 1]} : vector<4x128xf32> to vector<4x16xf32>
    %242 = vector.extract_strided_slice %203 {offsets = [0, 48], sizes = [4, 16], strides = [1, 1]} : vector<4x128xf32> to vector<4x16xf32>
    %243 = vector.extract_strided_slice %203 {offsets = [0, 64], sizes = [4, 16], strides = [1, 1]} : vector<4x128xf32> to vector<4x16xf32>
    %244 = vector.extract_strided_slice %203 {offsets = [0, 80], sizes = [4, 16], strides = [1, 1]} : vector<4x128xf32> to vector<4x16xf32>
    %245 = vector.extract_strided_slice %203 {offsets = [0, 96], sizes = [4, 16], strides = [1, 1]} : vector<4x128xf32> to vector<4x16xf32>
    %246 = vector.extract_strided_slice %203 {offsets = [0, 112], sizes = [4, 16], strides = [1, 1]} : vector<4x128xf32> to vector<4x16xf32>
    %247 = vector.shape_cast %239 : vector<4x16xf32> to vector<1x4x16xf32>
    %248 = vector.shape_cast %240 : vector<4x16xf32> to vector<1x4x16xf32>
    %249 = vector.shape_cast %241 : vector<4x16xf32> to vector<1x4x16xf32>
    %250 = vector.shape_cast %242 : vector<4x16xf32> to vector<1x4x16xf32>
    %251 = vector.shape_cast %243 : vector<4x16xf32> to vector<1x4x16xf32>
    %252 = vector.shape_cast %244 : vector<4x16xf32> to vector<1x4x16xf32>
    %253 = vector.shape_cast %245 : vector<4x16xf32> to vector<1x4x16xf32>
    %254 = vector.shape_cast %246 : vector<4x16xf32> to vector<1x4x16xf32>
    %255 = tpu.concatenate %247, %248, %249, %250, %251, %252, %253, %254 in 0 : vector<1x4x16xf32>, vector<1x4x16xf32>, vector<1x4x16xf32>, vector<1x4x16xf32>, vector<1x4x16xf32>, vector<1x4x16xf32>, vector<1x4x16xf32>, vector<1x4x16xf32> -> vector<8x4x16xf32>
    %256 = arith.truncf %221 : vector<8x4x16xf32> to vector<8x4x16xbf16>
    %257 = arith.truncf %238 : vector<8x4x16xf32> to vector<8x4x16xbf16>
    "tpu.trace_start"() <{level = 10 : i32, message = "hqd,hkd->hqk"}> : () -> ()
    %cst_48 = arith.constant dense<0.000000e+00> : vector<8x4x4xf32>
    %258 = tpu.matmul %256, %257, %cst_48 {dimension_numbers = #tpu.dot_dimension_numbers<[2], [2], [1], [1], [0, 0, 0, 1, 1, 1], [0], [0]>} : vector<8x4x16xbf16>, vector<8x4x16xbf16>, vector<8x4x4xf32> -> vector<8x4x4xf32>
    "tpu.trace_stop"() : () -> ()
    %cst_49 = arith.constant 2.500000e-01 : f32
    %259 = vector.broadcast %cst_49 : f32 to vector<8x4x4xf32>
    %260 = arith.mulf %258, %259 : vector<8x4x4xf32>
    %261 = vector.shape_cast %8 : vector<4x4xf32> to vector<1x4x4xf32>
    %262 = vector.broadcast %261 : vector<1x4x4xf32> to vector<8x4x4xf32>
    %263 = arith.mulf %260, %262 : vector<8x4x4xf32>
    %264 = vector.shape_cast %10 : vector<4x4xf32> to vector<1x4x4xf32>
    %265 = vector.broadcast %264 : vector<1x4x4xf32> to vector<8x4x4xf32>
    %266 = arith.addf %263, %265 : vector<8x4x4xf32>
    %cst_50 = arith.constant dense<0xFF800000> : vector<8x4xf32>
    %267 = vector.multi_reduction <maximumf>, %266, %cst_50 [2] : vector<8x4x4xf32> to vector<8x4xf32>
    %268 = vector.shape_cast %267 : vector<8x4xf32> to vector<8x4x1xf32>
    %269 = vector.broadcast %268 : vector<8x4x1xf32> to vector<8x4x4xf32>
    %270 = arith.subf %266, %269 : vector<8x4x4xf32>
    %271 = math.exp %270 : vector<8x4x4xf32>
    %cst_51 = arith.constant dense<0.000000e+00> : vector<8x4xf32>
    %272 = vector.multi_reduction <add>, %271, %cst_51 [2] : vector<8x4x4xf32> to vector<8x4xf32>
    %273 = vector.shape_cast %272 : vector<8x4xf32> to vector<8x4x1xf32>
    %274 = tpu.reciprocal %273 {approx = true} : vector<8x4x1xf32> -> vector<8x4x1xf32>
    %275 = vector.broadcast %274 : vector<8x4x1xf32> to vector<8x4x4xf32>
    %276 = arith.mulf %271, %275 : vector<8x4x4xf32>
    %277 = arith.truncf %276 : vector<8x4x4xf32> to vector<8x4x4xbf16>
    %278 = arith.truncf %255 : vector<8x4x16xf32> to vector<8x4x16xbf16>
    "tpu.trace_start"() <{level = 10 : i32, message = "hqk,hkd->hqd"}> : () -> ()
    %cst_52 = arith.constant dense<0.000000e+00> : vector<8x4x16xf32>
    %279 = tpu.matmul %277, %278, %cst_52 {dimension_numbers = #tpu.dot_dimension_numbers<[2], [1], [1], [2], [0, 0, 0, 1, 1, 2], [0], [0]>} : vector<8x4x4xbf16>, vector<8x4x16xbf16>, vector<8x4x16xf32> -> vector<8x4x16xf32>
    "tpu.trace_stop"() : () -> ()
    %280 = vector.extract_strided_slice %279 {offsets = [0, 0, 0], sizes = [1, 4, 16], strides = [1, 1, 1]} : vector<8x4x16xf32> to vector<1x4x16xf32>
    %281 = vector.shape_cast %280 : vector<1x4x16xf32> to vector<4x16xf32>
    %282 = vector.extract_strided_slice %279 {offsets = [1, 0, 0], sizes = [1, 4, 16], strides = [1, 1, 1]} : vector<8x4x16xf32> to vector<1x4x16xf32>
    %283 = vector.shape_cast %282 : vector<1x4x16xf32> to vector<4x16xf32>
    %284 = vector.extract_strided_slice %279 {offsets = [2, 0, 0], sizes = [1, 4, 16], strides = [1, 1, 1]} : vector<8x4x16xf32> to vector<1x4x16xf32>
    %285 = vector.shape_cast %284 : vector<1x4x16xf32> to vector<4x16xf32>
    %286 = vector.extract_strided_slice %279 {offsets = [3, 0, 0], sizes = [1, 4, 16], strides = [1, 1, 1]} : vector<8x4x16xf32> to vector<1x4x16xf32>
    %287 = vector.shape_cast %286 : vector<1x4x16xf32> to vector<4x16xf32>
    %288 = vector.extract_strided_slice %279 {offsets = [4, 0, 0], sizes = [1, 4, 16], strides = [1, 1, 1]} : vector<8x4x16xf32> to vector<1x4x16xf32>
    %289 = vector.shape_cast %288 : vector<1x4x16xf32> to vector<4x16xf32>
    %290 = vector.extract_strided_slice %279 {offsets = [5, 0, 0], sizes = [1, 4, 16], strides = [1, 1, 1]} : vector<8x4x16xf32> to vector<1x4x16xf32>
    %291 = vector.shape_cast %290 : vector<1x4x16xf32> to vector<4x16xf32>
    %292 = vector.extract_strided_slice %279 {offsets = [6, 0, 0], sizes = [1, 4, 16], strides = [1, 1, 1]} : vector<8x4x16xf32> to vector<1x4x16xf32>
    %293 = vector.shape_cast %292 : vector<1x4x16xf32> to vector<4x16xf32>
    %294 = vector.extract_strided_slice %279 {offsets = [7, 0, 0], sizes = [1, 4, 16], strides = [1, 1, 1]} : vector<8x4x16xf32> to vector<1x4x16xf32>
    %295 = vector.shape_cast %294 : vector<1x4x16xf32> to vector<4x16xf32>
    %296 = tpu.concatenate %281, %283, %285, %287, %289, %291, %293, %295 in 1 : vector<4x16xf32>, vector<4x16xf32>, vector<4x16xf32>, vector<4x16xf32>, vector<4x16xf32>, vector<4x16xf32>, vector<4x16xf32>, vector<4x16xf32> -> vector<4x128xf32>
    %297 = arith.truncf %296 : vector<4x128xf32> to vector<4x128xbf16>
    %cst_53 = arith.constant dense<0.000000e+00> : vector<4x128xf32>
    %298 = tpu.matmul %297, %204, %cst_53 {dimension_numbers = #tpu.dot_dimension_numbers<[1], [0], [0], [1], [0, 0, 1, 1], [], []>} : vector<4x128xbf16>, vector<128x128xbf16>, vector<4x128xf32> -> vector<4x128xf32>
    %299 = vector.broadcast %36 : vector<1x128xf32> to vector<4x128xf32>
    %300 = arith.addf %298, %299 : vector<4x128xf32>
    %301 = arith.addf %3, %300 : vector<4x128xf32>
    %cst_54 = arith.constant dense<0.000000e+00> : vector<4xf32>
    %302 = vector.multi_reduction <add>, %301, %cst_54 [1] : vector<4x128xf32> to vector<4xf32>
    %303 = vector.shape_cast %302 : vector<4xf32> to vector<4x1xf32>
    %cst_55 = arith.constant 1.280000e+02 : f32
    %304 = vector.broadcast %cst_55 : f32 to vector<4x1xf32>
    %305 = arith.divf %303, %304 : vector<4x1xf32>
    %306 = vector.broadcast %305 : vector<4x1xf32> to vector<4x128xf32>
    %307 = arith.subf %301, %306 : vector<4x128xf32>
    %308 = arith.mulf %307, %307 : vector<4x128xf32>
    %cst_56 = arith.constant dense<0.000000e+00> : vector<4xf32>
    %309 = vector.multi_reduction <add>, %308, %cst_56 [1] : vector<4x128xf32> to vector<4xf32>
    %310 = vector.shape_cast %309 : vector<4xf32> to vector<4x1xf32>
    %cst_57 = arith.constant 1.270000e+02 : f32
    %311 = vector.broadcast %cst_57 : f32 to vector<4x1xf32>
    %312 = arith.divf %310, %311 : vector<4x1xf32>
    %313 = math.sqrt %312 : vector<4x1xf32>
    %cst_58 = arith.constant 9.99999997E-7 : f32
    %314 = vector.broadcast %cst_58 : f32 to vector<4x1xf32>
    %315 = arith.addf %313, %314 : vector<4x1xf32>
    %316 = tpu.reciprocal %315 {approx = true} : vector<4x1xf32> -> vector<4x1xf32>
    %317 = vector.broadcast %316 : vector<4x1xf32> to vector<4x128xf32>
    %318 = arith.mulf %307, %317 : vector<4x128xf32>
    %319 = vector.broadcast %27 : vector<1x128xf32> to vector<4x128xf32>
    %320 = arith.mulf %319, %318 : vector<4x128xf32>
    %321 = vector.broadcast %28 : vector<1x128xf32> to vector<4x128xf32>
    %322 = arith.addf %320, %321 : vector<4x128xf32>
    %323 = arith.truncf %322 : vector<4x128xf32> to vector<4x128xbf16>
    %cst_59 = arith.constant dense<0.000000e+00> : vector<4x256xf32>
    %324 = tpu.matmul %323, %16, %cst_59 {dimension_numbers = #tpu.dot_dimension_numbers<[1], [0], [0], [1], [0, 0, 1, 1], [], []>} : vector<4x128xbf16>, vector<128x256xbf16>, vector<4x256xf32> -> vector<4x256xf32>
    %325 = vector.broadcast %20 : vector<1x256xf32> to vector<4x256xf32>
    %326 = arith.addf %324, %325 : vector<4x256xf32>
    %cst_60 = arith.constant 0.000000e+00 : f32
    %327 = vector.broadcast %cst_60 : f32 to vector<4x256xf32>
    %328 = arith.maximumf %326, %327 : vector<4x256xf32>
    %329 = arith.truncf %328 : vector<4x256xf32> to vector<4x256xbf16>
    %cst_61 = arith.constant dense<0.000000e+00> : vector<4x128xf32>
    %330 = tpu.matmul %329, %18, %cst_61 {dimension_numbers = #tpu.dot_dimension_numbers<[1], [0], [0], [1], [0, 0, 1, 1], [], []>} : vector<4x256xbf16>, vector<256x128xbf16>, vector<4x128xf32> -> vector<4x128xf32>
    %331 = arith.addf %322, %330 : vector<4x128xf32>
    %332 = vector.broadcast %37 : vector<1x128xf32> to vector<4x128xf32>
    %333 = arith.addf %331, %332 : vector<4x128xf32>
    %c0_62 = arith.constant 0 : index
    %c0_63 = arith.constant 0 : index
    %334 = vector.load %arg10[%c0_62, %c0_63] : memref<4x128xf32, #tpu.memory_space<vmem>>, vector<4x128xf32>
    tpu.vector_store %arg10[%c0_62, %c0_63], %333 {strides = array<i32>} : memref<4x128xf32, #tpu.memory_space<vmem>>, vector<4x128xf32>,
    return
  }
  func.func @transform_0(%arg0: i32) -> (i32, i32) {
    %c0_i32 = arith.constant 0 : i32
    %c0_i32_0 = arith.constant 0 : i32
    %c0_i32_1 = arith.constant 0 : i32
    return %c0_i32, %c0_i32_0 : i32, i32
  }
  func.func @transform_1(%arg0: i32) -> (i32, i32) {
    %c0_i32 = arith.constant 0 : i32
    %c0_i32_0 = arith.constant 0 : i32
    %c0_i32_1 = arith.constant 0 : i32
    return %c0_i32, %c0_i32_0 : i32, i32
  }
  func.func @transform_2(%arg0: i32) -> (i32, i32) {
    %c0_i32 = arith.constant 0 : i32
    %c0_i32_0 = arith.constant 0 : i32
    %c0_i32_1 = arith.constant 0 : i32
    return %c0_i32, %c0_i32_0 : i32, i32
  }
  func.func @transform_3(%arg0: i32) -> (i32, i32, i32) {
    %c0_i32 = arith.constant 0 : i32
    %c0_i32_0 = arith.constant 0 : i32
    %c0_i32_1 = arith.constant 0 : i32
    %c0_i32_2 = arith.constant 0 : i32
    return %c0_i32, %c0_i32_0, %c0_i32_1 : i32, i32, i32
  }
  func.func @transform_4(%arg0: i32) -> (i32, i32, i32) {
    %c0_i32 = arith.constant 0 : i32
    %c0_i32_0 = arith.constant 0 : i32
    %c0_i32_1 = arith.constant 0 : i32
    return %arg0, %c0_i32, %c0_i32_0 : i32, i32, i32
  }
  func.func @transform_5(%arg0: i32) -> (i32, i32, i32) {
    %c0_i32 = arith.constant 0 : i32
    %c0_i32_0 = arith.constant 0 : i32
    %c0_i32_1 = arith.constant 0 : i32
    return %arg0, %c0_i32, %c0_i32_0 : i32, i32, i32
  }
  func.func @transform_6(%arg0: i32) -> (i32, i32, i32) {
    %c0_i32 = arith.constant 0 : i32
    %c0_i32_0 = arith.constant 0 : i32
    %c0_i32_1 = arith.constant 0 : i32
    return %arg0, %c0_i32, %c0_i32_0 : i32, i32, i32
  }
  func.func @transform_7(%arg0: i32) -> (i32, i32, i32) {
    %c0_i32 = arith.constant 0 : i32
    %c0_i32_0 = arith.constant 0 : i32
    %c0_i32_1 = arith.constant 0 : i32
    return %arg0, %c0_i32, %c0_i32_0 : i32, i32, i32
  }
  func.func @transform_8(%arg0: i32) -> (i32, i32, i32) {
    %c0_i32 = arith.constant 0 : i32
    %c0_i32_0 = arith.constant 0 : i32
    %c0_i32_1 = arith.constant 0 : i32
    return %arg0, %c0_i32, %c0_i32_0 : i32, i32, i32
  }
  func.func @transform_9(%arg0: i32) -> (i32, i32) {
    %c0_i32 = arith.constant 0 : i32
    %c0_i32_0 = arith.constant 0 : i32
    %c0_i32_1 = arith.constant 0 : i32
    return %c0_i32, %c0_i32_0 : i32, i32
  }
}

</mosaic_0001>

<llo_original>
// kernel: transformer_forward.2
$region0: #{transformer_forward.2}
  #allocation0 [shape = 'u32[]', space=smem, size = 0x4, offset = 0x4, fixed_abs, tag = 'smem constant byte address 0x4 - core index']
  #allocation1 [shape = 'u32[72,128]{1,0:T(1,128)}', space=vmem, size = 0x9000, scoped, tag = 'internal scratch']
  %s0 = inlined_call_operand.vmem [shape: f32[16,128], index: 0, kind: input, shape index: {}, may-alias: {0,8}]
  %s1 = inlined_call_operand.vmem [shape: f32[4,128], index: 1, kind: input, shape index: {}]
  %s2 = inlined_call_operand.vmem [shape: f32[2,4,4], index: 2, kind: input, shape index: {}]
  %s3 = inlined_call_operand.hbm [shape: bf16[2,128,512], index: 3, kind: input, shape index: {}]
  %s4 = inlined_call_operand.hbm [shape: bf16[2,128,256], index: 4, kind: input, shape index: {}]
  %s5 = inlined_call_operand.hbm [shape: bf16[2,256,128], index: 5, kind: input, shape index: {}]
  %s6 = inlined_call_operand.vmem [shape: f32[2,9,128], index: 6, kind: input, shape index: {}]
  %s7 = inlined_call_operand.vmem [shape: f32[2,1,256], index: 7, kind: input, shape index: {}]
  %s8 = inlined_call_operand.vmem [shape: f32[16,128], index: 8, kind: output, shape index: {0}, may-alias: {0,8}]
  %s9 = inlined_call_operand.vmem [shape: f32[4,128], index: 9, kind: output, shape index: {1}]
  %10 = xla_tuple %s8, %s9
  %s11 = sld [smem:[#allocation0]]
  $region89: #{transformer_forward.2} parent=0
    _
  %s13 = ssub.s32 1, %s11
  %s14 = scalar_select 0, %s13, %s11
  $region1: #{transformer_forward.2} parent=0
    #allocation2 [shape = 'u8[262144]{0}', space=vmem, size = 0x40000, scoped, tag = 'input window, operand 3']
    #allocation3 [shape = 's32[2]{0}', space=sflag, size = 0x8, scoped, tag = 'scoped memory for transformer_forward.2']
    #allocation4 [shape = 'u8[131072]{0}', space=vmem, size = 0x20000, scoped, tag = 'input window, operand 4']
    #allocation5 [shape = 's32[2]{0}', space=sflag, size = 0x8, scoped, tag = 'scoped memory for transformer_forward.2']
    #allocation6 [shape = 'u8[131072]{0}', space=vmem, size = 0x20000, scoped, tag = 'input window, operand 5']
    %15 = vsyncpa [#allocation3], 0
    %s16 = scalar_lea.sflag [#allocation3], 1
    %17 = vsyncpa %s16, 0
    %18 = vsyncpa [#allocation5], 0
    %s19 = scalar_lea.sflag [#allocation5], 1
    %20 = vsyncpa %s19, 0
    loop: start=0, step=1, limit=4
    $region2: #{transformer_forward.2} parent=1 // loop_pre_header
      _
    $region3: #{transformer_forward.2} parent=1 // loop_header
      %s22 = sphi 0, %s26
      %p23 = scmp.ge.s32.totalorder %s22, 4
      %s30 = sphi 0, %s30
      %s32 = sphi 0, %s30
      %s33 = sphi 0, %s32
      %s47 = sphi 0, %s33
      %s51 = sphi 0, %s51
      %s53 = sphi 0, %s51
      %s54 = sphi 0, %s53
      %s68 = sphi 0, %s54
      %s72 = sphi 0, %s72
      %s74 = sphi 0, %s72
      %s75 = sphi 0, %s74
      %s89 = sphi 0, %s75
      %s95 = sphi 0, %s97
      %s98 = sphi 0, %s95
      %s99 = sphi 0, %s98
      %s115 = sphi 0, %s99
      %s121 = sphi 0, %s123
      %s124 = sphi 0, %s121
      %s125 = sphi 0, %s124
      %s141 = sphi 0, %s125
      %s147 = sphi 0, %s149
      %s150 = sphi 0, %s147
      %s151 = sphi 0, %s150
      %s167 = sphi 0, %s151
      %s173 = sphi 0, %s175
      %s176 = sphi 0, %s173
      %s177 = sphi 0, %s176
      %s193 = sphi 0, %s177
      %s199 = sphi 0, %s201
      %s202 = sphi 0, %s199
      %s203 = sphi 0, %s202
      %s219 = sphi 0, %s203
      %s223 = sphi 0, %s223
      %s225 = sphi 0, %s223
      %s226 = sphi 0, %s225
      %s240 = sphi 0, %s226
      %s244 = sphi 0, %s244
      %s246 = sphi 0, %s244
      %s247 = sphi 0, %s246
      %s261 = sphi 0, %s247
    $region4: #{transformer_forward.2} parent=1 // loop_header_branch
      %25 = sbr.rel (%p23) target = $region8
    $region5: #{transformer_forward.2} parent=1 // loop_body
      %s27 = ssub.s32 %s22, 1
      %s28 = ssub.s32 %s22, 2
      %s29 = sadd.s32 %s22, 1
      %s31 = sadd.s32 %s30, 1
      %p34 = scmp.eq.s32.totalorder %s22, 1
      %p35 = scmp.ne.s32.totalorder %s30, %s32
      %p36 = scmp.eq.s32.totalorder %s22, 0
      %p37 = por %p35, %p36
      %p38 = scmp.ne.s32.totalorder %s30, %s32
      %p39 = scmp.eq.s32.totalorder %s27, 1
      %p40 = por %p38, %p39
      %p41 = scmp.ne.s32.totalorder %s32, %s33
      %p42 = scmp.eq.s32.totalorder %s27, 0
      %p43 = por %p41, %p42
      %p44 = scmp.ne.s32.totalorder %s32, %s33
      %p45 = scmp.eq.s32.totalorder %s28, 1
      %p46 = por %p44, %p45
      %p48 = scmp.ne.s32.totalorder %s33, %s47
      %p49 = scmp.eq.s32.totalorder %s28, 0
      %p50 = por %p48, %p49
      %s52 = sadd.s32 %s51, 1
      %p55 = scmp.eq.s32.totalorder %s22, 1
      %p56 = scmp.ne.s32.totalorder %s51, %s53
      %p57 = scmp.eq.s32.totalorder %s22, 0
      %p58 = por %p56, %p57
      %p59 = scmp.ne.s32.totalorder %s51, %s53
      %p60 = scmp.eq.s32.totalorder %s27, 1
      %p61 = por %p59, %p60
      %p62 = scmp.ne.s32.totalorder %s53, %s54
      %p63 = scmp.eq.s32.totalorder %s27, 0
      %p64 = por %p62, %p63
      %p65 = scmp.ne.s32.totalorder %s53, %s54
      %p66 = scmp.eq.s32.totalorder %s28, 1
      %p67 = por %p65, %p66
      %p69 = scmp.ne.s32.totalorder %s54, %s68
      %p70 = scmp.eq.s32.totalorder %s28, 0
      %p71 = por %p69, %p70
      %s73 = sadd.s32 %s72, 1
      %p76 = scmp.eq.s32.totalorder %s22, 1
      %p77 = scmp.ne.s32.totalorder %s72, %s74
      %p78 = scmp.eq.s32.totalorder %s22, 0
      %p79 = por %p77, %p78
      %p80 = scmp.ne.s32.totalorder %s72, %s74
      %p81 = scmp.eq.s32.totalorder %s27, 1
      %p82 = por %p80, %p81
      %p83 = scmp.ne.s32.totalorder %s74, %s75
      %p84 = scmp.eq.s32.totalorder %s27, 0
      %p85 = por %p83, %p84
      %p86 = scmp.ne.s32.totalorder %s74, %s75
      %p87 = scmp.eq.s32.totalorder %s28, 1
      %p88 = por %p86, %p87
      %p90 = scmp.ne.s32.totalorder %s75, %s89
      %p91 = scmp.eq.s32.totalorder %s28, 0
      %p92 = por %p90, %p91
      %s93 = ssub.s32 %s22, %s29
      %p94 = scmp.eq.s32.totalorder %s93, 0
      %s96 = sadd.s32 %s95, 1
      %s97 = scalar_select %p94, %s95, %s96
      %p100 = pneg %p94
      %p101 = scmp.eq.s32.totalorder %s22, 1
      %p102 = por %p100, %p101
      %p103 = scmp.ne.s32.totalorder %s95, %s98
      %p104 = scmp.eq.s32.totalorder %s22, 0
      %p105 = por %p103, %p104
      %p106 = scmp.ne.s32.totalorder %s95, %s98
      %p107 = scmp.eq.s32.totalorder %s27, 1
      %p108 = por %p106, %p107
      %p109 = scmp.ne.s32.totalorder %s98, %s99
      %p110 = scmp.eq.s32.totalorder %s27, 0
      %p111 = por %p109, %p110
      %p112 = scmp.ne.s32.totalorder %s98, %s99
      %p113 = scmp.eq.s32.totalorder %s28, 1
      %p114 = por %p112, %p113
      %p116 = scmp.ne.s32.totalorder %s99, %s115
      %p117 = scmp.eq.s32.totalorder %s28, 0
      %p118 = por %p116, %p117
      %s119 = ssub.s32 %s22, %s29
      %p120 = scmp.eq.s32.totalorder %s119, 0
      %s122 = sadd.s32 %s121, 1
      %s123 = scalar_select %p120, %s121, %s122
      %p126 = pneg %p120
      %p127 = scmp.eq.s32.totalorder %s22, 1
      %p128 = por %p126, %p127
      %p129 = scmp.ne.s32.totalorder %s121, %s124
      %p130 = scmp.eq.s32.totalorder %s22, 0
      %p131 = por %p129, %p130
      %p132 = scmp.ne.s32.totalorder %s121, %s124
      %p133 = scmp.eq.s32.totalorder %s27, 1
      %p134 = por %p132, %p133
      %p135 = scmp.ne.s32.totalorder %s124, %s125
      %p136 = scmp.eq.s32.totalorder %s27, 0
      %p137 = por %p135, %p136
      %p138 = scmp.ne.s32.totalorder %s124, %s125
      %p139 = scmp.eq.s32.totalorder %s28, 1
      %p140 = por %p138, %p139
      %p142 = scmp.ne.s32.totalorder %s125, %s141
      %p143 = scmp.eq.s32.totalorder %s28, 0
      %p144 = por %p142, %p143
      %s145 = ssub.s32 %s22, %s29
      %p146 = scmp.eq.s32.totalorder %s145, 0
      %s148 = sadd.s32 %s147, 1
      %s149 = scalar_select %p146, %s147, %s148
      %p152 = pneg %p146
      %p153 = scmp.eq.s32.totalorder %s22, 1
      %p154 = por %p152, %p153
      %p155 = scmp.ne.s32.totalorder %s147, %s150
      %p156 = scmp.eq.s32.totalorder %s22, 0
      %p157 = por %p155, %p156
      %p158 = scmp.ne.s32.totalorder %s147, %s150
      %p159 = scmp.eq.s32.totalorder %s27, 1
      %p160 = por %p158, %p159
      %p161 = scmp.ne.s32.totalorder %s150, %s151
      %p162 = scmp.eq.s32.totalorder %s27, 0
      %p163 = por %p161, %p162
      %p164 = scmp.ne.s32.totalorder %s150, %s151
      %p165 = scmp.eq.s32.totalorder %s28, 1
      %p166 = por %p164, %p165
      %p168 = scmp.ne.s32.totalorder %s151, %s167
      %p169 = scmp.eq.s32.totalorder %s28, 0
      %p170 = por %p168, %p169
      %s171 = ssub.s32 %s22, %s29
      %p172 = scmp.eq.s32.totalorder %s171, 0
      %s174 = sadd.s32 %s173, 1
      %s175 = scalar_select %p172, %s173, %s174
      %p178 = pneg %p172
      %p179 = scmp.eq.s32.totalorder %s22, 1
      %p180 = por %p178, %p179
      %p181 = scmp.ne.s32.totalorder %s173, %s176
      %p182 = scmp.eq.s32.totalorder %s22, 0
      %p183 = por %p181, %p182
      %p184 = scmp.ne.s32.totalorder %s173, %s176
      %p185 = scmp.eq.s32.totalorder %s27, 1
      %p186 = por %p184, %p185
      %p187 = scmp.ne.s32.totalorder %s176, %s177
      %p188 = scmp.eq.s32.totalorder %s27, 0
      %p189 = por %p187, %p188
      %p190 = scmp.ne.s32.totalorder %s176, %s177
      %p191 = scmp.eq.s32.totalorder %s28, 1
      %p192 = por %p190, %p191
      %p194 = scmp.ne.s32.totalorder %s177, %s193
      %p195 = scmp.eq.s32.totalorder %s28, 0
      %p196 = por %p194, %p195
      %s197 = ssub.s32 %s22, %s29
      %p198 = scmp.eq.s32.totalorder %s197, 0
      %s200 = sadd.s32 %s199, 1
      %s201 = scalar_select %p198, %s199, %s200
      %p204 = pneg %p198
      %p205 = scmp.eq.s32.totalorder %s22, 1
      %p206 = por %p204, %p205
      %p207 = scmp.ne.s32.totalorder %s199, %s202
      %p208 = scmp.eq.s32.totalorder %s22, 0
      %p209 = por %p207, %p208
      %p210 = scmp.ne.s32.totalorder %s199, %s202
      %p211 = scmp.eq.s32.totalorder %s27, 1
      %p212 = por %p210, %p211
      %p213 = scmp.ne.s32.totalorder %s202, %s203
      %p214 = scmp.eq.s32.totalorder %s27, 0
      %p215 = por %p213, %p214
      %p216 = scmp.ne.s32.totalorder %s202, %s203
      %p217 = scmp.eq.s32.totalorder %s28, 1
      %p218 = por %p216, %p217
      %p220 = scmp.ne.s32.totalorder %s203, %s219
      %p221 = scmp.eq.s32.totalorder %s28, 0
      %p222 = por %p220, %p221
      %s224 = sadd.s32 %s223, 1
      %p227 = scmp.eq.s32.totalorder %s22, 1
      %p228 = scmp.ne.s32.totalorder %s223, %s225
      %p229 = scmp.eq.s32.totalorder %s22, 0
      %p230 = por %p228, %p229
      %p231 = scmp.ne.s32.totalorder %s223, %s225
      %p232 = scmp.eq.s32.totalorder %s27, 1
      %p233 = por %p231, %p232
      %p234 = scmp.ne.s32.totalorder %s225, %s226
      %p235 = scmp.eq.s32.totalorder %s27, 0
      %p236 = por %p234, %p235
      %p237 = scmp.ne.s32.totalorder %s225, %s226
      %p238 = scmp.eq.s32.totalorder %s28, 1
      %p239 = por %p237, %p238
      %p241 = scmp.ne.s32.totalorder %s226, %s240
      %p242 = scmp.eq.s32.totalorder %s28, 0
      %p243 = por %p241, %p242
      %s245 = sadd.s32 %s244, 1
      %p248 = scmp.eq.s32.totalorder %s22, 1
      %p249 = scmp.ne.s32.totalorder %s244, %s246
      %p250 = scmp.eq.s32.totalorder %s22, 0
      %p251 = por %p249, %p250
      %p252 = scmp.ne.s32.totalorder %s244, %s246
      %p253 = scmp.eq.s32.totalorder %s27, 1
      %p254 = por %p252, %p253
      %p255 = scmp.ne.s32.totalorder %s246, %s247
      %p256 = scmp.eq.s32.totalorder %s27, 0
      %p257 = por %p255, %p256
      %p258 = scmp.ne.s32.totalorder %s246, %s247
      %p259 = scmp.eq.s32.totalorder %s28, 1
      %p260 = por %p258, %p259
      %p262 = scmp.ne.s32.totalorder %s247, %s261
      %p263 = scmp.eq.s32.totalorder %s28, 0
      %p264 = por %p262, %p263
      %p265 = scmp.le.s32.totalorder 1, %s22
      %p266 = scmp.lt.s32.totalorder %s22, 3
      %p267 = pnand %p265, %p266
      %p268 = pneg %p267
      // Predicated region
      $region9: #{transformer_forward.2} parent=5 // pred_check
        _
      $region10: #{transformer_forward.2} parent=5 // pred_check_branch
        %270 = sbr.rel (%p267) target = $region12
      $region11: #{transformer_forward.2} parent=5 // pred_region
        %s271 = ssub.s32 %s22, 1
        // Predicated region
        $region13: #{transformer_forward.2} parent=11 // pred_check
          %p272 = pneg %p43
        $region14: #{transformer_forward.2} parent=11 // pred_check_branch
          %274 = sbr.rel (%p272) target = $region16
        $region15: #{transformer_forward.2} parent=11 // pred_region
          _
        $region16: #{transformer_forward.2} parent=11 // pred_fallthru
          _
        // Predicated region
        $region17: #{transformer_forward.2} parent=11 // pred_check
          %p275 = pneg %p64
        $region18: #{transformer_forward.2} parent=11 // pred_check_branch
          %277 = sbr.rel (%p275) target = $region20
        $region19: #{transformer_forward.2} parent=11 // pred_region
          _
        $region20: #{transformer_forward.2} parent=11 // pred_fallthru
          _
        // Predicated region
        $region21: #{transformer_forward.2} parent=11 // pred_check
          %p278 = pneg %p85
        $region22: #{transformer_forward.2} parent=11 // pred_check_branch
          %280 = sbr.rel (%p278) target = $region24
        $region23: #{transformer_forward.2} parent=11 // pred_region
          _
        $region24: #{transformer_forward.2} parent=11 // pred_fallthru
          _
      $region12: #{transformer_forward.2} parent=5 // pred_fallthru
        _
      %p281 = scmp.lt.s32.totalorder %s22, 2
      // Predicated region
      $region25: #{transformer_forward.2} parent=5 // pred_check
        %p282 = pneg %p281
      $region26: #{transformer_forward.2} parent=5 // pred_check_branch
        %284 = sbr.rel (%p282) target = $region28
      $region27: #{transformer_forward.2} parent=5 // pred_region
        // Predicated region
        $region29: #{transformer_forward.2} parent=27 // pred_check
          %p285 = pneg %p105
        $region30: #{transformer_forward.2} parent=27 // pred_check_branch
          %287 = sbr.rel (%p285) target = $region32
        $region31: #{transformer_forward.2} parent=27 // pred_region
          %s288 = sand.u32 %s95, 1
          %s289 = scalar_lea.sflag [#allocation3], %s288
          %s290 = sand.u32 %s95, 1
          %s291 = smul.addr %s290, 256
          %s292 = scalar_lea.vmem [#allocation2], %s291
          %294 = vsyncadd %s289, 0
          %s295 = smul.addr %s22, 64
          %s296 = smul.addr %s295, 4
          %s297 = scalar_lea.hbm %s3, %s296
          %s298 = sshll.u32 %s297, 4
          %s299 = int_to_ptr.hbm [resolvable:$true] %s298
          %s300 = sshll.u32 %s292, 4
          %s301 = int_to_ptr.vmem [resolvable:$true] %s300
          %306 = dma.hbm_to_vmem [thread:$0]  %s299, 4096, %s301, %s289, 256, 256, 16
        $region32: #{transformer_forward.2} parent=27 // pred_fallthru
          _
        // Predicated region
        $region33: #{transformer_forward.2} parent=27 // pred_check
          %p307 = pneg %p131
        $region34: #{transformer_forward.2} parent=27 // pred_check_branch
          %309 = sbr.rel (%p307) target = $region36
        $region35: #{transformer_forward.2} parent=27 // pred_region
          %s310 = sand.u32 %s22, 1
          %s311 = scalar_lea.sflag [#allocation5], %s310
          %s312 = sand.u32 %s121, 1
          %s313 = smul.addr %s312, 128
          %s314 = scalar_lea.vmem [#allocation4], %s313
          %316 = vsyncadd %s311, 0
          %s317 = smul.addr %s22, 32
          %s318 = smul.addr %s317, 4
          %s319 = scalar_lea.hbm %s4, %s318
          %s320 = sshll.u32 %s319, 4
          %s321 = int_to_ptr.hbm [resolvable:$true] %s320
          %s322 = sshll.u32 %s314, 4
          %s323 = int_to_ptr.vmem [resolvable:$true] %s322
          %328 = dma.hbm_to_vmem [thread:$0]  %s321, 2048, %s323, %s311, 128, 128, 8
        $region36: #{transformer_forward.2} parent=27 // pred_fallthru
          _
        // Predicated region
        $region37: #{transformer_forward.2} parent=27 // pred_check
          %p329 = pneg %p157
        $region38: #{transformer_forward.2} parent=27 // pred_check_branch
          %331 = sbr.rel (%p329) target = $region40
        $region39: #{transformer_forward.2} parent=27 // pred_region
          %s332 = sand.u32 %s22, 1
          %s333 = scalar_lea.sflag [#allocation5], %s332
          %s334 = sand.u32 %s147, 1
          %s335 = smul.addr %s334, 128
          %s336 = scalar_lea.vmem [#allocation6], %s335
          %338 = vsyncadd %s333, 0
          %s339 = smul.addr %s22, 32
          %s340 = smul.addr %s339, 4
          %s341 = scalar_lea.hbm %s5, %s340
          %s342 = sshll.u32 %s341, 4
          %s343 = int_to_ptr.hbm [resolvable:$true] %s342
          %s344 = sshll.u32 %s336, 4
          %s345 = int_to_ptr.vmem [resolvable:$true] %s344
          %350 = dma.hbm_to_vmem [thread:$0]  %s343, 2048, %s345, %s333, 64, 64, 4
        $region40: #{transformer_forward.2} parent=27 // pred_fallthru
          _
        // Predicated region
        $region41: #{transformer_forward.2} parent=27 // pred_check
          %p351 = pneg %p183
        $region42: #{transformer_forward.2} parent=27 // pred_check_branch
          %353 = sbr.rel (%p351) target = $region44
        $region43: #{transformer_forward.2} parent=27 // pred_region
          %p354 = scmp.lt.s32.totalorder %s22, 1
          %s355 = scalar_select %p354, %s22, 1
          %s356 = smul.addr %s355, 2
          %s357 = smul.addr %s356, 8
          %s358 = scalar_lea.vmem %s6, %s357
        $region44: #{transformer_forward.2} parent=27 // pred_fallthru
          _
        // Predicated region
        $region45: #{transformer_forward.2} parent=27 // pred_check
          %p359 = pneg %p209
        $region46: #{transformer_forward.2} parent=27 // pred_check_branch
          %361 = sbr.rel (%p359) target = $region48
        $region47: #{transformer_forward.2} parent=27 // pred_region
          %p362 = scmp.lt.s32.totalorder %s22, 1
          %s363 = scalar_select %p362, %s22, 1
          %s364 = smul.addr %s363, 2
          %s365 = scalar_lea.vmem %s7, %s364
        $region48: #{transformer_forward.2} parent=27 // pred_fallthru
          _
      $region28: #{transformer_forward.2} parent=5 // pred_fallthru
        _
      %p366 = scmp.le.s32.totalorder 1, %s22
      %p367 = scmp.lt.s32.totalorder %s22, 3
      %p368 = pnand %p366, %p367
      %p369 = pneg %p368
      // Predicated region
      $region49: #{transformer_forward.2} parent=5 // pred_check
        _
      $region50: #{transformer_forward.2} parent=5 // pred_check_branch
        %371 = sbr.rel (%p368) target = $region52
      $region51: #{transformer_forward.2} parent=5 // pred_region
        %s372 = ssub.s32 %s22, 1
        %s373 = sand.u32 %s98, 1
        %s374 = scalar_lea.sflag [#allocation3], %s373
        %s375 = sand.u32 %s98, 1
        %s376 = smul.addr %s375, 256
        %s377 = scalar_lea.vmem [#allocation2], %s376
        // Predicated region
        $region53: #{transformer_forward.2} parent=51 // pred_check
          %p378 = pneg %p111
        $region54: #{transformer_forward.2} parent=51 // pred_check_branch
          %380 = sbr.rel (%p378) target = $region56
        $region55: #{transformer_forward.2} parent=51 // pred_region
          %382 = dma.done %s374, 4096
        $region56: #{transformer_forward.2} parent=51 // pred_fallthru
          _
        %s383 = sand.u32 %s27, 1
        %s384 = scalar_lea.sflag [#allocation5], %s383
        %s385 = sand.u32 %s124, 1
        %s386 = smul.addr %s385, 128
        %s387 = scalar_lea.vmem [#allocation4], %s386
        // Predicated region
        $region57: #{transformer_forward.2} parent=51 // pred_check
          %p388 = pneg %p137
        $region58: #{transformer_forward.2} parent=51 // pred_check_branch
          %390 = sbr.rel (%p388) target = $region60
        $region59: #{transformer_forward.2} parent=51 // pred_region
          %392 = dma.done %s384, 2048
        $region60: #{transformer_forward.2} parent=51 // pred_fallthru
          _
        %s393 = sand.u32 %s27, 1
        %s394 = scalar_lea.sflag [#allocation5], %s393
        %s395 = sand.u32 %s150, 1
        %s396 = smul.addr %s395, 128
        %s397 = scalar_lea.vmem [#allocation6], %s396
        // Predicated region
        $region61: #{transformer_forward.2} parent=51 // pred_check
          %p398 = pneg %p163
        $region62: #{transformer_forward.2} parent=51 // pred_check_branch
          %400 = sbr.rel (%p398) target = $region64
        $region63: #{transformer_forward.2} parent=51 // pred_region
          %402 = dma.done %s394, 2048
        $region64: #{transformer_forward.2} parent=51 // pred_fallthru
          _
        %p403 = pneg %p43
        %p404 = pneg %p40
        %p405 = pneg %p64
        %p406 = pneg %p61
        %p407 = pneg %p85
        %p408 = pneg %p82
        %s409 = sand.u32 %s98, 1
        %s410 = scalar_lea.sflag [#allocation3], %s409
        %s411 = sand.u32 %s98, 1
        %s412 = smul.addr %s411, 256
        %s413 = scalar_lea.vmem [#allocation2], %s412
        %p414 = pneg %p111
        %p415 = pneg %p108
        %s416 = sand.u32 %s27, 1
        %s417 = scalar_lea.sflag [#allocation5], %s416
        %s418 = sand.u32 %s124, 1
        %s419 = smul.addr %s418, 128
        %s420 = scalar_lea.vmem [#allocation4], %s419
        %p421 = pneg %p137
        %p422 = pneg %p134
        %s423 = sand.u32 %s27, 1
        %s424 = scalar_lea.sflag [#allocation5], %s423
        %s425 = sand.u32 %s150, 1
        %s426 = smul.addr %s425, 128
        %s427 = scalar_lea.vmem [#allocation6], %s426
        %p428 = pneg %p163
        %p429 = pneg %p160
        %p430 = scmp.lt.s32.totalorder %s27, 1
        %s431 = scalar_select %p430, %s27, 1
        %s432 = smul.addr %s431, 2
        %s433 = smul.addr %s432, 8
        %s434 = scalar_lea.vmem %s6, %s433
        %p435 = pneg %p189
        %p436 = pneg %p186
        %p437 = scmp.lt.s32.totalorder %s27, 1
        %s438 = scalar_select %p437, %s27, 1
        %s439 = smul.addr %s438, 2
        %s440 = scalar_lea.vmem %s7, %s439
        %p441 = pneg %p215
        %p442 = pneg %p212
        %p443 = pneg %p236
        %p444 = pneg %p233
        %p445 = pneg %p257
        %p446 = pneg %p254
        %p447 = scmp.lt.s32.totalorder %s27, 1
        %s448 = scalar_select %p447, %s27, 1
        %s449 = smul.addr %s448, 2
        %s450 = smul.addr %s449, 8
        %s451 = scalar_lea.vmem %s6, %s450
        %p452 = scmp.lt.s32.totalorder %s27, 1
        %s453 = scalar_select %p452, %s27, 1
        %s454 = smul.addr %s453, 2
        %s455 = scalar_lea.vmem %s7, %s454
        %p457 = scmp.eq.s32.totalorder %s27, 0
        // Predicated region
        $region65: #{transformer_forward.2} parent=51 // pred_check
          %p458 = pneg %p457
        $region66: #{transformer_forward.2} parent=51 // pred_check_branch
          %460 = sbr.rel (%p458) target = $region68
        $region67: #{transformer_forward.2} parent=51 // pred_region
          %v461 = vld [vmem:[%s0] sm:$0xff]
          %v462 = vld [vmem:[%s0 + $0x8] sm:$0xff]
          %463 = vst [vmem:[%s8] sm:$0xff] %v461
          %464 = vst [vmem:[%s8 + $0x8] sm:$0xff] %v462
        $region68: #{transformer_forward.2} parent=51 // pred_fallthru
          _
        %v465 = vld [vmem:[%s8] sm:$0xff]
        %v466 = vld [vmem:[%s8 + $0x8] sm:$0xff]
        %v467 = vld [vmem:[%s1] sm:$0xf]
        %v468 = vld [vmem:[%s2] sm:$0xf]
        %s469 = scalar_lea.vmem %s2, 4
        %v470 = vld [vmem:[%s469] sm:$0xf]
        %v471 = vld [vmem:[%s377] sm:$0xff]
        %v472 = vld [vmem:[%s377 + $0x8] sm:$0xff]
        %v473 = vld [vmem:[%s377 + $0x10] sm:$0xff]
        %v474 = vld [vmem:[%s377 + $0x18] sm:$0xff]
        %v475 = vld [vmem:[%s377 + $0x20] sm:$0xff]
        %v476 = vld [vmem:[%s377 + $0x28] sm:$0xff]
        %v477 = vld [vmem:[%s377 + $0x30] sm:$0xff]
        %v478 = vld [vmem:[%s377 + $0x38] sm:$0xff]
        %v479 = vld [vmem:[%s377 + $0x40] sm:$0xff]
        %v480 = vld [vmem:[%s377 + $0x48] sm:$0xff]
        %v481 = vld [vmem:[%s377 + $0x50] sm:$0xff]
        %v482 = vld [vmem:[%s377 + $0x58] sm:$0xff]
        %v483 = vld [vmem:[%s377 + $0x60] sm:$0xff]
        %v484 = vld [vmem:[%s377 + $0x68] sm:$0xff]
        %v485 = vld [vmem:[%s377 + $0x70] sm:$0xff]
        %v486 = vld [vmem:[%s377 + $0x78] sm:$0xff]
        %v487 = vld [vmem:[%s377 + $0x80] sm:$0xff]
        %v488 = vld [vmem:[%s377 + $0x88] sm:$0xff]
        %v489 = vld [vmem:[%s377 + $0x90] sm:$0xff]
        %v490 = vld [vmem:[%s377 + $0x98] sm:$0xff]
        %v491 = vld [vmem:[%s377 + $0xa0] sm:$0xff]
        %v492 = vld [vmem:[%s377 + $0xa8] sm:$0xff]
        %v493 = vld [vmem:[%s377 + $0xb0] sm:$0xff]
        %v494 = vld [vmem:[%s377 + $0xb8] sm:$0xff]
        %v495 = vld [vmem:[%s377 + $0xc0] sm:$0xff]
        %v496 = vld [vmem:[%s377 + $0xc8] sm:$0xff]
        %v497 = vld [vmem:[%s377 + $0xd0] sm:$0xff]
        %v498 = vld [vmem:[%s377 + $0xd8] sm:$0xff]
        %v499 = vld [vmem:[%s377 + $0xe0] sm:$0xff]
        %v500 = vld [vmem:[%s377 + $0xe8] sm:$0xff]
        %v501 = vld [vmem:[%s377 + $0xf0] sm:$0xff]
        %v502 = vld [vmem:[%s377 + $0xf8] sm:$0xff]
        %v503 = vld [vmem:[%s387] sm:$0xff]
        %v504 = vld [vmem:[%s387 + $0x8] sm:$0xff]
        %v505 = vld [vmem:[%s387 + $0x10] sm:$0xff]
        %v506 = vld [vmem:[%s387 + $0x18] sm:$0xff]
        %v507 = vld [vmem:[%s387 + $0x20] sm:$0xff]
        %v508 = vld [vmem:[%s387 + $0x28] sm:$0xff]
        %v509 = vld [vmem:[%s387 + $0x30] sm:$0xff]
        %v510 = vld [vmem:[%s387 + $0x38] sm:$0xff]
        %v511 = vld [vmem:[%s387 + $0x40] sm:$0xff]
        %v512 = vld [vmem:[%s387 + $0x48] sm:$0xff]
        %v513 = vld [vmem:[%s387 + $0x50] sm:$0xff]
        %v514 = vld [vmem:[%s387 + $0x58] sm:$0xff]
        %v515 = vld [vmem:[%s387 + $0x60] sm:$0xff]
        %v516 = vld [vmem:[%s387 + $0x68] sm:$0xff]
        %v517 = vld [vmem:[%s387 + $0x70] sm:$0xff]
        %v518 = vld [vmem:[%s387 + $0x78] sm:$0xff]
        %v519 = vld [vmem:[%s397] sm:$0xf]
        %v520 = vld [vmem:[%s397 + $0x4] sm:$0xf]
        %v521 = vld [vmem:[%s397 + $0x8] sm:$0xf]
        %v522 = vld [vmem:[%s397 + $0xc] sm:$0xf]
        %v523 = vld [vmem:[%s397 + $0x10] sm:$0xf]
        %v524 = vld [vmem:[%s397 + $0x14] sm:$0xf]
        %v525 = vld [vmem:[%s397 + $0x18] sm:$0xf]
        %v526 = vld [vmem:[%s397 + $0x1c] sm:$0xf]
        %v527 = vld [vmem:[%s397 + $0x20] sm:$0xf]
        %v528 = vld [vmem:[%s397 + $0x24] sm:$0xf]
        %v529 = vld [vmem:[%s397 + $0x28] sm:$0xf]
        %v530 = vld [vmem:[%s397 + $0x2c] sm:$0xf]
        %v531 = vld [vmem:[%s397 + $0x30] sm:$0xf]
        %v532 = vld [vmem:[%s397 + $0x34] sm:$0xf]
        %v533 = vld [vmem:[%s397 + $0x38] sm:$0xf]
        %v534 = vld [vmem:[%s397 + $0x3c] sm:$0xf]
        %v535 = vld [vmem:[%s397 + $0x40] sm:$0xf]
        %v536 = vld [vmem:[%s397 + $0x44] sm:$0xf]
        %v537 = vld [vmem:[%s397 + $0x48] sm:$0xf]
        %v538 = vld [vmem:[%s397 + $0x4c] sm:$0xf]
        %v539 = vld [vmem:[%s397 + $0x50] sm:$0xf]
        %v540 = vld [vmem:[%s397 + $0x54] sm:$0xf]
        %v541 = vld [vmem:[%s397 + $0x58] sm:$0xf]
        %v542 = vld [vmem:[%s397 + $0x5c] sm:$0xf]
        %v543 = vld [vmem:[%s397 + $0x60] sm:$0xf]
        %v544 = vld [vmem:[%s397 + $0x64] sm:$0xf]
        %v545 = vld [vmem:[%s397 + $0x68] sm:$0xf]
        %v546 = vld [vmem:[%s397 + $0x6c] sm:$0xf]
        %v547 = vld [vmem:[%s397 + $0x70] sm:$0xf]
        %v548 = vld [vmem:[%s397 + $0x74] sm:$0xf]
        %v549 = vld [vmem:[%s397 + $0x78] sm:$0xf]
        %v550 = vld [vmem:[%s397 + $0x7c] sm:$0xf]
        %v551 = vld [vmem:[%s455] sm:$0x3]
        %v552 = vld [vmem:[%s451] sm:$0xff]
        %v553 = vld [vmem:[%s451 + $0x8] sm:$0x1]
        %vm554 = vcmask 1043456
        %v555 = vsel %vm554, %v465, 0.0
        %556 = vadd.xlane.f32.xlu0 %v555
        %v557 = vpop.xlane.xlu0 %556
        %v558 = vrcp.pop 128.0
        %v559 = vmul.f32 128.0, %v558
        %v560 = vsub.f32 1.0, %v559
        %v561 = vmul.f32 %v558, %v560
        %v562 = vadd.f32 %v558, %v561
        %vm563 = vweird.f32 %v558
        %v564 = vsel %vm563, %v558, %v562
        %v565 = vmul.f32 %v557, %v564
        %v566 = vsub.f32 %v465, %v565
        %v567 = vmul.f32 %v566, %v566
        %v568 = vsel %vm554, %v567, 0.0
        %569 = vadd.xlane.f32.xlu0 %v568
        %v570 = vpop.xlane.xlu0 %569
        %v571 = vrcp.pop 127.0
        %v572 = vmul.f32 127.0, %v571
        %v573 = vsub.f32 1.0, %v572
        %v574 = vmul.f32 %v571, %v573
        %v575 = vadd.f32 %v571, %v574
        %vm576 = vweird.f32 %v571
        %v577 = vsel %vm576, %v571, %v575
        %v578 = vmul.f32 %v570, %v577
        %v579 = vrsqrt.pop %v578
        %v580 = vmul.f32 %v579, %v578
        %v581 = vmul.f32 %v580, %v579
        %v582 = vmul.f32 0.5, %v581
        %v583 = vsub.f32 1.5, %v582
        %v584 = vmul.f32 %v579, %v583
        %v585 = vmul.f32 %v578, %v584
        %vm586 = vcmp.eq.f32.partialorder %v578, inf
        %v587 = vsel %vm586, %v578, %v585
        %vm588 = vcmp.eq.f32.partialorder %v578, 0.0
        %v589 = vand.u32 %v578, 2147483648
        %v590 = vsel %vm588, %v589, %v587
        %v591 = vadd.f32 %v590, 1e-06
        %v592 = vrcp.pop %v591
        %v593 = vmul.f32 %v566, %v592
        %v594 = vperm.slane %v552, 0
        %v595 = vmul.f32 %v594, %v593
        %v596 = vperm.slane %v552, 1
        %v597 = vadd.f32 %v595, %v596
        %v598 = vadd.f32 %v597, %v467
        %v599 = vpack.c.bf16 %v598, %v598
        %v616 = vunpack.c.l.b16 %v471
        %v617 = vunpack.c.h.b16 %v471
        %v618 = vunpack.c.l.b16 %v473
        %v619 = vunpack.c.h.b16 %v473
        %v620 = vunpack.c.l.b16 %v475
        %v621 = vunpack.c.h.b16 %v475
        %v622 = vunpack.c.l.b16 %v477
        %v623 = vunpack.c.h.b16 %v477
        %v624 = vunpack.c.l.b16 %v479
        %v625 = vunpack.c.h.b16 %v479
        %v626 = vunpack.c.l.b16 %v481
        %v627 = vunpack.c.h.b16 %v481
        %v628 = vunpack.c.l.b16 %v483
        %v629 = vunpack.c.h.b16 %v483
        %v630 = vunpack.c.l.b16 %v485
        %v631 = vunpack.c.h.b16 %v485
        %v632 = vunpack.c.l.b16 %v487
        %v633 = vunpack.c.h.b16 %v487
        %v634 = vunpack.c.l.b16 %v489
        %v635 = vunpack.c.h.b16 %v489
        %v636 = vunpack.c.l.b16 %v491
        %v637 = vunpack.c.h.b16 %v491
        %v638 = vunpack.c.l.b16 %v493
        %v639 = vunpack.c.h.b16 %v493
        %v640 = vunpack.c.l.b16 %v495
        %v641 = vunpack.c.h.b16 %v495
        %v642 = vunpack.c.l.b16 %v497
        %v643 = vunpack.c.h.b16 %v497
        %v644 = vunpack.c.l.b16 %v499
        %v645 = vunpack.c.h.b16 %v499
        %v646 = vunpack.c.l.b16 %v501
        %v647 = vunpack.c.h.b16 %v501
        %v648 = vpack.c.b16 %v618, %v616
        %v649 = vpack.c.b16 %v619, %v617
        %v650 = vpack.c.b16 %v622, %v620
        %v651 = vpack.c.b16 %v623, %v621
        %v652 = vpack.c.b16 %v626, %v624
        %v653 = vpack.c.b16 %v627, %v625
        %v654 = vpack.c.b16 %v630, %v628
        %v655 = vpack.c.b16 %v631, %v629
        %v656 = vpack.c.b16 %v634, %v632
        %v657 = vpack.c.b16 %v635, %v633
        %v658 = vpack.c.b16 %v638, %v636
        %v659 = vpack.c.b16 %v639, %v637
        %v660 = vpack.c.b16 %v642, %v640
        %v661 = vpack.c.b16 %v643, %v641
        %v662 = vpack.c.b16 %v646, %v644
        %v663 = vpack.c.b16 %v647, %v645
        %680 = vmatpush.bf16.msra.mxu0 %v662
        %681 = vmatpush.bf16.msra.mxu0 %v660
        %682 = vmatpush.bf16.msra.mxu0 %v658
        %683 = vmatpush.bf16.msra.mxu0 %v656
        %684 = vmatpush.bf16.msra.mxu0 %v654
        %685 = vmatpush.bf16.msra.mxu0 %v652
        %686 = vmatpush.bf16.msra.mxu0 %v650
        %687 = vmatpush.bf16.msra.mxu0 %v648
        %688 = vmatmul.bf16.gmra.mxu0 %v599
        %v689 = vpop.f32.mrf.mxu0
        %v690 = vadd.f32 0.0, %v689
        %v691 = vpop.f32.mrf.mxu0
        %692 = vdwg.mxu0
        %693 = vmatpush.bf16.msra.mxu0 %v663
        %694 = vmatpush.bf16.msra.mxu0 %v661
        %695 = vmatpush.bf16.msra.mxu0 %v659
        %696 = vmatpush.bf16.msra.mxu0 %v657
        %697 = vmatpush.bf16.msra.mxu0 %v655
        %698 = vmatpush.bf16.msra.mxu0 %v653
        %699 = vmatpush.bf16.msra.mxu0 %v651
        %700 = vmatpush.bf16.msra.mxu0 %v649
        %701 = vmatmul.bf16.gmra.mxu0 %v599
        %v702 = vpop.f32.mrf.mxu0
        %v703 = vadd.f32 0.0, %v702
        %v704 = vpop.f32.mrf.mxu0
        %705 = vdwg.mxu0
        %v706 = vperm.slane %v552, 4
        %v707 = vadd.f32 %v690, %v706
        %v708 = vperm.slane %v552, 5
        %v709 = vadd.f32 %v703, %v708
        %v710 = vpack.c.bf16 %v465, %v465
        %v711 = vperm.slane %v552, 6
        %v728 = vunpack.c.l.b16 %v472
        %v729 = vunpack.c.l.b16 %v474
        %v730 = vunpack.c.l.b16 %v476
        %v731 = vunpack.c.l.b16 %v478
        %v732 = vunpack.c.l.b16 %v480
        %v733 = vunpack.c.l.b16 %v482
        %v734 = vunpack.c.l.b16 %v484
        %v735 = vunpack.c.l.b16 %v486
        %v736 = vunpack.c.l.b16 %v488
        %v737 = vunpack.c.l.b16 %v490
        %v738 = vunpack.c.l.b16 %v492
        %v739 = vunpack.c.l.b16 %v494
        %v740 = vunpack.c.l.b16 %v496
        %v741 = vunpack.c.l.b16 %v498
        %v742 = vunpack.c.l.b16 %v500
        %v743 = vunpack.c.l.b16 %v502
        %v744 = vpack.c.b16 %v729, %v728
        %v745 = vpack.c.b16 %v731, %v730
        %v746 = vpack.c.b16 %v733, %v732
        %v747 = vpack.c.b16 %v735, %v734
        %v748 = vpack.c.b16 %v737, %v736
        %v749 = vpack.c.b16 %v739, %v738
        %v750 = vpack.c.b16 %v741, %v740
        %v751 = vpack.c.b16 %v743, %v742
        %760 = vmatpush.bf16.msra.mxu0 %v751
        %761 = vmatpush.bf16.msra.mxu0 %v750
        %762 = vmatpush.bf16.msra.mxu0 %v749
        %763 = vmatpush.bf16.msra.mxu0 %v748
        %764 = vmatpush.bf16.msra.mxu0 %v747
        %765 = vmatpush.bf16.msra.mxu0 %v746
        %766 = vmatpush.bf16.msra.mxu0 %v745
        %767 = vmatpush.bf16.msra.mxu0 %v744
        %768 = vmatmul.bf16.gmra.mxu0 %v710
        %v769 = vpop.f32.mrf.mxu0
        %v770 = vadd.f32 %v711, %v769
        %v771 = vpop.f32.mrf.mxu0
        %772 = vdwg.mxu0
        %774 = vrot.lane.b32.xlu0 %v707, 112
        %v775 = vpop.permute.xlu0 %774
        %777 = vrot.lane.b32.xlu0 %v707, 96
        %v778 = vpop.permute.xlu0 %777
        %780 = vrot.lane.b32.xlu0 %v707, 80
        %v781 = vpop.permute.xlu0 %780
        %783 = vrot.lane.b32.xlu0 %v707, 64
        %v784 = vpop.permute.xlu0 %783
        %786 = vrot.lane.b32.xlu0 %v707, 48
        %v787 = vpop.permute.xlu0 %786
        %789 = vrot.lane.b32.xlu0 %v707, 32
        %v790 = vpop.permute.xlu0 %789
        %792 = vrot.lane.b32.xlu0 %v707, 16
        %v793 = vpop.permute.xlu0 %792
        %796 = vrot.lane.b32.xlu0 %v709, 112
        %v797 = vpop.permute.xlu0 %796
        %799 = vrot.lane.b32.xlu0 %v709, 96
        %v800 = vpop.permute.xlu0 %799
        %802 = vrot.lane.b32.xlu0 %v709, 80
        %v803 = vpop.permute.xlu0 %802
        %805 = vrot.lane.b32.xlu0 %v709, 64
        %v806 = vpop.permute.xlu0 %805
        %808 = vrot.lane.b32.xlu0 %v709, 48
        %v809 = vpop.permute.xlu0 %808
        %811 = vrot.lane.b32.xlu0 %v709, 32
        %v812 = vpop.permute.xlu0 %811
        %814 = vrot.lane.b32.xlu0 %v709, 16
        %v815 = vpop.permute.xlu0 %814
        %818 = vrot.lane.b32.xlu0 %v770, 112
        %v819 = vpop.permute.xlu0 %818
        %821 = vrot.lane.b32.xlu0 %v770, 96
        %v822 = vpop.permute.xlu0 %821
        %824 = vrot.lane.b32.xlu0 %v770, 80
        %v825 = vpop.permute.xlu0 %824
        %827 = vrot.lane.b32.xlu0 %v770, 64
        %v828 = vpop.permute.xlu0 %827
        %830 = vrot.lane.b32.xlu0 %v770, 48
        %v831 = vpop.permute.xlu0 %830
        %833 = vrot.lane.b32.xlu0 %v770, 32
        %v834 = vpop.permute.xlu0 %833
        %836 = vrot.lane.b32.xlu0 %v770, 16
        %v837 = vpop.permute.xlu0 %836
        %v839 = vpack.c.bf16 %v707, %v707
        %v840 = vpack.c.bf16 %v775, %v775
        %v841 = vpack.c.bf16 %v778, %v778
        %v842 = vpack.c.bf16 %v781, %v781
        %v843 = vpack.c.bf16 %v784, %v784
        %v844 = vpack.c.bf16 %v787, %v787
        %v845 = vpack.c.bf16 %v790, %v790
        %v846 = vpack.c.bf16 %v793, %v793
        %v847 = vpack.c.bf16 %v709, %v709
        %v848 = vpack.c.bf16 %v797, %v797
        %v849 = vpack.c.bf16 %v800, %v800
        %v850 = vpack.c.bf16 %v803, %v803
        %v851 = vpack.c.bf16 %v806, %v806
        %v852 = vpack.c.bf16 %v809, %v809
        %v853 = vpack.c.bf16 %v812, %v812
        %v854 = vpack.c.bf16 %v815, %v815
        %vm855 = vcmask 130048
        %v857 = vsel %vm855, %v839, 0
        %v860 = vsel %vm855, %v847, 0
        %862 = vmatpush.bf16.xpose.msra.mxu0 0
        %863 = vmatpush.bf16.xpose.msra.mxu0 0
        %864 = vmatpush.bf16.xpose.msra.mxu0 0
        %865 = vmatpush.bf16.xpose.msra.mxu0 0
        %866 = vmatpush.bf16.xpose.msra.mxu0 0
        %867 = vmatpush.bf16.xpose.msra.mxu0 0
        %868 = vmatpush.bf16.xpose.msra.mxu0 0
        %869 = vmatpush.bf16.xpose.msra.mxu0 %v860
        %870 = vmatmul.bf16.gmra.mxu0 %v857
        %v871 = vpop.f32.mrf.mxu0
        %v872 = vadd.f32 0.0, %v871
        %v873 = vpop.f32.mrf.mxu0
        %874 = vdwg.mxu0
        %v876 = vsel %vm855, %v840, 0
        %v879 = vsel %vm855, %v848, 0
        %881 = vmatpush.bf16.xpose.msra.mxu0 0
        %882 = vmatpush.bf16.xpose.msra.mxu0 0
        %883 = vmatpush.bf16.xpose.msra.mxu0 0
        %884 = vmatpush.bf16.xpose.msra.mxu0 0
        %885 = vmatpush.bf16.xpose.msra.mxu0 0
        %886 = vmatpush.bf16.xpose.msra.mxu0 0
        %887 = vmatpush.bf16.xpose.msra.mxu0 0
        %888 = vmatpush.bf16.xpose.msra.mxu0 %v879
        %889 = vmatmul.bf16.gmra.mxu0 %v876
        %v890 = vpop.f32.mrf.mxu0
        %v891 = vadd.f32 0.0, %v890
        %v892 = vpop.f32.mrf.mxu0
        %893 = vdwg.mxu0
        %v895 = vsel %vm855, %v841, 0
        %v898 = vsel %vm855, %v849, 0
        %900 = vmatpush.bf16.xpose.msra.mxu0 0
        %901 = vmatpush.bf16.xpose.msra.mxu0 0
        %902 = vmatpush.bf16.xpose.msra.mxu0 0
        %903 = vmatpush.bf16.xpose.msra.mxu0 0
        %904 = vmatpush.bf16.xpose.msra.mxu0 0
        %905 = vmatpush.bf16.xpose.msra.mxu0 0
        %906 = vmatpush.bf16.xpose.msra.mxu0 0
        %907 = vmatpush.bf16.xpose.msra.mxu0 %v898
        %908 = vmatmul.bf16.gmra.mxu0 %v895
        %v909 = vpop.f32.mrf.mxu0
        %v910 = vadd.f32 0.0, %v909
        %v911 = vpop.f32.mrf.mxu0
        %912 = vdwg.mxu0
        %v914 = vsel %vm855, %v842, 0
        %v917 = vsel %vm855, %v850, 0
        %919 = vmatpush.bf16.xpose.msra.mxu0 0
        %920 = vmatpush.bf16.xpose.msra.mxu0 0
        %921 = vmatpush.bf16.xpose.msra.mxu0 0
        %922 = vmatpush.bf16.xpose.msra.mxu0 0
        %923 = vmatpush.bf16.xpose.msra.mxu0 0
        %924 = vmatpush.bf16.xpose.msra.mxu0 0
        %925 = vmatpush.bf16.xpose.msra.mxu0 0
        %926 = vmatpush.bf16.xpose.msra.mxu0 %v917
        %927 = vmatmul.bf16.gmra.mxu0 %v914
        %v928 = vpop.f32.mrf.mxu0
        %v929 = vadd.f32 0.0, %v928
        %v930 = vpop.f32.mrf.mxu0
        %931 = vdwg.mxu0
        %v933 = vsel %vm855, %v843, 0
        %v936 = vsel %vm855, %v851, 0
        %938 = vmatpush.bf16.xpose.msra.mxu0 0
        %939 = vmatpush.bf16.xpose.msra.mxu0 0
        %940 = vmatpush.bf16.xpose.msra.mxu0 0
        %941 = vmatpush.bf16.xpose.msra.mxu0 0
        %942 = vmatpush.bf16.xpose.msra.mxu0 0
        %943 = vmatpush.bf16.xpose.msra.mxu0 0
        %944 = vmatpush.bf16.xpose.msra.mxu0 0
        %945 = vmatpush.bf16.xpose.msra.mxu0 %v936
        %946 = vmatmul.bf16.gmra.mxu0 %v933
        %v947 = vpop.f32.mrf.mxu0
        %v948 = vadd.f32 0.0, %v947
        %v949 = vpop.f32.mrf.mxu0
        %950 = vdwg.mxu0
        %v952 = vsel %vm855, %v844, 0
        %v955 = vsel %vm855, %v852, 0
        %957 = vmatpush.bf16.xpose.msra.mxu0 0
        %958 = vmatpush.bf16.xpose.msra.mxu0 0
        %959 = vmatpush.bf16.xpose.msra.mxu0 0
        %960 = vmatpush.bf16.xpose.msra.mxu0 0
        %961 = vmatpush.bf16.xpose.msra.mxu0 0
        %962 = vmatpush.bf16.xpose.msra.mxu0 0
        %963 = vmatpush.bf16.xpose.msra.mxu0 0
        %964 = vmatpush.bf16.xpose.msra.mxu0 %v955
        %965 = vmatmul.bf16.gmra.mxu0 %v952
        %v966 = vpop.f32.mrf.mxu0
        %v967 = vadd.f32 0.0, %v966
        %v968 = vpop.f32.mrf.mxu0
        %969 = vdwg.mxu0
        %v971 = vsel %vm855, %v845, 0
        %v974 = vsel %vm855, %v853, 0
        %976 = vmatpush.bf16.xpose.msra.mxu0 0
        %977 = vmatpush.bf16.xpose.msra.mxu0 0
        %978 = vmatpush.bf16.xpose.msra.mxu0 0
        %979 = vmatpush.bf16.xpose.msra.mxu0 0
        %980 = vmatpush.bf16.xpose.msra.mxu0 0
        %981 = vmatpush.bf16.xpose.msra.mxu0 0
        %982 = vmatpush.bf16.xpose.msra.mxu0 0
        %983 = vmatpush.bf16.xpose.msra.mxu0 %v974
        %984 = vmatmul.bf16.gmra.mxu0 %v971
        %v985 = vpop.f32.mrf.mxu0
        %v986 = vadd.f32 0.0, %v985
        %v987 = vpop.f32.mrf.mxu0
        %988 = vdwg.mxu0
        %v990 = vsel %vm855, %v846, 0
        %v993 = vsel %vm855, %v854, 0
        %995 = vmatpush.bf16.xpose.msra.mxu0 0
        %996 = vmatpush.bf16.xpose.msra.mxu0 0
        %997 = vmatpush.bf16.xpose.msra.mxu0 0
        %998 = vmatpush.bf16.xpose.msra.mxu0 0
        %999 = vmatpush.bf16.xpose.msra.mxu0 0
        %1000 = vmatpush.bf16.xpose.msra.mxu0 0
        %1001 = vmatpush.bf16.xpose.msra.mxu0 0
        %1002 = vmatpush.bf16.xpose.msra.mxu0 %v993
        %1003 = vmatmul.bf16.gmra.mxu0 %v990
        %v1004 = vpop.f32.mrf.mxu0
        %v1005 = vadd.f32 0.0, %v1004
        %v1006 = vpop.f32.mrf.mxu0
        %1007 = vdwg.mxu0
        %v1008 = vmul.f32 %v872, 0.25
        %v1009 = vmul.f32 %v891, 0.25
        %v1010 = vmul.f32 %v910, 0.25
        %v1011 = vmul.f32 %v929, 0.25
        %v1012 = vmul.f32 %v948, 0.25
        %v1013 = vmul.f32 %v967, 0.25
        %v1014 = vmul.f32 %v986, 0.25
        %v1015 = vmul.f32 %v1005, 0.25
        %v1016 = vmul.f32 %v1008, %v468
        %v1017 = vmul.f32 %v1009, %v468
        %v1018 = vmul.f32 %v1010, %v468
        %v1019 = vmul.f32 %v1011, %v468
        %v1020 = vmul.f32 %v1012, %v468
        %v1021 = vmul.f32 %v1013, %v468
        %v1022 = vmul.f32 %v1014, %v468
        %v1023 = vmul.f32 %v1015, %v468
        %v1024 = vadd.f32 %v1016, %v470
        %v1025 = vadd.f32 %v1017, %v470
        %v1026 = vadd.f32 %v1018, %v470
        %v1027 = vadd.f32 %v1019, %v470
        %v1028 = vadd.f32 %v1020, %v470
        %v1029 = vadd.f32 %v1021, %v470
        %v1030 = vadd.f32 %v1022, %v470
        %v1031 = vadd.f32 %v1023, %v470
        %vm1032 = vcmask 27648
        %v1033 = vsel %vm1032, %v1024, -inf
        %1034 = vmax.xlane.f32.xlu0 %v1033
        %v1035 = vpop.xlane.xlu0 %1034
        %v1036 = vsel %vm1032, %v1025, -inf
        %1037 = vmax.xlane.f32.xlu0 %v1036
        %v1038 = vpop.xlane.xlu0 %1037
        %v1039 = vsel %vm1032, %v1026, -inf
        %1040 = vmax.xlane.f32.xlu0 %v1039
        %v1041 = vpop.xlane.xlu0 %1040
        %v1042 = vsel %vm1032, %v1027, -inf
        %1043 = vmax.xlane.f32.xlu0 %v1042
        %v1044 = vpop.xlane.xlu0 %1043
        %v1045 = vsel %vm1032, %v1028, -inf
        %1046 = vmax.xlane.f32.xlu0 %v1045
        %v1047 = vpop.xlane.xlu0 %1046
        %v1048 = vsel %vm1032, %v1029, -inf
        %1049 = vmax.xlane.f32.xlu0 %v1048
        %v1050 = vpop.xlane.xlu0 %1049
        %v1051 = vsel %vm1032, %v1030, -inf
        %1052 = vmax.xlane.f32.xlu0 %v1051
        %v1053 = vpop.xlane.xlu0 %1052
        %v1054 = vsel %vm1032, %v1031, -inf
        %1055 = vmax.xlane.f32.xlu0 %v1054
        %v1056 = vpop.xlane.xlu0 %1055
        %v1057 = vsub.f32 %v1024, %v1035
        %v1058 = vsub.f32 %v1025, %v1038
        %v1059 = vsub.f32 %v1026, %v1041
        %v1060 = vsub.f32 %v1027, %v1044
        %v1061 = vsub.f32 %v1028, %v1047
        %v1062 = vsub.f32 %v1029, %v1050
        %v1063 = vsub.f32 %v1030, %v1053
        %v1064 = vsub.f32 %v1031, %v1056
        %v1065 = vmul.f32 %v1057, 1.442695
        %v1066 = vpow.pop %v1065
        %v1067 = vmul.f32 %v1058, 1.442695
        %v1068 = vpow.pop %v1067
        %v1069 = vmul.f32 %v1059, 1.442695
        %v1070 = vpow.pop %v1069
        %v1071 = vmul.f32 %v1060, 1.442695
        %v1072 = vpow.pop %v1071
        %v1073 = vmul.f32 %v1061, 1.442695
        %v1074 = vpow.pop %v1073
        %v1075 = vmul.f32 %v1062, 1.442695
        %v1076 = vpow.pop %v1075
        %v1077 = vmul.f32 %v1063, 1.442695
        %v1078 = vpow.pop %v1077
        %v1079 = vmul.f32 %v1064, 1.442695
        %v1080 = vpow.pop %v1079
        %v1081 = vsel %vm1032, %v1066, 0.0
        %1082 = vadd.xlane.f32.xlu0 %v1081
        %v1083 = vpop.xlane.xlu0 %1082
        %v1084 = vsel %vm1032, %v1068, 0.0
        %1085 = vadd.xlane.f32.xlu0 %v1084
        %v1086 = vpop.xlane.xlu0 %1085
        %v1087 = vsel %vm1032, %v1070, 0.0
        %1088 = vadd.xlane.f32.xlu0 %v1087
        %v1089 = vpop.xlane.xlu0 %1088
        %v1090 = vsel %vm1032, %v1072, 0.0
        %1091 = vadd.xlane.f32.xlu0 %v1090
        %v1092 = vpop.xlane.xlu0 %1091
        %v1093 = vsel %vm1032, %v1074, 0.0
        %1094 = vadd.xlane.f32.xlu0 %v1093
        %v1095 = vpop.xlane.xlu0 %1094
        %v1096 = vsel %vm1032, %v1076, 0.0
        %1097 = vadd.xlane.f32.xlu0 %v1096
        %v1098 = vpop.xlane.xlu0 %1097
        %v1099 = vsel %vm1032, %v1078, 0.0
        %1100 = vadd.xlane.f32.xlu0 %v1099
        %v1101 = vpop.xlane.xlu0 %1100
        %v1102 = vsel %vm1032, %v1080, 0.0
        %1103 = vadd.xlane.f32.xlu0 %v1102
        %v1104 = vpop.xlane.xlu0 %1103
        %v1105 = vrcp.pop %v1083
        %v1106 = vrcp.pop %v1086
        %v1107 = vrcp.pop %v1089
        %v1108 = vrcp.pop %v1092
        %v1109 = vrcp.pop %v1095
        %v1110 = vrcp.pop %v1098
        %v1111 = vrcp.pop %v1101
        %v1112 = vrcp.pop %v1104
        %v1113 = vmul.f32 %v1066, %v1105
        %v1114 = vmul.f32 %v1068, %v1106
        %v1115 = vmul.f32 %v1070, %v1107
        %v1116 = vmul.f32 %v1072, %v1108
        %v1117 = vmul.f32 %v1074, %v1109
        %v1118 = vmul.f32 %v1076, %v1110
        %v1119 = vmul.f32 %v1078, %v1111
        %v1120 = vmul.f32 %v1080, %v1112
        %v1121 = vpack.c.bf16 %v1113, %v1113
        %v1122 = vpack.c.bf16 %v1114, %v1114
        %v1123 = vpack.c.bf16 %v1115, %v1115
        %v1124 = vpack.c.bf16 %v1116, %v1116
        %v1125 = vpack.c.bf16 %v1117, %v1117
        %v1126 = vpack.c.bf16 %v1118, %v1118
        %v1127 = vpack.c.bf16 %v1119, %v1119
        %v1128 = vpack.c.bf16 %v1120, %v1120
        %v1129 = vpack.c.bf16 %v770, %v770
        %v1130 = vpack.c.bf16 %v819, %v819
        %v1131 = vpack.c.bf16 %v822, %v822
        %v1132 = vpack.c.bf16 %v825, %v825
        %v1133 = vpack.c.bf16 %v828, %v828
        %v1134 = vpack.c.bf16 %v831, %v831
        %v1135 = vpack.c.bf16 %v834, %v834
        %v1136 = vpack.c.bf16 %v837, %v837
        %vm1137 = vcmask 31744
        %v1139 = vsel %vm1137, %v1121, 0
        %vm1141 = vcmask 1041408
        %v1143 = vsel %vm1141, %v1129, 0
        %1145 = vmatpush.bf16.msra.mxu0 0
        %1146 = vmatpush.bf16.msra.mxu0 0
        %1147 = vmatpush.bf16.msra.mxu0 0
        %1148 = vmatpush.bf16.msra.mxu0 0
        %1149 = vmatpush.bf16.msra.mxu0 0
        %1150 = vmatpush.bf16.msra.mxu0 0
        %1151 = vmatpush.bf16.msra.mxu0 0
        %1152 = vmatpush.bf16.msra.mxu0 %v1143
        %1153 = vmatmul.bf16.gmra.mxu0 %v1139
        %v1154 = vpop.f32.mrf.mxu0
        %v1155 = vadd.f32 0.0, %v1154
        %v1156 = vpop.f32.mrf.mxu0
        %1157 = vdwg.mxu0
        %v1159 = vsel %vm1137, %v1122, 0
        %v1162 = vsel %vm1141, %v1130, 0
        %1164 = vmatpush.bf16.msra.mxu0 0
        %1165 = vmatpush.bf16.msra.mxu0 0
        %1166 = vmatpush.bf16.msra.mxu0 0
        %1167 = vmatpush.bf16.msra.mxu0 0
        %1168 = vmatpush.bf16.msra.mxu0 0
        %1169 = vmatpush.bf16.msra.mxu0 0
        %1170 = vmatpush.bf16.msra.mxu0 0
        %1171 = vmatpush.bf16.msra.mxu0 %v1162
        %1172 = vmatmul.bf16.gmra.mxu0 %v1159
        %v1173 = vpop.f32.mrf.mxu0
        %v1174 = vadd.f32 0.0, %v1173
        %v1175 = vpop.f32.mrf.mxu0
        %1176 = vdwg.mxu0
        %v1178 = vsel %vm1137, %v1123, 0
        %v1181 = vsel %vm1141, %v1131, 0
        %1183 = vmatpush.bf16.msra.mxu0 0
        %1184 = vmatpush.bf16.msra.mxu0 0
        %1185 = vmatpush.bf16.msra.mxu0 0
        %1186 = vmatpush.bf16.msra.mxu0 0
        %1187 = vmatpush.bf16.msra.mxu0 0
        %1188 = vmatpush.bf16.msra.mxu0 0
        %1189 = vmatpush.bf16.msra.mxu0 0
        %1190 = vmatpush.bf16.msra.mxu0 %v1181
        %1191 = vmatmul.bf16.gmra.mxu0 %v1178
        %v1192 = vpop.f32.mrf.mxu0
        %v1193 = vadd.f32 0.0, %v1192
        %v1194 = vpop.f32.mrf.mxu0
        %1195 = vdwg.mxu0
        %v1197 = vsel %vm1137, %v1124, 0
        %v1200 = vsel %vm1141, %v1132, 0
        %1202 = vmatpush.bf16.msra.mxu0 0
        %1203 = vmatpush.bf16.msra.mxu0 0
        %1204 = vmatpush.bf16.msra.mxu0 0
        %1205 = vmatpush.bf16.msra.mxu0 0
        %1206 = vmatpush.bf16.msra.mxu0 0
        %1207 = vmatpush.bf16.msra.mxu0 0
        %1208 = vmatpush.bf16.msra.mxu0 0
        %1209 = vmatpush.bf16.msra.mxu0 %v1200
        %1210 = vmatmul.bf16.gmra.mxu0 %v1197
        %v1211 = vpop.f32.mrf.mxu0
        %v1212 = vadd.f32 0.0, %v1211
        %v1213 = vpop.f32.mrf.mxu0
        %1214 = vdwg.mxu0
        %v1216 = vsel %vm1137, %v1125, 0
        %v1219 = vsel %vm1141, %v1133, 0
        %1221 = vmatpush.bf16.msra.mxu0 0
        %1222 = vmatpush.bf16.msra.mxu0 0
        %1223 = vmatpush.bf16.msra.mxu0 0
        %1224 = vmatpush.bf16.msra.mxu0 0
        %1225 = vmatpush.bf16.msra.mxu0 0
        %1226 = vmatpush.bf16.msra.mxu0 0
        %1227 = vmatpush.bf16.msra.mxu0 0
        %1228 = vmatpush.bf16.msra.mxu0 %v1219
        %1229 = vmatmul.bf16.gmra.mxu0 %v1216
        %v1230 = vpop.f32.mrf.mxu0
        %v1231 = vadd.f32 0.0, %v1230
        %v1232 = vpop.f32.mrf.mxu0
        %1233 = vdwg.mxu0
        %v1235 = vsel %vm1137, %v1126, 0
        %v1238 = vsel %vm1141, %v1134, 0
        %1240 = vmatpush.bf16.msra.mxu0 0
        %1241 = vmatpush.bf16.msra.mxu0 0
        %1242 = vmatpush.bf16.msra.mxu0 0
        %1243 = vmatpush.bf16.msra.mxu0 0
        %1244 = vmatpush.bf16.msra.mxu0 0
        %1245 = vmatpush.bf16.msra.mxu0 0
        %1246 = vmatpush.bf16.msra.mxu0 0
        %1247 = vmatpush.bf16.msra.mxu0 %v1238
        %1248 = vmatmul.bf16.gmra.mxu0 %v1235
        %v1249 = vpop.f32.mrf.mxu0
        %v1250 = vadd.f32 0.0, %v1249
        %v1251 = vpop.f32.mrf.mxu0
        %1252 = vdwg.mxu0
        %v1254 = vsel %vm1137, %v1127, 0
        %v1257 = vsel %vm1141, %v1135, 0
        %1259 = vmatpush.bf16.msra.mxu0 0
        %1260 = vmatpush.bf16.msra.mxu0 0
        %1261 = vmatpush.bf16.msra.mxu0 0
        %1262 = vmatpush.bf16.msra.mxu0 0
        %1263 = vmatpush.bf16.msra.mxu0 0
        %1264 = vmatpush.bf16.msra.mxu0 0
        %1265 = vmatpush.bf16.msra.mxu0 0
        %1266 = vmatpush.bf16.msra.mxu0 %v1257
        %1267 = vmatmul.bf16.gmra.mxu0 %v1254
        %v1268 = vpop.f32.mrf.mxu0
        %v1269 = vadd.f32 0.0, %v1268
        %v1270 = vpop.f32.mrf.mxu0
        %1271 = vdwg.mxu0
        %v1273 = vsel %vm1137, %v1128, 0
        %v1276 = vsel %vm1141, %v1136, 0
        %1278 = vmatpush.bf16.msra.mxu0 0
        %1279 = vmatpush.bf16.msra.mxu0 0
        %1280 = vmatpush.bf16.msra.mxu0 0
        %1281 = vmatpush.bf16.msra.mxu0 0
        %1282 = vmatpush.bf16.msra.mxu0 0
        %1283 = vmatpush.bf16.msra.mxu0 0
        %1284 = vmatpush.bf16.msra.mxu0 0
        %1285 = vmatpush.bf16.msra.mxu0 %v1276
        %1286 = vmatmul.bf16.gmra.mxu0 %v1273
        %v1287 = vpop.f32.mrf.mxu0
        %v1288 = vadd.f32 0.0, %v1287
        %v1289 = vpop.f32.mrf.mxu0
        %1290 = vdwg.mxu0
        %1292 = vrot.lane.b32.xlu0 %v1174, 16
        %v1293 = vpop.permute.xlu0 %1292
        %1296 = vrot.lane.b32.xlu0 %v1193, 32
        %v1297 = vpop.permute.xlu0 %1296
        %1300 = vrot.lane.b32.xlu0 %v1212, 48
        %v1301 = vpop.permute.xlu0 %1300
        %1304 = vrot.lane.b32.xlu0 %v1231, 64
        %v1305 = vpop.permute.xlu0 %1304
        %1308 = vrot.lane.b32.xlu0 %v1250, 80
        %v1309 = vpop.permute.xlu0 %1308
        %1312 = vrot.lane.b32.xlu0 %v1269, 96
        %v1313 = vpop.permute.xlu0 %1312
        %1316 = vrot.lane.b32.xlu0 %v1288, 112
        %v1317 = vpop.permute.xlu0 %1316
        %v1319 = vsel %vm855, %v1155, %v1293
        %vm1320 = vcmask 261120
        %v1321 = vsel %vm1320, %v1319, %v1297
        %vm1322 = vcmask 392192
        %v1323 = vsel %vm1322, %v1321, %v1301
        %vm1324 = vcmask 523264
        %v1325 = vsel %vm1324, %v1323, %v1305
        %vm1326 = vcmask 654336
        %v1327 = vsel %vm1326, %v1325, %v1309
        %vm1328 = vcmask 785408
        %v1329 = vsel %vm1328, %v1327, %v1313
        %vm1330 = vcmask 916480
        %v1331 = vsel %vm1330, %v1329, %v1317
        %v1332 = vpack.c.bf16 %v1331, %v1331
        %v1333 = vperm.slane %v552, 7
        %v1334 = vunpack.c.h.b16 %v472
        %v1335 = vunpack.c.h.b16 %v474
        %v1336 = vunpack.c.h.b16 %v476
        %v1337 = vunpack.c.h.b16 %v478
        %v1338 = vunpack.c.h.b16 %v480
        %v1339 = vunpack.c.h.b16 %v482
        %v1340 = vunpack.c.h.b16 %v484
        %v1341 = vunpack.c.h.b16 %v486
        %v1342 = vunpack.c.h.b16 %v488
        %v1343 = vunpack.c.h.b16 %v490
        %v1344 = vunpack.c.h.b16 %v492
        %v1345 = vunpack.c.h.b16 %v494
        %v1346 = vunpack.c.h.b16 %v496
        %v1347 = vunpack.c.h.b16 %v498
        %v1348 = vunpack.c.h.b16 %v500
        %v1349 = vunpack.c.h.b16 %v502
        %v1350 = vpack.c.b16 %v1335, %v1334
        %v1351 = vpack.c.b16 %v1337, %v1336
        %v1352 = vpack.c.b16 %v1339, %v1338
        %v1353 = vpack.c.b16 %v1341, %v1340
        %v1354 = vpack.c.b16 %v1343, %v1342
        %v1355 = vpack.c.b16 %v1345, %v1344
        %v1356 = vpack.c.b16 %v1347, %v1346
        %v1357 = vpack.c.b16 %v1349, %v1348
        %1366 = vmatpush.bf16.msra.mxu0 %v1357
        %1367 = vmatpush.bf16.msra.mxu0 %v1356
        %1368 = vmatpush.bf16.msra.mxu0 %v1355
        %1369 = vmatpush.bf16.msra.mxu0 %v1354
        %1370 = vmatpush.bf16.msra.mxu0 %v1353
        %1371 = vmatpush.bf16.msra.mxu0 %v1352
        %1372 = vmatpush.bf16.msra.mxu0 %v1351
        %1373 = vmatpush.bf16.msra.mxu0 %v1350
        %1374 = vmatmul.bf16.gmra.mxu0 %v1332
        %v1375 = vpop.f32.mrf.mxu0
        %v1376 = vadd.f32 %v1333, %v1375
        %v1377 = vpop.f32.mrf.mxu0
        %1378 = vdwg.mxu0
        %1380 = vst [vmem:[#allocation1] ss:$2 sm:$0xff] %v1376
        %s1381 = scalar_lea.vmem [#allocation1], 1
        %1382 = vst [vmem:[%s1381] ss:$2 sm:$0xff] %v1376
        %s1383 = scalar_lea.vmem [#allocation1], 16
        %1384 = vst [vmem:[%s1383] ss:$2 sm:$0xff] %v1376
        %s1385 = scalar_lea.vmem [#allocation1], 17
        %1386 = vst [vmem:[%s1385] ss:$2 sm:$0xff] %v1376
        %v1387 = vld.sshfl [vmem:[#allocation1] sm:$0xff pattern:$0x75316420]
        %v1388 = vld.sshfl [vmem:[#allocation1 + $0x10] sm:$0xff pattern:$0x75316420]
        %v1391 = vadd.f32 %v465, %v1387
        %v1392 = vadd.f32 %v466, %v1388
        %1393 = vadd.xlane.f32.xlu0 %v1391
        %v1394 = vpop.xlane.xlu0 %1393
        %1395 = vadd.xlane.f32.xlu0 %v1392
        %v1396 = vpop.xlane.xlu0 %1395
        %v1397 = vmul.f32 %v1394, %v564
        %v1398 = vmul.f32 %v1396, %v564
        %v1399 = vsub.f32 %v1391, %v1397
        %v1400 = vsub.f32 %v1392, %v1398
        %v1401 = vmul.f32 %v1399, %v1399
        %v1402 = vmul.f32 %v1400, %v1400
        %1403 = vadd.xlane.f32.xlu0 %v1401
        %v1404 = vpop.xlane.xlu0 %1403
        %1405 = vadd.xlane.f32.xlu0 %v1402
        %v1406 = vpop.xlane.xlu0 %1405
        %v1407 = vmul.f32 %v1404, %v577
        %v1408 = vmul.f32 %v1406, %v577
        %v1409 = vrsqrt.pop %v1407
        %v1410 = vmul.f32 %v1409, %v1407
        %v1411 = vmul.f32 %v1410, %v1409
        %v1412 = vmul.f32 0.5, %v1411
        %v1413 = vsub.f32 1.5, %v1412
        %v1414 = vmul.f32 %v1409, %v1413
        %v1415 = vmul.f32 %v1407, %v1414
        %vm1416 = vcmp.eq.f32.partialorder %v1407, inf
        %v1417 = vsel %vm1416, %v1407, %v1415
        %vm1418 = vcmp.eq.f32.partialorder %v1407, 0.0
        %v1419 = vand.u32 %v1407, 2147483648
        %v1420 = vsel %vm1418, %v1419, %v1417
        %v1421 = vrsqrt.pop %v1408
        %v1422 = vmul.f32 %v1421, %v1408
        %v1423 = vmul.f32 %v1422, %v1421
        %v1424 = vmul.f32 0.5, %v1423
        %v1425 = vsub.f32 1.5, %v1424
        %v1426 = vmul.f32 %v1421, %v1425
        %v1427 = vmul.f32 %v1408, %v1426
        %vm1428 = vcmp.eq.f32.partialorder %v1408, inf
        %v1429 = vsel %vm1428, %v1408, %v1427
        %vm1430 = vcmp.eq.f32.partialorder %v1408, 0.0
        %v1431 = vand.u32 %v1408, 2147483648
        %v1432 = vsel %vm1430, %v1431, %v1429
        %v1433 = vadd.f32 %v1420, 1e-06
        %v1434 = vadd.f32 %v1432, 1e-06
        %v1435 = vrcp.pop %v1433
        %v1436 = vrcp.pop %v1434
        %v1437 = vmul.f32 %v1399, %v1435
        %v1438 = vmul.f32 %v1400, %v1436
        %v1439 = vperm.slane %v552, 2
        %v1440 = vmul.f32 %v1439, %v1437
        %v1441 = vmul.f32 %v1439, %v1438
        %v1442 = vperm.slane %v552, 3
        %v1443 = vadd.f32 %v1440, %v1442
        %v1444 = vadd.f32 %v1441, %v1442
        %v1445 = vpack.c.bf16 %v1444, %v1443
        %v1447 = vperm.slane %v551, 0
        %v1448 = vperm.slane %v551, 1
        %v1467 = vunpack.c.l.b16 %v503
        %v1468 = vunpack.c.h.b16 %v503
        %v1469 = vunpack.c.l.b16 %v504
        %v1470 = vunpack.c.h.b16 %v504
        %v1471 = vunpack.c.l.b16 %v505
        %v1472 = vunpack.c.h.b16 %v505
        %v1473 = vunpack.c.l.b16 %v506
        %v1474 = vunpack.c.h.b16 %v506
        %v1475 = vunpack.c.l.b16 %v507
        %v1476 = vunpack.c.h.b16 %v507
        %v1477 = vunpack.c.l.b16 %v508
        %v1478 = vunpack.c.h.b16 %v508
        %v1479 = vunpack.c.l.b16 %v509
        %v1480 = vunpack.c.h.b16 %v509
        %v1481 = vunpack.c.l.b16 %v510
        %v1482 = vunpack.c.h.b16 %v510
        %v1483 = vunpack.c.l.b16 %v511
        %v1484 = vunpack.c.h.b16 %v511
        %v1485 = vunpack.c.l.b16 %v512
        %v1486 = vunpack.c.h.b16 %v512
        %v1487 = vunpack.c.l.b16 %v513
        %v1488 = vunpack.c.h.b16 %v513
        %v1489 = vunpack.c.l.b16 %v514
        %v1490 = vunpack.c.h.b16 %v514
        %v1491 = vunpack.c.l.b16 %v515
        %v1492 = vunpack.c.h.b16 %v515
        %v1493 = vunpack.c.l.b16 %v516
        %v1494 = vunpack.c.h.b16 %v516
        %v1495 = vunpack.c.l.b16 %v517
        %v1496 = vunpack.c.h.b16 %v517
        %v1497 = vunpack.c.l.b16 %v518
        %v1498 = vunpack.c.h.b16 %v518
        %v1499 = vpack.c.b16 %v1469, %v1467
        %v1500 = vpack.c.b16 %v1470, %v1468
        %v1501 = vpack.c.b16 %v1473, %v1471
        %v1502 = vpack.c.b16 %v1474, %v1472
        %v1503 = vpack.c.b16 %v1477, %v1475
        %v1504 = vpack.c.b16 %v1478, %v1476
        %v1505 = vpack.c.b16 %v1481, %v1479
        %v1506 = vpack.c.b16 %v1482, %v1480
        %v1507 = vpack.c.b16 %v1485, %v1483
        %v1508 = vpack.c.b16 %v1486, %v1484
        %v1509 = vpack.c.b16 %v1489, %v1487
        %v1510 = vpack.c.b16 %v1490, %v1488
        %v1511 = vpack.c.b16 %v1493, %v1491
        %v1512 = vpack.c.b16 %v1494, %v1492
        %v1513 = vpack.c.b16 %v1497, %v1495
        %v1514 = vpack.c.b16 %v1498, %v1496
        %1531 = vmatpush.bf16.msra.mxu0 %v1513
        %1532 = vmatpush.bf16.msra.mxu0 %v1511
        %1533 = vmatpush.bf16.msra.mxu0 %v1509
        %1534 = vmatpush.bf16.msra.mxu0 %v1507
        %1535 = vmatpush.bf16.msra.mxu0 %v1505
        %1536 = vmatpush.bf16.msra.mxu0 %v1503
        %1537 = vmatpush.bf16.msra.mxu0 %v1501
        %1538 = vmatpush.bf16.msra.mxu0 %v1499
        %1539 = vmatmul.bf16.gmra.mxu0 %v1445
        %v1540 = vpop.f32.mrf.mxu0
        %v1541 = vadd.f32 %v1447, %v1540
        %v1542 = vpop.f32.mrf.mxu0
        %v1543 = vadd.f32 %v1447, %v1542
        %1544 = vdwg.mxu0
        %1545 = vmatpush.bf16.msra.mxu0 %v1514
        %1546 = vmatpush.bf16.msra.mxu0 %v1512
        %1547 = vmatpush.bf16.msra.mxu0 %v1510
        %1548 = vmatpush.bf16.msra.mxu0 %v1508
        %1549 = vmatpush.bf16.msra.mxu0 %v1506
        %1550 = vmatpush.bf16.msra.mxu0 %v1504
        %1551 = vmatpush.bf16.msra.mxu0 %v1502
        %1552 = vmatpush.bf16.msra.mxu0 %v1500
        %1553 = vmatmul.bf16.gmra.mxu0 %v1445
        %v1554 = vpop.f32.mrf.mxu0
        %v1555 = vadd.f32 %v1448, %v1554
        %v1556 = vpop.f32.mrf.mxu0
        %v1557 = vadd.f32 %v1448, %v1556
        %1558 = vdwg.mxu0
        %v1559 = vmax.f32 %v1541, 0.0
        %v1560 = vmax.f32 %v1555, 0.0
        %v1561 = vmax.f32 %v1543, 0.0
        %v1562 = vmax.f32 %v1557, 0.0
        %v1563 = vpack.c.bf16 %v1561, %v1559
        %v1564 = vpack.c.bf16 %v1562, %v1560
        %v1597 = vunpack.c.l.b16 %v519
        %v1598 = vunpack.c.l.b16 %v520
        %v1599 = vunpack.c.l.b16 %v521
        %v1600 = vunpack.c.l.b16 %v522
        %v1601 = vunpack.c.l.b16 %v523
        %v1602 = vunpack.c.l.b16 %v524
        %v1603 = vunpack.c.l.b16 %v525
        %v1604 = vunpack.c.l.b16 %v526
        %v1605 = vunpack.c.l.b16 %v527
        %v1606 = vunpack.c.l.b16 %v528
        %v1607 = vunpack.c.l.b16 %v529
        %v1608 = vunpack.c.l.b16 %v530
        %v1609 = vunpack.c.l.b16 %v531
        %v1610 = vunpack.c.l.b16 %v532
        %v1611 = vunpack.c.l.b16 %v533
        %v1612 = vunpack.c.l.b16 %v534
        %v1613 = vunpack.c.l.b16 %v535
        %v1614 = vunpack.c.l.b16 %v536
        %v1615 = vunpack.c.l.b16 %v537
        %v1616 = vunpack.c.l.b16 %v538
        %v1617 = vunpack.c.l.b16 %v539
        %v1618 = vunpack.c.l.b16 %v540
        %v1619 = vunpack.c.l.b16 %v541
        %v1620 = vunpack.c.l.b16 %v542
        %v1621 = vunpack.c.l.b16 %v543
        %v1622 = vunpack.c.l.b16 %v544
        %v1623 = vunpack.c.l.b16 %v545
        %v1624 = vunpack.c.l.b16 %v546
        %v1625 = vunpack.c.l.b16 %v547
        %v1626 = vunpack.c.l.b16 %v548
        %v1627 = vunpack.c.l.b16 %v549
        %v1628 = vunpack.c.l.b16 %v550
        %v1629 = vpack.c.b16 %v1598, %v1597
        %v1630 = vpack.c.b16 %v1600, %v1599
        %v1631 = vpack.c.b16 %v1602, %v1601
        %v1632 = vpack.c.b16 %v1604, %v1603
        %v1633 = vpack.c.b16 %v1606, %v1605
        %v1634 = vpack.c.b16 %v1608, %v1607
        %v1635 = vpack.c.b16 %v1610, %v1609
        %v1636 = vpack.c.b16 %v1612, %v1611
        %v1637 = vpack.c.b16 %v1614, %v1613
        %v1638 = vpack.c.b16 %v1616, %v1615
        %v1639 = vpack.c.b16 %v1618, %v1617
        %v1640 = vpack.c.b16 %v1620, %v1619
        %v1641 = vpack.c.b16 %v1622, %v1621
        %v1642 = vpack.c.b16 %v1624, %v1623
        %v1643 = vpack.c.b16 %v1626, %v1625
        %v1644 = vpack.c.b16 %v1628, %v1627
        %1661 = vmatpush.bf16.msra.mxu0 %v1636
        %1662 = vmatpush.bf16.msra.mxu0 %v1635
        %1663 = vmatpush.bf16.msra.mxu0 %v1634
        %1664 = vmatpush.bf16.msra.mxu0 %v1633
        %1665 = vmatpush.bf16.msra.mxu0 %v1632
        %1666 = vmatpush.bf16.msra.mxu0 %v1631
        %1667 = vmatpush.bf16.msra.mxu0 %v1630
        %1668 = vmatpush.bf16.msra.mxu0 %v1629
        %1669 = vmatmul.bf16.gmra.mxu0 %v1563
        %v1670 = vpop.f32.mrf.mxu0
        %v1671 = vadd.f32 0.0, %v1670
        %v1672 = vpop.f32.mrf.mxu0
        %v1673 = vadd.f32 0.0, %v1672
        %1674 = vdwg.mxu0
        %1675 = vmatpush.bf16.msra.mxu0 %v1644
        %1676 = vmatpush.bf16.msra.mxu0 %v1643
        %1677 = vmatpush.bf16.msra.mxu0 %v1642
        %1678 = vmatpush.bf16.msra.mxu0 %v1641
        %1679 = vmatpush.bf16.msra.mxu0 %v1640
        %1680 = vmatpush.bf16.msra.mxu0 %v1639
        %1681 = vmatpush.bf16.msra.mxu0 %v1638
        %1682 = vmatpush.bf16.msra.mxu0 %v1637
        %1683 = vmatmul.bf16.gmra.mxu0 %v1564
        %v1684 = vpop.f32.mrf.mxu0
        %v1685 = vadd.f32 %v1671, %v1684
        %v1686 = vpop.f32.mrf.mxu0
        %v1687 = vadd.f32 %v1673, %v1686
        %1688 = vdwg.mxu0
        %v1689 = vadd.f32 %v1443, %v1685
        %v1690 = vadd.f32 %v1444, %v1687
        %v1691 = vperm.slane %v553, 0
        %v1692 = vadd.f32 %v1689, %v1691
        %v1693 = vadd.f32 %v1690, %v1691
        %1694 = vst [vmem:[%s8] sm:$0xff] %v1692
        %1695 = vst [vmem:[%s8 + $0x8] sm:$0xff] %v1693
        %v1696 = vld [vmem:[%s8] sm:$0xf]
        %1697 = vst [vmem:[%s9] sm:$0xf] %v1696
        // Predicated region
        $region69: #{transformer_forward.2} parent=51 // pred_check
          %p1698 = pneg %p233
        $region70: #{transformer_forward.2} parent=51 // pred_check_branch
          %1700 = sbr.rel (%p1698) target = $region72
        $region71: #{transformer_forward.2} parent=51 // pred_region
          _
        $region72: #{transformer_forward.2} parent=51 // pred_fallthru
          _
        // Predicated region
        $region73: #{transformer_forward.2} parent=51 // pred_check
          %p1701 = pneg %p254
        $region74: #{transformer_forward.2} parent=51 // pred_check_branch
          %1703 = sbr.rel (%p1701) target = $region76
        $region75: #{transformer_forward.2} parent=51 // pred_region
          _
        $region76: #{transformer_forward.2} parent=51 // pred_fallthru
          _
        // Predicated region
        $region77: #{transformer_forward.2} parent=51 // pred_check
          %p1704 = pneg %p233
        $region78: #{transformer_forward.2} parent=51 // pred_check_branch
          %1706 = sbr.rel (%p1704) target = $region80
        $region79: #{transformer_forward.2} parent=51 // pred_region
          _
        $region80: #{transformer_forward.2} parent=51 // pred_fallthru
          _
        // Predicated region
        $region81: #{transformer_forward.2} parent=51 // pred_check
          %p1707 = pneg %p254
        $region82: #{transformer_forward.2} parent=51 // pred_check_branch
          %1709 = sbr.rel (%p1707) target = $region84
        $region83: #{transformer_forward.2} parent=51 // pred_region
          _
        $region84: #{transformer_forward.2} parent=51 // pred_fallthru
          _
      $region52: #{transformer_forward.2} parent=5 // pred_fallthru
        _
      %p1710 = scmp.le.s32.totalorder 2, %s22
      // Predicated region
      $region85: #{transformer_forward.2} parent=5 // pred_check
        %p1711 = pneg %p1710
      $region86: #{transformer_forward.2} parent=5 // pred_check_branch
        %1713 = sbr.rel (%p1711) target = $region88
      $region87: #{transformer_forward.2} parent=5 // pred_region
        %s1714 = ssub.s32 %s22, 2
      $region88: #{transformer_forward.2} parent=5 // pred_fallthru
        _
    $region6: #{transformer_forward.2} parent=1 // loop_footer
      %s26 = sadd.s32 1, %s22
    $region7: #{transformer_forward.2} parent=1 // loop_footer_branch
      %21 = sbr.rel target = $region3
    $region8: #{transformer_forward.2} parent=1 // loop_exit
      _
    %1715 = vsyncpa [#allocation3], 1
    %s1716 = scalar_lea.sflag [#allocation3], 1
    %1717 = vsyncpa %s1716, 1
    %1718 = vsyncpa [#allocation5], 1
    %s1719 = scalar_lea.sflag [#allocation5], 1
    %1720 = vsyncpa %s1719, 1

// kernel: transformer_forward.3
$region0: #{transformer_forward.3}
  #allocation0 [shape = 'u32[]', space=smem, size = 0x4, offset = 0x4, fixed_abs, tag = 'smem constant byte address 0x4 - core index']
  #allocation1 [shape = 'u32[72,128]{1,0:T(1,128)}', space=vmem, size = 0x9000, scoped, tag = 'internal scratch']
  %s0 = inlined_call_operand.vmem [shape: f32[4,128], index: 0, kind: input, shape index: {}]
  %s1 = inlined_call_operand.vmem [shape: f32[4,128], index: 1, kind: input, shape index: {}]
  %s2 = inlined_call_operand.vmem [shape: f32[4,128], index: 2, kind: input, shape index: {}]
  %s3 = inlined_call_operand.vmem [shape: f32[2,4,4], index: 3, kind: input, shape index: {}]
  %s4 = inlined_call_operand.hbm [shape: bf16[2,128,1024], index: 4, kind: input, shape index: {}]
  %s5 = inlined_call_operand.hbm [shape: bf16[2,128,256], index: 5, kind: input, shape index: {}]
  %s6 = inlined_call_operand.hbm [shape: bf16[2,256,128], index: 6, kind: input, shape index: {}]
  %s7 = inlined_call_operand.vmem [shape: f32[2,15,128], index: 7, kind: input, shape index: {}]
  %s8 = inlined_call_operand.vmem [shape: f32[2,1,256], index: 8, kind: input, shape index: {}]
  %s9 = inlined_call_operand.vmem [shape: f32[4,128], index: 9, kind: output, shape index: {}]
  %s10 = sld [smem:[#allocation0]]
  $region85: #{transformer_forward.3} parent=0
    _
  %s12 = ssub.s32 1, %s10
  %s13 = scalar_select 0, %s12, %s10
  $region1: #{transformer_forward.3} parent=0
    #allocation2 [shape = 'u8[524288]{0}', space=vmem, size = 0x80000, scoped, tag = 'input window, operand 4']
    #allocation3 [shape = 's32[2]{0}', space=sflag, size = 0x8, scoped, tag = 'scoped memory for transformer_forward.3']
    #allocation4 [shape = 'u8[131072]{0}', space=vmem, size = 0x20000, scoped, tag = 'input window, operand 5']
    #allocation5 [shape = 's32[2]{0}', space=sflag, size = 0x8, scoped, tag = 'scoped memory for transformer_forward.3']
    #allocation6 [shape = 'u8[131072]{0}', space=vmem, size = 0x20000, scoped, tag = 'input window, operand 6']
    %14 = vsyncpa [#allocation3], 0
    %s15 = scalar_lea.sflag [#allocation3], 1
    %16 = vsyncpa %s15, 0
    %17 = vsyncpa [#allocation5], 0
    %s18 = scalar_lea.sflag [#allocation5], 1
    %19 = vsyncpa %s18, 0
    loop: start=0, step=1, limit=4
    $region2: #{transformer_forward.3} parent=1 // loop_pre_header
      _
    $region3: #{transformer_forward.3} parent=1 // loop_header
      %s21 = sphi 0, %s25
      %p22 = scmp.ge.s32.totalorder %s21, 4
      %s29 = sphi 0, %s29
      %s31 = sphi 0, %s29
      %s32 = sphi 0, %s31
      %s46 = sphi 0, %s32
      %s50 = sphi 0, %s50
      %s52 = sphi 0, %s50
      %s53 = sphi 0, %s52
      %s67 = sphi 0, %s53
      %s71 = sphi 0, %s71
      %s73 = sphi 0, %s71
      %s74 = sphi 0, %s73
      %s88 = sphi 0, %s74
      %s92 = sphi 0, %s92
      %s94 = sphi 0, %s92
      %s95 = sphi 0, %s94
      %s109 = sphi 0, %s95
      %s115 = sphi 0, %s117
      %s118 = sphi 0, %s115
      %s119 = sphi 0, %s118
      %s135 = sphi 0, %s119
      %s141 = sphi 0, %s143
      %s144 = sphi 0, %s141
      %s145 = sphi 0, %s144
      %s161 = sphi 0, %s145
      %s167 = sphi 0, %s169
      %s170 = sphi 0, %s167
      %s171 = sphi 0, %s170
      %s187 = sphi 0, %s171
      %s193 = sphi 0, %s195
      %s196 = sphi 0, %s193
      %s197 = sphi 0, %s196
      %s213 = sphi 0, %s197
      %s219 = sphi 0, %s221
      %s222 = sphi 0, %s219
      %s223 = sphi 0, %s222
      %s239 = sphi 0, %s223
      %s243 = sphi 0, %s243
      %s245 = sphi 0, %s243
      %s246 = sphi 0, %s245
      %s260 = sphi 0, %s246
    $region4: #{transformer_forward.3} parent=1 // loop_header_branch
      %24 = sbr.rel (%p22) target = $region8
    $region5: #{transformer_forward.3} parent=1 // loop_body
      %s26 = ssub.s32 %s21, 1
      %s27 = ssub.s32 %s21, 2
      %s28 = sadd.s32 %s21, 1
      %s30 = sadd.s32 %s29, 1
      %p33 = scmp.eq.s32.totalorder %s21, 1
      %p34 = scmp.ne.s32.totalorder %s29, %s31
      %p35 = scmp.eq.s32.totalorder %s21, 0
      %p36 = por %p34, %p35
      %p37 = scmp.ne.s32.totalorder %s29, %s31
      %p38 = scmp.eq.s32.totalorder %s26, 1
      %p39 = por %p37, %p38
      %p40 = scmp.ne.s32.totalorder %s31, %s32
      %p41 = scmp.eq.s32.totalorder %s26, 0
      %p42 = por %p40, %p41
      %p43 = scmp.ne.s32.totalorder %s31, %s32
      %p44 = scmp.eq.s32.totalorder %s27, 1
      %p45 = por %p43, %p44
      %p47 = scmp.ne.s32.totalorder %s32, %s46
      %p48 = scmp.eq.s32.totalorder %s27, 0
      %p49 = por %p47, %p48
      %s51 = sadd.s32 %s50, 1
      %p54 = scmp.eq.s32.totalorder %s21, 1
      %p55 = scmp.ne.s32.totalorder %s50, %s52
      %p56 = scmp.eq.s32.totalorder %s21, 0
      %p57 = por %p55, %p56
      %p58 = scmp.ne.s32.totalorder %s50, %s52
      %p59 = scmp.eq.s32.totalorder %s26, 1
      %p60 = por %p58, %p59
      %p61 = scmp.ne.s32.totalorder %s52, %s53
      %p62 = scmp.eq.s32.totalorder %s26, 0
      %p63 = por %p61, %p62
      %p64 = scmp.ne.s32.totalorder %s52, %s53
      %p65 = scmp.eq.s32.totalorder %s27, 1
      %p66 = por %p64, %p65
      %p68 = scmp.ne.s32.totalorder %s53, %s67
      %p69 = scmp.eq.s32.totalorder %s27, 0
      %p70 = por %p68, %p69
      %s72 = sadd.s32 %s71, 1
      %p75 = scmp.eq.s32.totalorder %s21, 1
      %p76 = scmp.ne.s32.totalorder %s71, %s73
      %p77 = scmp.eq.s32.totalorder %s21, 0
      %p78 = por %p76, %p77
      %p79 = scmp.ne.s32.totalorder %s71, %s73
      %p80 = scmp.eq.s32.totalorder %s26, 1
      %p81 = por %p79, %p80
      %p82 = scmp.ne.s32.totalorder %s73, %s74
      %p83 = scmp.eq.s32.totalorder %s26, 0
      %p84 = por %p82, %p83
      %p85 = scmp.ne.s32.totalorder %s73, %s74
      %p86 = scmp.eq.s32.totalorder %s27, 1
      %p87 = por %p85, %p86
      %p89 = scmp.ne.s32.totalorder %s74, %s88
      %p90 = scmp.eq.s32.totalorder %s27, 0
      %p91 = por %p89, %p90
      %s93 = sadd.s32 %s92, 1
      %p96 = scmp.eq.s32.totalorder %s21, 1
      %p97 = scmp.ne.s32.totalorder %s92, %s94
      %p98 = scmp.eq.s32.totalorder %s21, 0
      %p99 = por %p97, %p98
      %p100 = scmp.ne.s32.totalorder %s92, %s94
      %p101 = scmp.eq.s32.totalorder %s26, 1
      %p102 = por %p100, %p101
      %p103 = scmp.ne.s32.totalorder %s94, %s95
      %p104 = scmp.eq.s32.totalorder %s26, 0
      %p105 = por %p103, %p104
      %p106 = scmp.ne.s32.totalorder %s94, %s95
      %p107 = scmp.eq.s32.totalorder %s27, 1
      %p108 = por %p106, %p107
      %p110 = scmp.ne.s32.totalorder %s95, %s109
      %p111 = scmp.eq.s32.totalorder %s27, 0
      %p112 = por %p110, %p111
      %s113 = ssub.s32 %s21, %s28
      %p114 = scmp.eq.s32.totalorder %s113, 0
      %s116 = sadd.s32 %s115, 1
      %s117 = scalar_select %p114, %s115, %s116
      %p120 = pneg %p114
      %p121 = scmp.eq.s32.totalorder %s21, 1
      %p122 = por %p120, %p121
      %p123 = scmp.ne.s32.totalorder %s115, %s118
      %p124 = scmp.eq.s32.totalorder %s21, 0
      %p125 = por %p123, %p124
      %p126 = scmp.ne.s32.totalorder %s115, %s118
      %p127 = scmp.eq.s32.totalorder %s26, 1
      %p128 = por %p126, %p127
      %p129 = scmp.ne.s32.totalorder %s118, %s119
      %p130 = scmp.eq.s32.totalorder %s26, 0
      %p131 = por %p129, %p130
      %p132 = scmp.ne.s32.totalorder %s118, %s119
      %p133 = scmp.eq.s32.totalorder %s27, 1
      %p134 = por %p132, %p133
      %p136 = scmp.ne.s32.totalorder %s119, %s135
      %p137 = scmp.eq.s32.totalorder %s27, 0
      %p138 = por %p136, %p137
      %s139 = ssub.s32 %s21, %s28
      %p140 = scmp.eq.s32.totalorder %s139, 0
      %s142 = sadd.s32 %s141, 1
      %s143 = scalar_select %p140, %s141, %s142
      %p146 = pneg %p140
      %p147 = scmp.eq.s32.totalorder %s21, 1
      %p148 = por %p146, %p147
      %p149 = scmp.ne.s32.totalorder %s141, %s144
      %p150 = scmp.eq.s32.totalorder %s21, 0
      %p151 = por %p149, %p150
      %p152 = scmp.ne.s32.totalorder %s141, %s144
      %p153 = scmp.eq.s32.totalorder %s26, 1
      %p154 = por %p152, %p153
      %p155 = scmp.ne.s32.totalorder %s144, %s145
      %p156 = scmp.eq.s32.totalorder %s26, 0
      %p157 = por %p155, %p156
      %p158 = scmp.ne.s32.totalorder %s144, %s145
      %p159 = scmp.eq.s32.totalorder %s27, 1
      %p160 = por %p158, %p159
      %p162 = scmp.ne.s32.totalorder %s145, %s161
      %p163 = scmp.eq.s32.totalorder %s27, 0
      %p164 = por %p162, %p163
      %s165 = ssub.s32 %s21, %s28
      %p166 = scmp.eq.s32.totalorder %s165, 0
      %s168 = sadd.s32 %s167, 1
      %s169 = scalar_select %p166, %s167, %s168
      %p172 = pneg %p166
      %p173 = scmp.eq.s32.totalorder %s21, 1
      %p174 = por %p172, %p173
      %p175 = scmp.ne.s32.totalorder %s167, %s170
      %p176 = scmp.eq.s32.totalorder %s21, 0
      %p177 = por %p175, %p176
      %p178 = scmp.ne.s32.totalorder %s167, %s170
      %p179 = scmp.eq.s32.totalorder %s26, 1
      %p180 = por %p178, %p179
      %p181 = scmp.ne.s32.totalorder %s170, %s171
      %p182 = scmp.eq.s32.totalorder %s26, 0
      %p183 = por %p181, %p182
      %p184 = scmp.ne.s32.totalorder %s170, %s171
      %p185 = scmp.eq.s32.totalorder %s27, 1
      %p186 = por %p184, %p185
      %p188 = scmp.ne.s32.totalorder %s171, %s187
      %p189 = scmp.eq.s32.totalorder %s27, 0
      %p190 = por %p188, %p189
      %s191 = ssub.s32 %s21, %s28
      %p192 = scmp.eq.s32.totalorder %s191, 0
      %s194 = sadd.s32 %s193, 1
      %s195 = scalar_select %p192, %s193, %s194
      %p198 = pneg %p192
      %p199 = scmp.eq.s32.totalorder %s21, 1
      %p200 = por %p198, %p199
      %p201 = scmp.ne.s32.totalorder %s193, %s196
      %p202 = scmp.eq.s32.totalorder %s21, 0
      %p203 = por %p201, %p202
      %p204 = scmp.ne.s32.totalorder %s193, %s196
      %p205 = scmp.eq.s32.totalorder %s26, 1
      %p206 = por %p204, %p205
      %p207 = scmp.ne.s32.totalorder %s196, %s197
      %p208 = scmp.eq.s32.totalorder %s26, 0
      %p209 = por %p207, %p208
      %p210 = scmp.ne.s32.totalorder %s196, %s197
      %p211 = scmp.eq.s32.totalorder %s27, 1
      %p212 = por %p210, %p211
      %p214 = scmp.ne.s32.totalorder %s197, %s213
      %p215 = scmp.eq.s32.totalorder %s27, 0
      %p216 = por %p214, %p215
      %s217 = ssub.s32 %s21, %s28
      %p218 = scmp.eq.s32.totalorder %s217, 0
      %s220 = sadd.s32 %s219, 1
      %s221 = scalar_select %p218, %s219, %s220
      %p224 = pneg %p218
      %p225 = scmp.eq.s32.totalorder %s21, 1
      %p226 = por %p224, %p225
      %p227 = scmp.ne.s32.totalorder %s219, %s222
      %p228 = scmp.eq.s32.totalorder %s21, 0
      %p229 = por %p227, %p228
      %p230 = scmp.ne.s32.totalorder %s219, %s222
      %p231 = scmp.eq.s32.totalorder %s26, 1
      %p232 = por %p230, %p231
      %p233 = scmp.ne.s32.totalorder %s222, %s223
      %p234 = scmp.eq.s32.totalorder %s26, 0
      %p235 = por %p233, %p234
      %p236 = scmp.ne.s32.totalorder %s222, %s223
      %p237 = scmp.eq.s32.totalorder %s27, 1
      %p238 = por %p236, %p237
      %p240 = scmp.ne.s32.totalorder %s223, %s239
      %p241 = scmp.eq.s32.totalorder %s27, 0
      %p242 = por %p240, %p241
      %s244 = sadd.s32 %s243, 1
      %p247 = scmp.eq.s32.totalorder %s21, 1
      %p248 = scmp.ne.s32.totalorder %s243, %s245
      %p249 = scmp.eq.s32.totalorder %s21, 0
      %p250 = por %p248, %p249
      %p251 = scmp.ne.s32.totalorder %s243, %s245
      %p252 = scmp.eq.s32.totalorder %s26, 1
      %p253 = por %p251, %p252
      %p254 = scmp.ne.s32.totalorder %s245, %s246
      %p255 = scmp.eq.s32.totalorder %s26, 0
      %p256 = por %p254, %p255
      %p257 = scmp.ne.s32.totalorder %s245, %s246
      %p258 = scmp.eq.s32.totalorder %s27, 1
      %p259 = por %p257, %p258
      %p261 = scmp.ne.s32.totalorder %s246, %s260
      %p262 = scmp.eq.s32.totalorder %s27, 0
      %p263 = por %p261, %p262
      %p264 = scmp.le.s32.totalorder 1, %s21
      %p265 = scmp.lt.s32.totalorder %s21, 3
      %p266 = pnand %p264, %p265
      %p267 = pneg %p266
      // Predicated region
      $region9: #{transformer_forward.3} parent=5 // pred_check
        _
      $region10: #{transformer_forward.3} parent=5 // pred_check_branch
        %269 = sbr.rel (%p266) target = $region12
      $region11: #{transformer_forward.3} parent=5 // pred_region
        %s270 = ssub.s32 %s21, 1
        // Predicated region
        $region13: #{transformer_forward.3} parent=11 // pred_check
          %p271 = pneg %p42
        $region14: #{transformer_forward.3} parent=11 // pred_check_branch
          %273 = sbr.rel (%p271) target = $region16
        $region15: #{transformer_forward.3} parent=11 // pred_region
          _
        $region16: #{transformer_forward.3} parent=11 // pred_fallthru
          _
        // Predicated region
        $region17: #{transformer_forward.3} parent=11 // pred_check
          %p274 = pneg %p63
        $region18: #{transformer_forward.3} parent=11 // pred_check_branch
          %276 = sbr.rel (%p274) target = $region20
        $region19: #{transformer_forward.3} parent=11 // pred_region
          _
        $region20: #{transformer_forward.3} parent=11 // pred_fallthru
          _
        // Predicated region
        $region21: #{transformer_forward.3} parent=11 // pred_check
          %p277 = pneg %p84
        $region22: #{transformer_forward.3} parent=11 // pred_check_branch
          %279 = sbr.rel (%p277) target = $region24
        $region23: #{transformer_forward.3} parent=11 // pred_region
          _
        $region24: #{transformer_forward.3} parent=11 // pred_fallthru
          _
        // Predicated region
        $region25: #{transformer_forward.3} parent=11 // pred_check
          %p280 = pneg %p105
        $region26: #{transformer_forward.3} parent=11 // pred_check_branch
          %282 = sbr.rel (%p280) target = $region28
        $region27: #{transformer_forward.3} parent=11 // pred_region
          _
        $region28: #{transformer_forward.3} parent=11 // pred_fallthru
          _
      $region12: #{transformer_forward.3} parent=5 // pred_fallthru
        _
      %p283 = scmp.lt.s32.totalorder %s21, 2
      // Predicated region
      $region29: #{transformer_forward.3} parent=5 // pred_check
        %p284 = pneg %p283
      $region30: #{transformer_forward.3} parent=5 // pred_check_branch
        %286 = sbr.rel (%p284) target = $region32
      $region31: #{transformer_forward.3} parent=5 // pred_region
        // Predicated region
        $region33: #{transformer_forward.3} parent=31 // pred_check
          %p287 = pneg %p125
        $region34: #{transformer_forward.3} parent=31 // pred_check_branch
          %289 = sbr.rel (%p287) target = $region36
        $region35: #{transformer_forward.3} parent=31 // pred_region
          %s290 = sand.u32 %s115, 1
          %s291 = scalar_lea.sflag [#allocation3], %s290
          %s292 = sand.u32 %s115, 1
          %s293 = smul.addr %s292, 512
          %s294 = scalar_lea.vmem [#allocation2], %s293
          %296 = vsyncadd %s291, 0
          %s297 = smul.addr %s21, 128
          %s298 = smul.addr %s297, 4
          %s299 = scalar_lea.hbm %s4, %s298
          %s300 = sshll.u32 %s299, 4
          %s301 = int_to_ptr.hbm [resolvable:$true] %s300
          %s302 = sshll.u32 %s294, 4
          %s303 = int_to_ptr.vmem [resolvable:$true] %s302
          %308 = dma.hbm_to_vmem [thread:$0]  %s301, 8192, %s303, %s291, 512, 512, 32
        $region36: #{transformer_forward.3} parent=31 // pred_fallthru
          _
        // Predicated region
        $region37: #{transformer_forward.3} parent=31 // pred_check
          %p309 = pneg %p151
        $region38: #{transformer_forward.3} parent=31 // pred_check_branch
          %311 = sbr.rel (%p309) target = $region40
        $region39: #{transformer_forward.3} parent=31 // pred_region
          %s312 = sand.u32 %s21, 1
          %s313 = scalar_lea.sflag [#allocation5], %s312
          %s314 = sand.u32 %s141, 1
          %s315 = smul.addr %s314, 128
          %s316 = scalar_lea.vmem [#allocation4], %s315
          %318 = vsyncadd %s313, 0
          %s319 = smul.addr %s21, 32
          %s320 = smul.addr %s319, 4
          %s321 = scalar_lea.hbm %s5, %s320
          %s322 = sshll.u32 %s321, 4
          %s323 = int_to_ptr.hbm [resolvable:$true] %s322
          %s324 = sshll.u32 %s316, 4
          %s325 = int_to_ptr.vmem [resolvable:$true] %s324
          %330 = dma.hbm_to_vmem [thread:$0]  %s323, 2048, %s325, %s313, 128, 128, 8
        $region40: #{transformer_forward.3} parent=31 // pred_fallthru
          _
        // Predicated region
        $region41: #{transformer_forward.3} parent=31 // pred_check
          %p331 = pneg %p177
        $region42: #{transformer_forward.3} parent=31 // pred_check_branch
          %333 = sbr.rel (%p331) target = $region44
        $region43: #{transformer_forward.3} parent=31 // pred_region
          %s334 = sand.u32 %s21, 1
          %s335 = scalar_lea.sflag [#allocation5], %s334
          %s336 = sand.u32 %s167, 1
          %s337 = smul.addr %s336, 128
          %s338 = scalar_lea.vmem [#allocation6], %s337
          %340 = vsyncadd %s335, 0
          %s341 = smul.addr %s21, 32
          %s342 = smul.addr %s341, 4
          %s343 = scalar_lea.hbm %s6, %s342
          %s344 = sshll.u32 %s343, 4
          %s345 = int_to_ptr.hbm [resolvable:$true] %s344
          %s346 = sshll.u32 %s338, 4
          %s347 = int_to_ptr.vmem [resolvable:$true] %s346
          %352 = dma.hbm_to_vmem [thread:$0]  %s345, 2048, %s347, %s335, 64, 64, 4
        $region44: #{transformer_forward.3} parent=31 // pred_fallthru
          _
        // Predicated region
        $region45: #{transformer_forward.3} parent=31 // pred_check
          %p353 = pneg %p203
        $region46: #{transformer_forward.3} parent=31 // pred_check_branch
          %355 = sbr.rel (%p353) target = $region48
        $region47: #{transformer_forward.3} parent=31 // pred_region
          %p356 = scmp.lt.s32.totalorder %s21, 1
          %s357 = scalar_select %p356, %s21, 1
          %s358 = smul.addr %s357, 2
          %s359 = smul.addr %s358, 8
          %s360 = scalar_lea.vmem %s7, %s359
        $region48: #{transformer_forward.3} parent=31 // pred_fallthru
          _
        // Predicated region
        $region49: #{transformer_forward.3} parent=31 // pred_check
          %p361 = pneg %p229
        $region50: #{transformer_forward.3} parent=31 // pred_check_branch
          %363 = sbr.rel (%p361) target = $region52
        $region51: #{transformer_forward.3} parent=31 // pred_region
          %p364 = scmp.lt.s32.totalorder %s21, 1
          %s365 = scalar_select %p364, %s21, 1
          %s366 = smul.addr %s365, 2
          %s367 = scalar_lea.vmem %s8, %s366
        $region52: #{transformer_forward.3} parent=31 // pred_fallthru
          _
      $region32: #{transformer_forward.3} parent=5 // pred_fallthru
        _
      %p368 = scmp.le.s32.totalorder 1, %s21
      %p369 = scmp.lt.s32.totalorder %s21, 3
      %p370 = pnand %p368, %p369
      %p371 = pneg %p370
      // Predicated region
      $region53: #{transformer_forward.3} parent=5 // pred_check
        _
      $region54: #{transformer_forward.3} parent=5 // pred_check_branch
        %373 = sbr.rel (%p370) target = $region56
      $region55: #{transformer_forward.3} parent=5 // pred_region
        %s374 = ssub.s32 %s21, 1
        %s375 = sand.u32 %s118, 1
        %s376 = scalar_lea.sflag [#allocation3], %s375
        %s377 = sand.u32 %s118, 1
        %s378 = smul.addr %s377, 512
        %s379 = scalar_lea.vmem [#allocation2], %s378
        // Predicated region
        $region57: #{transformer_forward.3} parent=55 // pred_check
          %p380 = pneg %p131
        $region58: #{transformer_forward.3} parent=55 // pred_check_branch
          %382 = sbr.rel (%p380) target = $region60
        $region59: #{transformer_forward.3} parent=55 // pred_region
          %384 = dma.done %s376, 8192
        $region60: #{transformer_forward.3} parent=55 // pred_fallthru
          _
        %s385 = sand.u32 %s26, 1
        %s386 = scalar_lea.sflag [#allocation5], %s385
        %s387 = sand.u32 %s144, 1
        %s388 = smul.addr %s387, 128
        %s389 = scalar_lea.vmem [#allocation4], %s388
        // Predicated region
        $region61: #{transformer_forward.3} parent=55 // pred_check
          %p390 = pneg %p157
        $region62: #{transformer_forward.3} parent=55 // pred_check_branch
          %392 = sbr.rel (%p390) target = $region64
        $region63: #{transformer_forward.3} parent=55 // pred_region
          %394 = dma.done %s386, 2048
        $region64: #{transformer_forward.3} parent=55 // pred_fallthru
          _
        %s395 = sand.u32 %s26, 1
        %s396 = scalar_lea.sflag [#allocation5], %s395
        %s397 = sand.u32 %s170, 1
        %s398 = smul.addr %s397, 128
        %s399 = scalar_lea.vmem [#allocation6], %s398
        // Predicated region
        $region65: #{transformer_forward.3} parent=55 // pred_check
          %p400 = pneg %p183
        $region66: #{transformer_forward.3} parent=55 // pred_check_branch
          %402 = sbr.rel (%p400) target = $region68
        $region67: #{transformer_forward.3} parent=55 // pred_region
          %404 = dma.done %s396, 2048
        $region68: #{transformer_forward.3} parent=55 // pred_fallthru
          _
        %p405 = pneg %p42
        %p406 = pneg %p39
        %p407 = pneg %p63
        %p408 = pneg %p60
        %p409 = pneg %p84
        %p410 = pneg %p81
        %p411 = pneg %p105
        %p412 = pneg %p102
        %s413 = sand.u32 %s118, 1
        %s414 = scalar_lea.sflag [#allocation3], %s413
        %s415 = sand.u32 %s118, 1
        %s416 = smul.addr %s415, 512
        %s417 = scalar_lea.vmem [#allocation2], %s416
        %p418 = pneg %p131
        %p419 = pneg %p128
        %s420 = sand.u32 %s26, 1
        %s421 = scalar_lea.sflag [#allocation5], %s420
        %s422 = sand.u32 %s144, 1
        %s423 = smul.addr %s422, 128
        %s424 = scalar_lea.vmem [#allocation4], %s423
        %p425 = pneg %p157
        %p426 = pneg %p154
        %s427 = sand.u32 %s26, 1
        %s428 = scalar_lea.sflag [#allocation5], %s427
        %s429 = sand.u32 %s170, 1
        %s430 = smul.addr %s429, 128
        %s431 = scalar_lea.vmem [#allocation6], %s430
        %p432 = pneg %p183
        %p433 = pneg %p180
        %p434 = scmp.lt.s32.totalorder %s26, 1
        %s435 = scalar_select %p434, %s26, 1
        %s436 = smul.addr %s435, 2
        %s437 = smul.addr %s436, 8
        %s438 = scalar_lea.vmem %s7, %s437
        %p439 = pneg %p209
        %p440 = pneg %p206
        %p441 = scmp.lt.s32.totalorder %s26, 1
        %s442 = scalar_select %p441, %s26, 1
        %s443 = smul.addr %s442, 2
        %s444 = scalar_lea.vmem %s8, %s443
        %p445 = pneg %p235
        %p446 = pneg %p232
        %p447 = pneg %p256
        %p448 = pneg %p253
        %p449 = scmp.lt.s32.totalorder %s26, 1
        %s450 = scalar_select %p449, %s26, 1
        %s451 = smul.addr %s450, 2
        %s452 = smul.addr %s451, 8
        %s453 = scalar_lea.vmem %s7, %s452
        %p454 = scmp.lt.s32.totalorder %s26, 1
        %s455 = scalar_select %p454, %s26, 1
        %s456 = smul.addr %s455, 2
        %s457 = scalar_lea.vmem %s8, %s456
        %p459 = scmp.eq.s32.totalorder %s26, 0
        // Predicated region
        $region69: #{transformer_forward.3} parent=55 // pred_check
          %p460 = pneg %p459
        $region70: #{transformer_forward.3} parent=55 // pred_check_branch
          %462 = sbr.rel (%p460) target = $region72
        $region71: #{transformer_forward.3} parent=55 // pred_region
          %463 = vst [vmem:[%s9] sm:$0xf] 0.0
        $region72: #{transformer_forward.3} parent=55 // pred_fallthru
          _
        %v464 = vld [vmem:[%s9] sm:$0xf]
        %v465 = vld [vmem:[%s0] sm:$0xf]
        %v466 = vld [vmem:[%s1] sm:$0xf]
        %v467 = vld [vmem:[%s2] sm:$0xf]
        %v468 = vld [vmem:[%s3] sm:$0xf]
        %s469 = scalar_lea.vmem %s3, 4
        %v470 = vld [vmem:[%s469] sm:$0xf]
        %v471 = vld [vmem:[%s379] sm:$0xff]
        %v472 = vld [vmem:[%s379 + $0x8] sm:$0xff]
        %v473 = vld [vmem:[%s379 + $0x10] sm:$0xff]
        %v474 = vld [vmem:[%s379 + $0x18] sm:$0xff]
        %v475 = vld [vmem:[%s379 + $0x20] sm:$0xff]
        %v476 = vld [vmem:[%s379 + $0x28] sm:$0xff]
        %v477 = vld [vmem:[%s379 + $0x30] sm:$0xff]
        %v478 = vld [vmem:[%s379 + $0x38] sm:$0xff]
        %v479 = vld [vmem:[%s379 + $0x40] sm:$0xff]
        %v480 = vld [vmem:[%s379 + $0x48] sm:$0xff]
        %v481 = vld [vmem:[%s379 + $0x50] sm:$0xff]
        %v482 = vld [vmem:[%s379 + $0x58] sm:$0xff]
        %v483 = vld [vmem:[%s379 + $0x60] sm:$0xff]
        %v484 = vld [vmem:[%s379 + $0x68] sm:$0xff]
        %v485 = vld [vmem:[%s379 + $0x70] sm:$0xff]
        %v486 = vld [vmem:[%s379 + $0x78] sm:$0xff]
        %v487 = vld [vmem:[%s379 + $0x80] sm:$0xff]
        %v488 = vld [vmem:[%s379 + $0x88] sm:$0xff]
        %v489 = vld [vmem:[%s379 + $0x90] sm:$0xff]
        %v490 = vld [vmem:[%s379 + $0x98] sm:$0xff]
        %v491 = vld [vmem:[%s379 + $0xa0] sm:$0xff]
        %v492 = vld [vmem:[%s379 + $0xa8] sm:$0xff]
        %v493 = vld [vmem:[%s379 + $0xb0] sm:$0xff]
        %v494 = vld [vmem:[%s379 + $0xb8] sm:$0xff]
        %v495 = vld [vmem:[%s379 + $0xc0] sm:$0xff]
        %v496 = vld [vmem:[%s379 + $0xc8] sm:$0xff]
        %v497 = vld [vmem:[%s379 + $0xd0] sm:$0xff]
        %v498 = vld [vmem:[%s379 + $0xd8] sm:$0xff]
        %v499 = vld [vmem:[%s379 + $0xe0] sm:$0xff]
        %v500 = vld [vmem:[%s379 + $0xe8] sm:$0xff]
        %v501 = vld [vmem:[%s379 + $0xf0] sm:$0xff]
        %v502 = vld [vmem:[%s379 + $0xf8] sm:$0xff]
        %v503 = vld [vmem:[%s379 + $0x100] sm:$0xff]
        %v504 = vld [vmem:[%s379 + $0x108] sm:$0xff]
        %v505 = vld [vmem:[%s379 + $0x110] sm:$0xff]
        %v506 = vld [vmem:[%s379 + $0x118] sm:$0xff]
        %v507 = vld [vmem:[%s379 + $0x120] sm:$0xff]
        %v508 = vld [vmem:[%s379 + $0x128] sm:$0xff]
        %v509 = vld [vmem:[%s379 + $0x130] sm:$0xff]
        %v510 = vld [vmem:[%s379 + $0x138] sm:$0xff]
        %v511 = vld [vmem:[%s379 + $0x140] sm:$0xff]
        %v512 = vld [vmem:[%s379 + $0x148] sm:$0xff]
        %v513 = vld [vmem:[%s379 + $0x150] sm:$0xff]
        %v514 = vld [vmem:[%s379 + $0x158] sm:$0xff]
        %v515 = vld [vmem:[%s379 + $0x160] sm:$0xff]
        %v516 = vld [vmem:[%s379 + $0x168] sm:$0xff]
        %v517 = vld [vmem:[%s379 + $0x170] sm:$0xff]
        %v518 = vld [vmem:[%s379 + $0x178] sm:$0xff]
        %v519 = vld [vmem:[%s379 + $0x180] sm:$0xff]
        %v520 = vld [vmem:[%s379 + $0x188] sm:$0xff]
        %v521 = vld [vmem:[%s379 + $0x190] sm:$0xff]
        %v522 = vld [vmem:[%s379 + $0x198] sm:$0xff]
        %v523 = vld [vmem:[%s379 + $0x1a0] sm:$0xff]
        %v524 = vld [vmem:[%s379 + $0x1a8] sm:$0xff]
        %v525 = vld [vmem:[%s379 + $0x1b0] sm:$0xff]
        %v526 = vld [vmem:[%s379 + $0x1b8] sm:$0xff]
        %v527 = vld [vmem:[%s379 + $0x1c0] sm:$0xff]
        %v528 = vld [vmem:[%s379 + $0x1c8] sm:$0xff]
        %v529 = vld [vmem:[%s379 + $0x1d0] sm:$0xff]
        %v530 = vld [vmem:[%s379 + $0x1d8] sm:$0xff]
        %v531 = vld [vmem:[%s379 + $0x1e0] sm:$0xff]
        %v532 = vld [vmem:[%s379 + $0x1e8] sm:$0xff]
        %v533 = vld [vmem:[%s379 + $0x1f0] sm:$0xff]
        %v534 = vld [vmem:[%s379 + $0x1f8] sm:$0xff]
        %v535 = vld [vmem:[%s389] sm:$0xff]
        %v536 = vld [vmem:[%s389 + $0x8] sm:$0xff]
        %v537 = vld [vmem:[%s389 + $0x10] sm:$0xff]
        %v538 = vld [vmem:[%s389 + $0x18] sm:$0xff]
        %v539 = vld [vmem:[%s389 + $0x20] sm:$0xff]
        %v540 = vld [vmem:[%s389 + $0x28] sm:$0xff]
        %v541 = vld [vmem:[%s389 + $0x30] sm:$0xff]
        %v542 = vld [vmem:[%s389 + $0x38] sm:$0xff]
        %v543 = vld [vmem:[%s389 + $0x40] sm:$0xff]
        %v544 = vld [vmem:[%s389 + $0x48] sm:$0xff]
        %v545 = vld [vmem:[%s389 + $0x50] sm:$0xff]
        %v546 = vld [vmem:[%s389 + $0x58] sm:$0xff]
        %v547 = vld [vmem:[%s389 + $0x60] sm:$0xff]
        %v548 = vld [vmem:[%s389 + $0x68] sm:$0xff]
        %v549 = vld [vmem:[%s389 + $0x70] sm:$0xff]
        %v550 = vld [vmem:[%s389 + $0x78] sm:$0xff]
        %v551 = vld [vmem:[%s399] sm:$0xf]
        %v552 = vld [vmem:[%s399 + $0x4] sm:$0xf]
        %v553 = vld [vmem:[%s399 + $0x8] sm:$0xf]
        %v554 = vld [vmem:[%s399 + $0xc] sm:$0xf]
        %v555 = vld [vmem:[%s399 + $0x10] sm:$0xf]
        %v556 = vld [vmem:[%s399 + $0x14] sm:$0xf]
        %v557 = vld [vmem:[%s399 + $0x18] sm:$0xf]
        %v558 = vld [vmem:[%s399 + $0x1c] sm:$0xf]
        %v559 = vld [vmem:[%s399 + $0x20] sm:$0xf]
        %v560 = vld [vmem:[%s399 + $0x24] sm:$0xf]
        %v561 = vld [vmem:[%s399 + $0x28] sm:$0xf]
        %v562 = vld [vmem:[%s399 + $0x2c] sm:$0xf]
        %v563 = vld [vmem:[%s399 + $0x30] sm:$0xf]
        %v564 = vld [vmem:[%s399 + $0x34] sm:$0xf]
        %v565 = vld [vmem:[%s399 + $0x38] sm:$0xf]
        %v566 = vld [vmem:[%s399 + $0x3c] sm:$0xf]
        %v567 = vld [vmem:[%s399 + $0x40] sm:$0xf]
        %v568 = vld [vmem:[%s399 + $0x44] sm:$0xf]
        %v569 = vld [vmem:[%s399 + $0x48] sm:$0xf]
        %v570 = vld [vmem:[%s399 + $0x4c] sm:$0xf]
        %v571 = vld [vmem:[%s399 + $0x50] sm:$0xf]
        %v572 = vld [vmem:[%s399 + $0x54] sm:$0xf]
        %v573 = vld [vmem:[%s399 + $0x58] sm:$0xf]
        %v574 = vld [vmem:[%s399 + $0x5c] sm:$0xf]
        %v575 = vld [vmem:[%s399 + $0x60] sm:$0xf]
        %v576 = vld [vmem:[%s399 + $0x64] sm:$0xf]
        %v577 = vld [vmem:[%s399 + $0x68] sm:$0xf]
        %v578 = vld [vmem:[%s399 + $0x6c] sm:$0xf]
        %v579 = vld [vmem:[%s399 + $0x70] sm:$0xf]
        %v580 = vld [vmem:[%s399 + $0x74] sm:$0xf]
        %v581 = vld [vmem:[%s399 + $0x78] sm:$0xf]
        %v582 = vld [vmem:[%s399 + $0x7c] sm:$0xf]
        %v583 = vld [vmem:[%s457] sm:$0x3]
        %v584 = vld [vmem:[%s453] sm:$0xff]
        %v585 = vld [vmem:[%s453 + $0x8] sm:$0x7f]
        %vm586 = vcmask 1043456
        %v587 = vsel %vm586, %v464, 0.0
        %588 = vadd.xlane.f32.xlu0 %v587
        %v589 = vpop.xlane.xlu0 %588
        %v590 = vrcp.pop 128.0
        %v591 = vmul.f32 128.0, %v590
        %v592 = vsub.f32 1.0, %v591
        %v593 = vmul.f32 %v590, %v592
        %v594 = vadd.f32 %v590, %v593
        %vm595 = vweird.f32 %v590
        %v596 = vsel %vm595, %v590, %v594
        %v597 = vmul.f32 %v589, %v596
        %v598 = vsub.f32 %v464, %v597
        %v599 = vmul.f32 %v598, %v598
        %v600 = vsel %vm586, %v599, 0.0
        %601 = vadd.xlane.f32.xlu0 %v600
        %v602 = vpop.xlane.xlu0 %601
        %v603 = vrcp.pop 127.0
        %v604 = vmul.f32 127.0, %v603
        %v605 = vsub.f32 1.0, %v604
        %v606 = vmul.f32 %v603, %v605
        %v607 = vadd.f32 %v603, %v606
        %vm608 = vweird.f32 %v603
        %v609 = vsel %vm608, %v603, %v607
        %v610 = vmul.f32 %v602, %v609
        %v611 = vrsqrt.pop %v610
        %v612 = vmul.f32 %v611, %v610
        %v613 = vmul.f32 %v612, %v611
        %v614 = vmul.f32 0.5, %v613
        %v615 = vsub.f32 1.5, %v614
        %v616 = vmul.f32 %v611, %v615
        %v617 = vmul.f32 %v610, %v616
        %vm618 = vcmp.eq.f32.partialorder %v610, inf
        %v619 = vsel %vm618, %v610, %v617
        %vm620 = vcmp.eq.f32.partialorder %v610, 0.0
        %v621 = vand.u32 %v610, 2147483648
        %v622 = vsel %vm620, %v621, %v619
        %v623 = vadd.f32 %v622, 1e-06
        %v624 = vrcp.pop %v623
        %v625 = vmul.f32 %v598, %v624
        %v626 = vperm.slane %v584, 0
        %v627 = vmul.f32 %v626, %v625
        %v628 = vperm.slane %v584, 1
        %v629 = vadd.f32 %v627, %v628
        %v630 = vadd.f32 %v629, %v466
        %v631 = vpack.c.bf16 %v630, %v630
        %v648 = vunpack.c.l.b16 %v471
        %v649 = vunpack.c.h.b16 %v471
        %v650 = vunpack.c.l.b16 %v475
        %v651 = vunpack.c.h.b16 %v475
        %v652 = vunpack.c.l.b16 %v479
        %v653 = vunpack.c.h.b16 %v479
        %v654 = vunpack.c.l.b16 %v483
        %v655 = vunpack.c.h.b16 %v483
        %v656 = vunpack.c.l.b16 %v487
        %v657 = vunpack.c.h.b16 %v487
        %v658 = vunpack.c.l.b16 %v491
        %v659 = vunpack.c.h.b16 %v491
        %v660 = vunpack.c.l.b16 %v495
        %v661 = vunpack.c.h.b16 %v495
        %v662 = vunpack.c.l.b16 %v499
        %v663 = vunpack.c.h.b16 %v499
        %v664 = vunpack.c.l.b16 %v503
        %v665 = vunpack.c.h.b16 %v503
        %v666 = vunpack.c.l.b16 %v507
        %v667 = vunpack.c.h.b16 %v507
        %v668 = vunpack.c.l.b16 %v511
        %v669 = vunpack.c.h.b16 %v511
        %v670 = vunpack.c.l.b16 %v515
        %v671 = vunpack.c.h.b16 %v515
        %v672 = vunpack.c.l.b16 %v519
        %v673 = vunpack.c.h.b16 %v519
        %v674 = vunpack.c.l.b16 %v523
        %v675 = vunpack.c.h.b16 %v523
        %v676 = vunpack.c.l.b16 %v527
        %v677 = vunpack.c.h.b16 %v527
        %v678 = vunpack.c.l.b16 %v531
        %v679 = vunpack.c.h.b16 %v531
        %v680 = vpack.c.b16 %v650, %v648
        %v681 = vpack.c.b16 %v651, %v649
        %v682 = vpack.c.b16 %v654, %v652
        %v683 = vpack.c.b16 %v655, %v653
        %v684 = vpack.c.b16 %v658, %v656
        %v685 = vpack.c.b16 %v659, %v657
        %v686 = vpack.c.b16 %v662, %v660
        %v687 = vpack.c.b16 %v663, %v661
        %v688 = vpack.c.b16 %v666, %v664
        %v689 = vpack.c.b16 %v667, %v665
        %v690 = vpack.c.b16 %v670, %v668
        %v691 = vpack.c.b16 %v671, %v669
        %v692 = vpack.c.b16 %v674, %v672
        %v693 = vpack.c.b16 %v675, %v673
        %v694 = vpack.c.b16 %v678, %v676
        %v695 = vpack.c.b16 %v679, %v677
        %712 = vmatpush.bf16.msra.mxu0 %v694
        %713 = vmatpush.bf16.msra.mxu0 %v692
        %714 = vmatpush.bf16.msra.mxu0 %v690
        %715 = vmatpush.bf16.msra.mxu0 %v688
        %716 = vmatpush.bf16.msra.mxu0 %v686
        %717 = vmatpush.bf16.msra.mxu0 %v684
        %718 = vmatpush.bf16.msra.mxu0 %v682
        %719 = vmatpush.bf16.msra.mxu0 %v680
        %720 = vmatmul.bf16.gmra.mxu0 %v631
        %v721 = vpop.f32.mrf.mxu0
        %v722 = vadd.f32 0.0, %v721
        %v723 = vpop.f32.mrf.mxu0
        %724 = vdwg.mxu0
        %725 = vmatpush.bf16.msra.mxu0 %v695
        %726 = vmatpush.bf16.msra.mxu0 %v693
        %727 = vmatpush.bf16.msra.mxu0 %v691
        %728 = vmatpush.bf16.msra.mxu0 %v689
        %729 = vmatpush.bf16.msra.mxu0 %v687
        %730 = vmatpush.bf16.msra.mxu0 %v685
        %731 = vmatpush.bf16.msra.mxu0 %v683
        %732 = vmatpush.bf16.msra.mxu0 %v681
        %733 = vmatmul.bf16.gmra.mxu0 %v631
        %v734 = vpop.f32.mrf.mxu0
        %v735 = vadd.f32 0.0, %v734
        %v736 = vpop.f32.mrf.mxu0
        %737 = vdwg.mxu0
        %v738 = vperm.slane %v584, 6
        %v739 = vadd.f32 %v722, %v738
        %v740 = vperm.slane %v584, 7
        %v741 = vadd.f32 %v735, %v740
        %v742 = vpack.c.bf16 %v464, %v464
        %v743 = vperm.slane %v585, 0
        %v760 = vunpack.c.l.b16 %v472
        %v761 = vunpack.c.l.b16 %v476
        %v762 = vunpack.c.l.b16 %v480
        %v763 = vunpack.c.l.b16 %v484
        %v764 = vunpack.c.l.b16 %v488
        %v765 = vunpack.c.l.b16 %v492
        %v766 = vunpack.c.l.b16 %v496
        %v767 = vunpack.c.l.b16 %v500
        %v768 = vunpack.c.l.b16 %v504
        %v769 = vunpack.c.l.b16 %v508
        %v770 = vunpack.c.l.b16 %v512
        %v771 = vunpack.c.l.b16 %v516
        %v772 = vunpack.c.l.b16 %v520
        %v773 = vunpack.c.l.b16 %v524
        %v774 = vunpack.c.l.b16 %v528
        %v775 = vunpack.c.l.b16 %v532
        %v776 = vpack.c.b16 %v761, %v760
        %v777 = vpack.c.b16 %v763, %v762
        %v778 = vpack.c.b16 %v765, %v764
        %v779 = vpack.c.b16 %v767, %v766
        %v780 = vpack.c.b16 %v769, %v768
        %v781 = vpack.c.b16 %v771, %v770
        %v782 = vpack.c.b16 %v773, %v772
        %v783 = vpack.c.b16 %v775, %v774
        %792 = vmatpush.bf16.msra.mxu0 %v783
        %793 = vmatpush.bf16.msra.mxu0 %v782
        %794 = vmatpush.bf16.msra.mxu0 %v781
        %795 = vmatpush.bf16.msra.mxu0 %v780
        %796 = vmatpush.bf16.msra.mxu0 %v779
        %797 = vmatpush.bf16.msra.mxu0 %v778
        %798 = vmatpush.bf16.msra.mxu0 %v777
        %799 = vmatpush.bf16.msra.mxu0 %v776
        %800 = vmatmul.bf16.gmra.mxu0 %v742
        %v801 = vpop.f32.mrf.mxu0
        %v802 = vadd.f32 %v743, %v801
        %v803 = vpop.f32.mrf.mxu0
        %804 = vdwg.mxu0
        %806 = vrot.lane.b32.xlu0 %v739, 112
        %v807 = vpop.permute.xlu0 %806
        %809 = vrot.lane.b32.xlu0 %v739, 96
        %v810 = vpop.permute.xlu0 %809
        %812 = vrot.lane.b32.xlu0 %v739, 80
        %v813 = vpop.permute.xlu0 %812
        %815 = vrot.lane.b32.xlu0 %v739, 64
        %v816 = vpop.permute.xlu0 %815
        %818 = vrot.lane.b32.xlu0 %v739, 48
        %v819 = vpop.permute.xlu0 %818
        %821 = vrot.lane.b32.xlu0 %v739, 32
        %v822 = vpop.permute.xlu0 %821
        %824 = vrot.lane.b32.xlu0 %v739, 16
        %v825 = vpop.permute.xlu0 %824
        %828 = vrot.lane.b32.xlu0 %v741, 112
        %v829 = vpop.permute.xlu0 %828
        %831 = vrot.lane.b32.xlu0 %v741, 96
        %v832 = vpop.permute.xlu0 %831
        %834 = vrot.lane.b32.xlu0 %v741, 80
        %v835 = vpop.permute.xlu0 %834
        %837 = vrot.lane.b32.xlu0 %v741, 64
        %v838 = vpop.permute.xlu0 %837
        %840 = vrot.lane.b32.xlu0 %v741, 48
        %v841 = vpop.permute.xlu0 %840
        %843 = vrot.lane.b32.xlu0 %v741, 32
        %v844 = vpop.permute.xlu0 %843
        %846 = vrot.lane.b32.xlu0 %v741, 16
        %v847 = vpop.permute.xlu0 %846
        %850 = vrot.lane.b32.xlu0 %v802, 112
        %v851 = vpop.permute.xlu0 %850
        %853 = vrot.lane.b32.xlu0 %v802, 96
        %v854 = vpop.permute.xlu0 %853
        %856 = vrot.lane.b32.xlu0 %v802, 80
        %v857 = vpop.permute.xlu0 %856
        %859 = vrot.lane.b32.xlu0 %v802, 64
        %v860 = vpop.permute.xlu0 %859
        %862 = vrot.lane.b32.xlu0 %v802, 48
        %v863 = vpop.permute.xlu0 %862
        %865 = vrot.lane.b32.xlu0 %v802, 32
        %v866 = vpop.permute.xlu0 %865
        %868 = vrot.lane.b32.xlu0 %v802, 16
        %v869 = vpop.permute.xlu0 %868
        %v871 = vpack.c.bf16 %v739, %v739
        %v872 = vpack.c.bf16 %v807, %v807
        %v873 = vpack.c.bf16 %v810, %v810
        %v874 = vpack.c.bf16 %v813, %v813
        %v875 = vpack.c.bf16 %v816, %v816
        %v876 = vpack.c.bf16 %v819, %v819
        %v877 = vpack.c.bf16 %v822, %v822
        %v878 = vpack.c.bf16 %v825, %v825
        %v879 = vpack.c.bf16 %v741, %v741
        %v880 = vpack.c.bf16 %v829, %v829
        %v881 = vpack.c.bf16 %v832, %v832
        %v882 = vpack.c.bf16 %v835, %v835
        %v883 = vpack.c.bf16 %v838, %v838
        %v884 = vpack.c.bf16 %v841, %v841
        %v885 = vpack.c.bf16 %v844, %v844
        %v886 = vpack.c.bf16 %v847, %v847
        %vm887 = vcmask 130048
        %v889 = vsel %vm887, %v871, 0
        %v892 = vsel %vm887, %v879, 0
        %894 = vmatpush.bf16.xpose.msra.mxu0 0
        %895 = vmatpush.bf16.xpose.msra.mxu0 0
        %896 = vmatpush.bf16.xpose.msra.mxu0 0
        %897 = vmatpush.bf16.xpose.msra.mxu0 0
        %898 = vmatpush.bf16.xpose.msra.mxu0 0
        %899 = vmatpush.bf16.xpose.msra.mxu0 0
        %900 = vmatpush.bf16.xpose.msra.mxu0 0
        %901 = vmatpush.bf16.xpose.msra.mxu0 %v892
        %902 = vmatmul.bf16.gmra.mxu0 %v889
        %v903 = vpop.f32.mrf.mxu0
        %v904 = vadd.f32 0.0, %v903
        %v905 = vpop.f32.mrf.mxu0
        %906 = vdwg.mxu0
        %v908 = vsel %vm887, %v872, 0
        %v911 = vsel %vm887, %v880, 0
        %913 = vmatpush.bf16.xpose.msra.mxu0 0
        %914 = vmatpush.bf16.xpose.msra.mxu0 0
        %915 = vmatpush.bf16.xpose.msra.mxu0 0
        %916 = vmatpush.bf16.xpose.msra.mxu0 0
        %917 = vmatpush.bf16.xpose.msra.mxu0 0
        %918 = vmatpush.bf16.xpose.msra.mxu0 0
        %919 = vmatpush.bf16.xpose.msra.mxu0 0
        %920 = vmatpush.bf16.xpose.msra.mxu0 %v911
        %921 = vmatmul.bf16.gmra.mxu0 %v908
        %v922 = vpop.f32.mrf.mxu0
        %v923 = vadd.f32 0.0, %v922
        %v924 = vpop.f32.mrf.mxu0
        %925 = vdwg.mxu0
        %v927 = vsel %vm887, %v873, 0
        %v930 = vsel %vm887, %v881, 0
        %932 = vmatpush.bf16.xpose.msra.mxu0 0
        %933 = vmatpush.bf16.xpose.msra.mxu0 0
        %934 = vmatpush.bf16.xpose.msra.mxu0 0
        %935 = vmatpush.bf16.xpose.msra.mxu0 0
        %936 = vmatpush.bf16.xpose.msra.mxu0 0
        %937 = vmatpush.bf16.xpose.msra.mxu0 0
        %938 = vmatpush.bf16.xpose.msra.mxu0 0
        %939 = vmatpush.bf16.xpose.msra.mxu0 %v930
        %940 = vmatmul.bf16.gmra.mxu0 %v927
        %v941 = vpop.f32.mrf.mxu0
        %v942 = vadd.f32 0.0, %v941
        %v943 = vpop.f32.mrf.mxu0
        %944 = vdwg.mxu0
        %v946 = vsel %vm887, %v874, 0
        %v949 = vsel %vm887, %v882, 0
        %951 = vmatpush.bf16.xpose.msra.mxu0 0
        %952 = vmatpush.bf16.xpose.msra.mxu0 0
        %953 = vmatpush.bf16.xpose.msra.mxu0 0
        %954 = vmatpush.bf16.xpose.msra.mxu0 0
        %955 = vmatpush.bf16.xpose.msra.mxu0 0
        %956 = vmatpush.bf16.xpose.msra.mxu0 0
        %957 = vmatpush.bf16.xpose.msra.mxu0 0
        %958 = vmatpush.bf16.xpose.msra.mxu0 %v949
        %959 = vmatmul.bf16.gmra.mxu0 %v946
        %v960 = vpop.f32.mrf.mxu0
        %v961 = vadd.f32 0.0, %v960
        %v962 = vpop.f32.mrf.mxu0
        %963 = vdwg.mxu0
        %v965 = vsel %vm887, %v875, 0
        %v968 = vsel %vm887, %v883, 0
        %970 = vmatpush.bf16.xpose.msra.mxu0 0
        %971 = vmatpush.bf16.xpose.msra.mxu0 0
        %972 = vmatpush.bf16.xpose.msra.mxu0 0
        %973 = vmatpush.bf16.xpose.msra.mxu0 0
        %974 = vmatpush.bf16.xpose.msra.mxu0 0
        %975 = vmatpush.bf16.xpose.msra.mxu0 0
        %976 = vmatpush.bf16.xpose.msra.mxu0 0
        %977 = vmatpush.bf16.xpose.msra.mxu0 %v968
        %978 = vmatmul.bf16.gmra.mxu0 %v965
        %v979 = vpop.f32.mrf.mxu0
        %v980 = vadd.f32 0.0, %v979
        %v981 = vpop.f32.mrf.mxu0
        %982 = vdwg.mxu0
        %v984 = vsel %vm887, %v876, 0
        %v987 = vsel %vm887, %v884, 0
        %989 = vmatpush.bf16.xpose.msra.mxu0 0
        %990 = vmatpush.bf16.xpose.msra.mxu0 0
        %991 = vmatpush.bf16.xpose.msra.mxu0 0
        %992 = vmatpush.bf16.xpose.msra.mxu0 0
        %993 = vmatpush.bf16.xpose.msra.mxu0 0
        %994 = vmatpush.bf16.xpose.msra.mxu0 0
        %995 = vmatpush.bf16.xpose.msra.mxu0 0
        %996 = vmatpush.bf16.xpose.msra.mxu0 %v987
        %997 = vmatmul.bf16.gmra.mxu0 %v984
        %v998 = vpop.f32.mrf.mxu0
        %v999 = vadd.f32 0.0, %v998
        %v1000 = vpop.f32.mrf.mxu0
        %1001 = vdwg.mxu0
        %v1003 = vsel %vm887, %v877, 0
        %v1006 = vsel %vm887, %v885, 0
        %1008 = vmatpush.bf16.xpose.msra.mxu0 0
        %1009 = vmatpush.bf16.xpose.msra.mxu0 0
        %1010 = vmatpush.bf16.xpose.msra.mxu0 0
        %1011 = vmatpush.bf16.xpose.msra.mxu0 0
        %1012 = vmatpush.bf16.xpose.msra.mxu0 0
        %1013 = vmatpush.bf16.xpose.msra.mxu0 0
        %1014 = vmatpush.bf16.xpose.msra.mxu0 0
        %1015 = vmatpush.bf16.xpose.msra.mxu0 %v1006
        %1016 = vmatmul.bf16.gmra.mxu0 %v1003
        %v1017 = vpop.f32.mrf.mxu0
        %v1018 = vadd.f32 0.0, %v1017
        %v1019 = vpop.f32.mrf.mxu0
        %1020 = vdwg.mxu0
        %v1022 = vsel %vm887, %v878, 0
        %v1025 = vsel %vm887, %v886, 0
        %1027 = vmatpush.bf16.xpose.msra.mxu0 0
        %1028 = vmatpush.bf16.xpose.msra.mxu0 0
        %1029 = vmatpush.bf16.xpose.msra.mxu0 0
        %1030 = vmatpush.bf16.xpose.msra.mxu0 0
        %1031 = vmatpush.bf16.xpose.msra.mxu0 0
        %1032 = vmatpush.bf16.xpose.msra.mxu0 0
        %1033 = vmatpush.bf16.xpose.msra.mxu0 0
        %1034 = vmatpush.bf16.xpose.msra.mxu0 %v1025
        %1035 = vmatmul.bf16.gmra.mxu0 %v1022
        %v1036 = vpop.f32.mrf.mxu0
        %v1037 = vadd.f32 0.0, %v1036
        %v1038 = vpop.f32.mrf.mxu0
        %1039 = vdwg.mxu0
        %v1040 = vmul.f32 %v904, 0.25
        %v1041 = vmul.f32 %v923, 0.25
        %v1042 = vmul.f32 %v942, 0.25
        %v1043 = vmul.f32 %v961, 0.25
        %v1044 = vmul.f32 %v980, 0.25
        %v1045 = vmul.f32 %v999, 0.25
        %v1046 = vmul.f32 %v1018, 0.25
        %v1047 = vmul.f32 %v1037, 0.25
        %vm1048 = vcmask 27648
        %v1049 = vsel %vm1048, %v1040, -inf
        %1050 = vmax.xlane.f32.xlu0 %v1049
        %v1051 = vpop.xlane.xlu0 %1050
        %v1052 = vsel %vm1048, %v1041, -inf
        %1053 = vmax.xlane.f32.xlu0 %v1052
        %v1054 = vpop.xlane.xlu0 %1053
        %v1055 = vsel %vm1048, %v1042, -inf
        %1056 = vmax.xlane.f32.xlu0 %v1055
        %v1057 = vpop.xlane.xlu0 %1056
        %v1058 = vsel %vm1048, %v1043, -inf
        %1059 = vmax.xlane.f32.xlu0 %v1058
        %v1060 = vpop.xlane.xlu0 %1059
        %v1061 = vsel %vm1048, %v1044, -inf
        %1062 = vmax.xlane.f32.xlu0 %v1061
        %v1063 = vpop.xlane.xlu0 %1062
        %v1064 = vsel %vm1048, %v1045, -inf
        %1065 = vmax.xlane.f32.xlu0 %v1064
        %v1066 = vpop.xlane.xlu0 %1065
        %v1067 = vsel %vm1048, %v1046, -inf
        %1068 = vmax.xlane.f32.xlu0 %v1067
        %v1069 = vpop.xlane.xlu0 %1068
        %v1070 = vsel %vm1048, %v1047, -inf
        %1071 = vmax.xlane.f32.xlu0 %v1070
        %v1072 = vpop.xlane.xlu0 %1071
        %v1073 = vsub.f32 %v1040, %v1051
        %v1074 = vsub.f32 %v1041, %v1054
        %v1075 = vsub.f32 %v1042, %v1057
        %v1076 = vsub.f32 %v1043, %v1060
        %v1077 = vsub.f32 %v1044, %v1063
        %v1078 = vsub.f32 %v1045, %v1066
        %v1079 = vsub.f32 %v1046, %v1069
        %v1080 = vsub.f32 %v1047, %v1072
        %v1081 = vmul.f32 %v1073, 1.442695
        %v1082 = vpow.pop %v1081
        %v1083 = vmul.f32 %v1074, 1.442695
        %v1084 = vpow.pop %v1083
        %v1085 = vmul.f32 %v1075, 1.442695
        %v1086 = vpow.pop %v1085
        %v1087 = vmul.f32 %v1076, 1.442695
        %v1088 = vpow.pop %v1087
        %v1089 = vmul.f32 %v1077, 1.442695
        %v1090 = vpow.pop %v1089
        %v1091 = vmul.f32 %v1078, 1.442695
        %v1092 = vpow.pop %v1091
        %v1093 = vmul.f32 %v1079, 1.442695
        %v1094 = vpow.pop %v1093
        %v1095 = vmul.f32 %v1080, 1.442695
        %v1096 = vpow.pop %v1095
        %v1097 = vsel %vm1048, %v1082, 0.0
        %1098 = vadd.xlane.f32.xlu0 %v1097
        %v1099 = vpop.xlane.xlu0 %1098
        %v1100 = vsel %vm1048, %v1084, 0.0
        %1101 = vadd.xlane.f32.xlu0 %v1100
        %v1102 = vpop.xlane.xlu0 %1101
        %v1103 = vsel %vm1048, %v1086, 0.0
        %1104 = vadd.xlane.f32.xlu0 %v1103
        %v1105 = vpop.xlane.xlu0 %1104
        %v1106 = vsel %vm1048, %v1088, 0.0
        %1107 = vadd.xlane.f32.xlu0 %v1106
        %v1108 = vpop.xlane.xlu0 %1107
        %v1109 = vsel %vm1048, %v1090, 0.0
        %1110 = vadd.xlane.f32.xlu0 %v1109
        %v1111 = vpop.xlane.xlu0 %1110
        %v1112 = vsel %vm1048, %v1092, 0.0
        %1113 = vadd.xlane.f32.xlu0 %v1112
        %v1114 = vpop.xlane.xlu0 %1113
        %v1115 = vsel %vm1048, %v1094, 0.0
        %1116 = vadd.xlane.f32.xlu0 %v1115
        %v1117 = vpop.xlane.xlu0 %1116
        %v1118 = vsel %vm1048, %v1096, 0.0
        %1119 = vadd.xlane.f32.xlu0 %v1118
        %v1120 = vpop.xlane.xlu0 %1119
        %v1121 = vrcp.pop %v1099
        %v1122 = vrcp.pop %v1102
        %v1123 = vrcp.pop %v1105
        %v1124 = vrcp.pop %v1108
        %v1125 = vrcp.pop %v1111
        %v1126 = vrcp.pop %v1114
        %v1127 = vrcp.pop %v1117
        %v1128 = vrcp.pop %v1120
        %v1129 = vmul.f32 %v1082, %v1121
        %v1130 = vmul.f32 %v1084, %v1122
        %v1131 = vmul.f32 %v1086, %v1123
        %v1132 = vmul.f32 %v1088, %v1124
        %v1133 = vmul.f32 %v1090, %v1125
        %v1134 = vmul.f32 %v1092, %v1126
        %v1135 = vmul.f32 %v1094, %v1127
        %v1136 = vmul.f32 %v1096, %v1128
        %v1137 = vpack.c.bf16 %v1129, %v1129
        %v1138 = vpack.c.bf16 %v1130, %v1130
        %v1139 = vpack.c.bf16 %v1131, %v1131
        %v1140 = vpack.c.bf16 %v1132, %v1132
        %v1141 = vpack.c.bf16 %v1133, %v1133
        %v1142 = vpack.c.bf16 %v1134, %v1134
        %v1143 = vpack.c.bf16 %v1135, %v1135
        %v1144 = vpack.c.bf16 %v1136, %v1136
        %v1145 = vpack.c.bf16 %v802, %v802
        %v1146 = vpack.c.bf16 %v851, %v851
        %v1147 = vpack.c.bf16 %v854, %v854
        %v1148 = vpack.c.bf16 %v857, %v857
        %v1149 = vpack.c.bf16 %v860, %v860
        %v1150 = vpack.c.bf16 %v863, %v863
        %v1151 = vpack.c.bf16 %v866, %v866
        %v1152 = vpack.c.bf16 %v869, %v869
        %vm1153 = vcmask 31744
        %v1155 = vsel %vm1153, %v1137, 0
        %vm1157 = vcmask 1041408
        %v1159 = vsel %vm1157, %v1145, 0
        %1161 = vmatpush.bf16.msra.mxu0 0
        %1162 = vmatpush.bf16.msra.mxu0 0
        %1163 = vmatpush.bf16.msra.mxu0 0
        %1164 = vmatpush.bf16.msra.mxu0 0
        %1165 = vmatpush.bf16.msra.mxu0 0
        %1166 = vmatpush.bf16.msra.mxu0 0
        %1167 = vmatpush.bf16.msra.mxu0 0
        %1168 = vmatpush.bf16.msra.mxu0 %v1159
        %1169 = vmatmul.bf16.gmra.mxu0 %v1155
        %v1170 = vpop.f32.mrf.mxu0
        %v1171 = vadd.f32 0.0, %v1170
        %v1172 = vpop.f32.mrf.mxu0
        %1173 = vdwg.mxu0
        %v1175 = vsel %vm1153, %v1138, 0
        %v1178 = vsel %vm1157, %v1146, 0
        %1180 = vmatpush.bf16.msra.mxu0 0
        %1181 = vmatpush.bf16.msra.mxu0 0
        %1182 = vmatpush.bf16.msra.mxu0 0
        %1183 = vmatpush.bf16.msra.mxu0 0
        %1184 = vmatpush.bf16.msra.mxu0 0
        %1185 = vmatpush.bf16.msra.mxu0 0
        %1186 = vmatpush.bf16.msra.mxu0 0
        %1187 = vmatpush.bf16.msra.mxu0 %v1178
        %1188 = vmatmul.bf16.gmra.mxu0 %v1175
        %v1189 = vpop.f32.mrf.mxu0
        %v1190 = vadd.f32 0.0, %v1189
        %v1191 = vpop.f32.mrf.mxu0
        %1192 = vdwg.mxu0
        %v1194 = vsel %vm1153, %v1139, 0
        %v1197 = vsel %vm1157, %v1147, 0
        %1199 = vmatpush.bf16.msra.mxu0 0
        %1200 = vmatpush.bf16.msra.mxu0 0
        %1201 = vmatpush.bf16.msra.mxu0 0
        %1202 = vmatpush.bf16.msra.mxu0 0
        %1203 = vmatpush.bf16.msra.mxu0 0
        %1204 = vmatpush.bf16.msra.mxu0 0
        %1205 = vmatpush.bf16.msra.mxu0 0
        %1206 = vmatpush.bf16.msra.mxu0 %v1197
        %1207 = vmatmul.bf16.gmra.mxu0 %v1194
        %v1208 = vpop.f32.mrf.mxu0
        %v1209 = vadd.f32 0.0, %v1208
        %v1210 = vpop.f32.mrf.mxu0
        %1211 = vdwg.mxu0
        %v1213 = vsel %vm1153, %v1140, 0
        %v1216 = vsel %vm1157, %v1148, 0
        %1218 = vmatpush.bf16.msra.mxu0 0
        %1219 = vmatpush.bf16.msra.mxu0 0
        %1220 = vmatpush.bf16.msra.mxu0 0
        %1221 = vmatpush.bf16.msra.mxu0 0
        %1222 = vmatpush.bf16.msra.mxu0 0
        %1223 = vmatpush.bf16.msra.mxu0 0
        %1224 = vmatpush.bf16.msra.mxu0 0
        %1225 = vmatpush.bf16.msra.mxu0 %v1216
        %1226 = vmatmul.bf16.gmra.mxu0 %v1213
        %v1227 = vpop.f32.mrf.mxu0
        %v1228 = vadd.f32 0.0, %v1227
        %v1229 = vpop.f32.mrf.mxu0
        %1230 = vdwg.mxu0
        %v1232 = vsel %vm1153, %v1141, 0
        %v1235 = vsel %vm1157, %v1149, 0
        %1237 = vmatpush.bf16.msra.mxu0 0
        %1238 = vmatpush.bf16.msra.mxu0 0
        %1239 = vmatpush.bf16.msra.mxu0 0
        %1240 = vmatpush.bf16.msra.mxu0 0
        %1241 = vmatpush.bf16.msra.mxu0 0
        %1242 = vmatpush.bf16.msra.mxu0 0
        %1243 = vmatpush.bf16.msra.mxu0 0
        %1244 = vmatpush.bf16.msra.mxu0 %v1235
        %1245 = vmatmul.bf16.gmra.mxu0 %v1232
        %v1246 = vpop.f32.mrf.mxu0
        %v1247 = vadd.f32 0.0, %v1246
        %v1248 = vpop.f32.mrf.mxu0
        %1249 = vdwg.mxu0
        %v1251 = vsel %vm1153, %v1142, 0
        %v1254 = vsel %vm1157, %v1150, 0
        %1256 = vmatpush.bf16.msra.mxu0 0
        %1257 = vmatpush.bf16.msra.mxu0 0
        %1258 = vmatpush.bf16.msra.mxu0 0
        %1259 = vmatpush.bf16.msra.mxu0 0
        %1260 = vmatpush.bf16.msra.mxu0 0
        %1261 = vmatpush.bf16.msra.mxu0 0
        %1262 = vmatpush.bf16.msra.mxu0 0
        %1263 = vmatpush.bf16.msra.mxu0 %v1254
        %1264 = vmatmul.bf16.gmra.mxu0 %v1251
        %v1265 = vpop.f32.mrf.mxu0
        %v1266 = vadd.f32 0.0, %v1265
        %v1267 = vpop.f32.mrf.mxu0
        %1268 = vdwg.mxu0
        %v1270 = vsel %vm1153, %v1143, 0
        %v1273 = vsel %vm1157, %v1151, 0
        %1275 = vmatpush.bf16.msra.mxu0 0
        %1276 = vmatpush.bf16.msra.mxu0 0
        %1277 = vmatpush.bf16.msra.mxu0 0
        %1278 = vmatpush.bf16.msra.mxu0 0
        %1279 = vmatpush.bf16.msra.mxu0 0
        %1280 = vmatpush.bf16.msra.mxu0 0
        %1281 = vmatpush.bf16.msra.mxu0 0
        %1282 = vmatpush.bf16.msra.mxu0 %v1273
        %1283 = vmatmul.bf16.gmra.mxu0 %v1270
        %v1284 = vpop.f32.mrf.mxu0
        %v1285 = vadd.f32 0.0, %v1284
        %v1286 = vpop.f32.mrf.mxu0
        %1287 = vdwg.mxu0
        %v1289 = vsel %vm1153, %v1144, 0
        %v1292 = vsel %vm1157, %v1152, 0
        %1294 = vmatpush.bf16.msra.mxu0 0
        %1295 = vmatpush.bf16.msra.mxu0 0
        %1296 = vmatpush.bf16.msra.mxu0 0
        %1297 = vmatpush.bf16.msra.mxu0 0
        %1298 = vmatpush.bf16.msra.mxu0 0
        %1299 = vmatpush.bf16.msra.mxu0 0
        %1300 = vmatpush.bf16.msra.mxu0 0
        %1301 = vmatpush.bf16.msra.mxu0 %v1292
        %1302 = vmatmul.bf16.gmra.mxu0 %v1289
        %v1303 = vpop.f32.mrf.mxu0
        %v1304 = vadd.f32 0.0, %v1303
        %v1305 = vpop.f32.mrf.mxu0
        %1306 = vdwg.mxu0
        %1308 = vrot.lane.b32.xlu0 %v1190, 16
        %v1309 = vpop.permute.xlu0 %1308
        %1312 = vrot.lane.b32.xlu0 %v1209, 32
        %v1313 = vpop.permute.xlu0 %1312
        %1316 = vrot.lane.b32.xlu0 %v1228, 48
        %v1317 = vpop.permute.xlu0 %1316
        %1320 = vrot.lane.b32.xlu0 %v1247, 64
        %v1321 = vpop.permute.xlu0 %1320
        %1324 = vrot.lane.b32.xlu0 %v1266, 80
        %v1325 = vpop.permute.xlu0 %1324
        %1328 = vrot.lane.b32.xlu0 %v1285, 96
        %v1329 = vpop.permute.xlu0 %1328
        %1332 = vrot.lane.b32.xlu0 %v1304, 112
        %v1333 = vpop.permute.xlu0 %1332
        %v1335 = vsel %vm887, %v1171, %v1309
        %vm1336 = vcmask 261120
        %v1337 = vsel %vm1336, %v1335, %v1313
        %vm1338 = vcmask 392192
        %v1339 = vsel %vm1338, %v1337, %v1317
        %vm1340 = vcmask 523264
        %v1341 = vsel %vm1340, %v1339, %v1321
        %vm1342 = vcmask 654336
        %v1343 = vsel %vm1342, %v1341, %v1325
        %vm1344 = vcmask 785408
        %v1345 = vsel %vm1344, %v1343, %v1329
        %vm1346 = vcmask 916480
        %v1347 = vsel %vm1346, %v1345, %v1333
        %v1348 = vpack.c.bf16 %v1347, %v1347
        %v1349 = vperm.slane %v585, 1
        %v1350 = vunpack.c.h.b16 %v472
        %v1351 = vunpack.c.h.b16 %v476
        %v1352 = vunpack.c.h.b16 %v480
        %v1353 = vunpack.c.h.b16 %v484
        %v1354 = vunpack.c.h.b16 %v488
        %v1355 = vunpack.c.h.b16 %v492
        %v1356 = vunpack.c.h.b16 %v496
        %v1357 = vunpack.c.h.b16 %v500
        %v1358 = vunpack.c.h.b16 %v504
        %v1359 = vunpack.c.h.b16 %v508
        %v1360 = vunpack.c.h.b16 %v512
        %v1361 = vunpack.c.h.b16 %v516
        %v1362 = vunpack.c.h.b16 %v520
        %v1363 = vunpack.c.h.b16 %v524
        %v1364 = vunpack.c.h.b16 %v528
        %v1365 = vunpack.c.h.b16 %v532
        %v1366 = vpack.c.b16 %v1351, %v1350
        %v1367 = vpack.c.b16 %v1353, %v1352
        %v1368 = vpack.c.b16 %v1355, %v1354
        %v1369 = vpack.c.b16 %v1357, %v1356
        %v1370 = vpack.c.b16 %v1359, %v1358
        %v1371 = vpack.c.b16 %v1361, %v1360
        %v1372 = vpack.c.b16 %v1363, %v1362
        %v1373 = vpack.c.b16 %v1365, %v1364
        %1382 = vmatpush.bf16.msra.mxu0 %v1373
        %1383 = vmatpush.bf16.msra.mxu0 %v1372
        %1384 = vmatpush.bf16.msra.mxu0 %v1371
        %1385 = vmatpush.bf16.msra.mxu0 %v1370
        %1386 = vmatpush.bf16.msra.mxu0 %v1369
        %1387 = vmatpush.bf16.msra.mxu0 %v1368
        %1388 = vmatpush.bf16.msra.mxu0 %v1367
        %1389 = vmatpush.bf16.msra.mxu0 %v1366
        %1390 = vmatmul.bf16.gmra.mxu0 %v1348
        %v1391 = vpop.f32.mrf.mxu0
        %v1392 = vadd.f32 %v1349, %v1391
        %v1393 = vpop.f32.mrf.mxu0
        %1394 = vdwg.mxu0
        %v1395 = vadd.f32 %v464, %v1392
        %v1396 = vsel %vm586, %v1395, 0.0
        %1397 = vadd.xlane.f32.xlu0 %v1396
        %v1398 = vpop.xlane.xlu0 %1397
        %v1399 = vmul.f32 %v1398, %v596
        %v1400 = vsub.f32 %v1395, %v1399
        %v1401 = vmul.f32 %v1400, %v1400
        %v1402 = vsel %vm586, %v1401, 0.0
        %1403 = vadd.xlane.f32.xlu0 %v1402
        %v1404 = vpop.xlane.xlu0 %1403
        %v1405 = vmul.f32 %v1404, %v609
        %v1406 = vrsqrt.pop %v1405
        %v1407 = vmul.f32 %v1406, %v1405
        %v1408 = vmul.f32 %v1407, %v1406
        %v1409 = vmul.f32 0.5, %v1408
        %v1410 = vsub.f32 1.5, %v1409
        %v1411 = vmul.f32 %v1406, %v1410
        %v1412 = vmul.f32 %v1405, %v1411
        %vm1413 = vcmp.eq.f32.partialorder %v1405, inf
        %v1414 = vsel %vm1413, %v1405, %v1412
        %vm1415 = vcmp.eq.f32.partialorder %v1405, 0.0
        %v1416 = vand.u32 %v1405, 2147483648
        %v1417 = vsel %vm1415, %v1416, %v1414
        %v1418 = vadd.f32 %v1417, 1e-06
        %v1419 = vrcp.pop %v1418
        %v1420 = vmul.f32 %v1400, %v1419
        %v1421 = vperm.slane %v584, 2
        %v1422 = vmul.f32 %v1421, %v1420
        %v1423 = vperm.slane %v584, 3
        %v1424 = vadd.f32 %v1422, %v1423
        %v1425 = vadd.f32 %v1424, %v467
        %v1426 = vadd.f32 %v465, %v466
        %v1427 = vpack.c.bf16 %v1425, %v1425
        %v1428 = vperm.slane %v585, 2
        %v1445 = vunpack.c.l.b16 %v473
        %v1446 = vunpack.c.l.b16 %v477
        %v1447 = vunpack.c.l.b16 %v481
        %v1448 = vunpack.c.l.b16 %v485
        %v1449 = vunpack.c.l.b16 %v489
        %v1450 = vunpack.c.l.b16 %v493
        %v1451 = vunpack.c.l.b16 %v497
        %v1452 = vunpack.c.l.b16 %v501
        %v1453 = vunpack.c.l.b16 %v505
        %v1454 = vunpack.c.l.b16 %v509
        %v1455 = vunpack.c.l.b16 %v513
        %v1456 = vunpack.c.l.b16 %v517
        %v1457 = vunpack.c.l.b16 %v521
        %v1458 = vunpack.c.l.b16 %v525
        %v1459 = vunpack.c.l.b16 %v529
        %v1460 = vunpack.c.l.b16 %v533
        %v1461 = vpack.c.b16 %v1446, %v1445
        %v1462 = vpack.c.b16 %v1448, %v1447
        %v1463 = vpack.c.b16 %v1450, %v1449
        %v1464 = vpack.c.b16 %v1452, %v1451
        %v1465 = vpack.c.b16 %v1454, %v1453
        %v1466 = vpack.c.b16 %v1456, %v1455
        %v1467 = vpack.c.b16 %v1458, %v1457
        %v1468 = vpack.c.b16 %v1460, %v1459
        %1477 = vmatpush.bf16.msra.mxu0 %v1468
        %1478 = vmatpush.bf16.msra.mxu0 %v1467
        %1479 = vmatpush.bf16.msra.mxu0 %v1466
        %1480 = vmatpush.bf16.msra.mxu0 %v1465
        %1481 = vmatpush.bf16.msra.mxu0 %v1464
        %1482 = vmatpush.bf16.msra.mxu0 %v1463
        %1483 = vmatpush.bf16.msra.mxu0 %v1462
        %1484 = vmatpush.bf16.msra.mxu0 %v1461
        %1485 = vmatmul.bf16.gmra.mxu0 %v1427
        %v1486 = vpop.f32.mrf.mxu0
        %v1487 = vadd.f32 %v1428, %v1486
        %v1488 = vpop.f32.mrf.mxu0
        %1489 = vdwg.mxu0
        %v1490 = vpack.c.bf16 %v1426, %v1426
        %v1491 = vperm.slane %v585, 3
        %v1492 = vunpack.c.h.b16 %v473
        %v1493 = vunpack.c.h.b16 %v477
        %v1494 = vunpack.c.h.b16 %v481
        %v1495 = vunpack.c.h.b16 %v485
        %v1496 = vunpack.c.h.b16 %v489
        %v1497 = vunpack.c.h.b16 %v493
        %v1498 = vunpack.c.h.b16 %v497
        %v1499 = vunpack.c.h.b16 %v501
        %v1500 = vunpack.c.h.b16 %v505
        %v1501 = vunpack.c.h.b16 %v509
        %v1502 = vunpack.c.h.b16 %v513
        %v1503 = vunpack.c.h.b16 %v517
        %v1504 = vunpack.c.h.b16 %v521
        %v1505 = vunpack.c.h.b16 %v525
        %v1506 = vunpack.c.h.b16 %v529
        %v1507 = vunpack.c.h.b16 %v533
        %v1508 = vpack.c.b16 %v1493, %v1492
        %v1509 = vpack.c.b16 %v1495, %v1494
        %v1510 = vpack.c.b16 %v1497, %v1496
        %v1511 = vpack.c.b16 %v1499, %v1498
        %v1512 = vpack.c.b16 %v1501, %v1500
        %v1513 = vpack.c.b16 %v1503, %v1502
        %v1514 = vpack.c.b16 %v1505, %v1504
        %v1515 = vpack.c.b16 %v1507, %v1506
        %1524 = vmatpush.bf16.msra.mxu0 %v1515
        %1525 = vmatpush.bf16.msra.mxu0 %v1514
        %1526 = vmatpush.bf16.msra.mxu0 %v1513
        %1527 = vmatpush.bf16.msra.mxu0 %v1512
        %1528 = vmatpush.bf16.msra.mxu0 %v1511
        %1529 = vmatpush.bf16.msra.mxu0 %v1510
        %1530 = vmatpush.bf16.msra.mxu0 %v1509
        %1531 = vmatpush.bf16.msra.mxu0 %v1508
        %1532 = vmatmul.bf16.gmra.mxu0 %v1490
        %v1533 = vpop.f32.mrf.mxu0
        %v1534 = vadd.f32 %v1491, %v1533
        %v1535 = vpop.f32.mrf.mxu0
        %1536 = vdwg.mxu0
        %v1537 = vpack.c.bf16 %v465, %v465
        %v1538 = vperm.slane %v585, 4
        %v1555 = vunpack.c.l.b16 %v474
        %v1556 = vunpack.c.l.b16 %v478
        %v1557 = vunpack.c.l.b16 %v482
        %v1558 = vunpack.c.l.b16 %v486
        %v1559 = vunpack.c.l.b16 %v490
        %v1560 = vunpack.c.l.b16 %v494
        %v1561 = vunpack.c.l.b16 %v498
        %v1562 = vunpack.c.l.b16 %v502
        %v1563 = vunpack.c.l.b16 %v506
        %v1564 = vunpack.c.l.b16 %v510
        %v1565 = vunpack.c.l.b16 %v514
        %v1566 = vunpack.c.l.b16 %v518
        %v1567 = vunpack.c.l.b16 %v522
        %v1568 = vunpack.c.l.b16 %v526
        %v1569 = vunpack.c.l.b16 %v530
        %v1570 = vunpack.c.l.b16 %v534
        %v1571 = vpack.c.b16 %v1556, %v1555
        %v1572 = vpack.c.b16 %v1558, %v1557
        %v1573 = vpack.c.b16 %v1560, %v1559
        %v1574 = vpack.c.b16 %v1562, %v1561
        %v1575 = vpack.c.b16 %v1564, %v1563
        %v1576 = vpack.c.b16 %v1566, %v1565
        %v1577 = vpack.c.b16 %v1568, %v1567
        %v1578 = vpack.c.b16 %v1570, %v1569
        %1587 = vmatpush.bf16.msra.mxu0 %v1578
        %1588 = vmatpush.bf16.msra.mxu0 %v1577
        %1589 = vmatpush.bf16.msra.mxu0 %v1576
        %1590 = vmatpush.bf16.msra.mxu0 %v1575
        %1591 = vmatpush.bf16.msra.mxu0 %v1574
        %1592 = vmatpush.bf16.msra.mxu0 %v1573
        %1593 = vmatpush.bf16.msra.mxu0 %v1572
        %1594 = vmatpush.bf16.msra.mxu0 %v1571
        %1595 = vmatmul.bf16.gmra.mxu0 %v1537
        %v1596 = vpop.f32.mrf.mxu0
        %v1597 = vadd.f32 %v1538, %v1596
        %v1598 = vpop.f32.mrf.mxu0
        %1599 = vdwg.mxu0
        %1601 = vrot.lane.b32.xlu0 %v1487, 112
        %v1602 = vpop.permute.xlu0 %1601
        %1604 = vrot.lane.b32.xlu0 %v1487, 96
        %v1605 = vpop.permute.xlu0 %1604
        %1607 = vrot.lane.b32.xlu0 %v1487, 80
        %v1608 = vpop.permute.xlu0 %1607
        %1610 = vrot.lane.b32.xlu0 %v1487, 64
        %v1611 = vpop.permute.xlu0 %1610
        %1613 = vrot.lane.b32.xlu0 %v1487, 48
        %v1614 = vpop.permute.xlu0 %1613
        %1616 = vrot.lane.b32.xlu0 %v1487, 32
        %v1617 = vpop.permute.xlu0 %1616
        %1619 = vrot.lane.b32.xlu0 %v1487, 16
        %v1620 = vpop.permute.xlu0 %1619
        %1623 = vrot.lane.b32.xlu0 %v1534, 112
        %v1624 = vpop.permute.xlu0 %1623
        %1626 = vrot.lane.b32.xlu0 %v1534, 96
        %v1627 = vpop.permute.xlu0 %1626
        %1629 = vrot.lane.b32.xlu0 %v1534, 80
        %v1630 = vpop.permute.xlu0 %1629
        %1632 = vrot.lane.b32.xlu0 %v1534, 64
        %v1633 = vpop.permute.xlu0 %1632
        %1635 = vrot.lane.b32.xlu0 %v1534, 48
        %v1636 = vpop.permute.xlu0 %1635
        %1638 = vrot.lane.b32.xlu0 %v1534, 32
        %v1639 = vpop.permute.xlu0 %1638
        %1641 = vrot.lane.b32.xlu0 %v1534, 16
        %v1642 = vpop.permute.xlu0 %1641
        %1645 = vrot.lane.b32.xlu0 %v1597, 112
        %v1646 = vpop.permute.xlu0 %1645
        %1648 = vrot.lane.b32.xlu0 %v1597, 96
        %v1649 = vpop.permute.xlu0 %1648
        %1651 = vrot.lane.b32.xlu0 %v1597, 80
        %v1652 = vpop.permute.xlu0 %1651
        %1654 = vrot.lane.b32.xlu0 %v1597, 64
        %v1655 = vpop.permute.xlu0 %1654
        %1657 = vrot.lane.b32.xlu0 %v1597, 48
        %v1658 = vpop.permute.xlu0 %1657
        %1660 = vrot.lane.b32.xlu0 %v1597, 32
        %v1661 = vpop.permute.xlu0 %1660
        %1663 = vrot.lane.b32.xlu0 %v1597, 16
        %v1664 = vpop.permute.xlu0 %1663
        %v1666 = vpack.c.bf16 %v1487, %v1487
        %v1667 = vpack.c.bf16 %v1602, %v1602
        %v1668 = vpack.c.bf16 %v1605, %v1605
        %v1669 = vpack.c.bf16 %v1608, %v1608
        %v1670 = vpack.c.bf16 %v1611, %v1611
        %v1671 = vpack.c.bf16 %v1614, %v1614
        %v1672 = vpack.c.bf16 %v1617, %v1617
        %v1673 = vpack.c.bf16 %v1620, %v1620
        %v1674 = vpack.c.bf16 %v1534, %v1534
        %v1675 = vpack.c.bf16 %v1624, %v1624
        %v1676 = vpack.c.bf16 %v1627, %v1627
        %v1677 = vpack.c.bf16 %v1630, %v1630
        %v1678 = vpack.c.bf16 %v1633, %v1633
        %v1679 = vpack.c.bf16 %v1636, %v1636
        %v1680 = vpack.c.bf16 %v1639, %v1639
        %v1681 = vpack.c.bf16 %v1642, %v1642
        %v1683 = vsel %vm887, %v1666, 0
        %v1686 = vsel %vm887, %v1674, 0
        %1688 = vmatpush.bf16.xpose.msra.mxu0 0
        %1689 = vmatpush.bf16.xpose.msra.mxu0 0
        %1690 = vmatpush.bf16.xpose.msra.mxu0 0
        %1691 = vmatpush.bf16.xpose.msra.mxu0 0
        %1692 = vmatpush.bf16.xpose.msra.mxu0 0
        %1693 = vmatpush.bf16.xpose.msra.mxu0 0
        %1694 = vmatpush.bf16.xpose.msra.mxu0 0
        %1695 = vmatpush.bf16.xpose.msra.mxu0 %v1686
        %1696 = vmatmul.bf16.gmra.mxu0 %v1683
        %v1697 = vpop.f32.mrf.mxu0
        %v1698 = vadd.f32 0.0, %v1697
        %v1699 = vpop.f32.mrf.mxu0
        %1700 = vdwg.mxu0
        %v1702 = vsel %vm887, %v1667, 0
        %v1705 = vsel %vm887, %v1675, 0
        %1707 = vmatpush.bf16.xpose.msra.mxu0 0
        %1708 = vmatpush.bf16.xpose.msra.mxu0 0
        %1709 = vmatpush.bf16.xpose.msra.mxu0 0
        %1710 = vmatpush.bf16.xpose.msra.mxu0 0
        %1711 = vmatpush.bf16.xpose.msra.mxu0 0
        %1712 = vmatpush.bf16.xpose.msra.mxu0 0
        %1713 = vmatpush.bf16.xpose.msra.mxu0 0
        %1714 = vmatpush.bf16.xpose.msra.mxu0 %v1705
        %1715 = vmatmul.bf16.gmra.mxu0 %v1702
        %v1716 = vpop.f32.mrf.mxu0
        %v1717 = vadd.f32 0.0, %v1716
        %v1718 = vpop.f32.mrf.mxu0
        %1719 = vdwg.mxu0
        %v1721 = vsel %vm887, %v1668, 0
        %v1724 = vsel %vm887, %v1676, 0
        %1726 = vmatpush.bf16.xpose.msra.mxu0 0
        %1727 = vmatpush.bf16.xpose.msra.mxu0 0
        %1728 = vmatpush.bf16.xpose.msra.mxu0 0
        %1729 = vmatpush.bf16.xpose.msra.mxu0 0
        %1730 = vmatpush.bf16.xpose.msra.mxu0 0
        %1731 = vmatpush.bf16.xpose.msra.mxu0 0
        %1732 = vmatpush.bf16.xpose.msra.mxu0 0
        %1733 = vmatpush.bf16.xpose.msra.mxu0 %v1724
        %1734 = vmatmul.bf16.gmra.mxu0 %v1721
        %v1735 = vpop.f32.mrf.mxu0
        %v1736 = vadd.f32 0.0, %v1735
        %v1737 = vpop.f32.mrf.mxu0
        %1738 = vdwg.mxu0
        %v1740 = vsel %vm887, %v1669, 0
        %v1743 = vsel %vm887, %v1677, 0
        %1745 = vmatpush.bf16.xpose.msra.mxu0 0
        %1746 = vmatpush.bf16.xpose.msra.mxu0 0
        %1747 = vmatpush.bf16.xpose.msra.mxu0 0
        %1748 = vmatpush.bf16.xpose.msra.mxu0 0
        %1749 = vmatpush.bf16.xpose.msra.mxu0 0
        %1750 = vmatpush.bf16.xpose.msra.mxu0 0
        %1751 = vmatpush.bf16.xpose.msra.mxu0 0
        %1752 = vmatpush.bf16.xpose.msra.mxu0 %v1743
        %1753 = vmatmul.bf16.gmra.mxu0 %v1740
        %v1754 = vpop.f32.mrf.mxu0
        %v1755 = vadd.f32 0.0, %v1754
        %v1756 = vpop.f32.mrf.mxu0
        %1757 = vdwg.mxu0
        %v1759 = vsel %vm887, %v1670, 0
        %v1762 = vsel %vm887, %v1678, 0
        %1764 = vmatpush.bf16.xpose.msra.mxu0 0
        %1765 = vmatpush.bf16.xpose.msra.mxu0 0
        %1766 = vmatpush.bf16.xpose.msra.mxu0 0
        %1767 = vmatpush.bf16.xpose.msra.mxu0 0
        %1768 = vmatpush.bf16.xpose.msra.mxu0 0
        %1769 = vmatpush.bf16.xpose.msra.mxu0 0
        %1770 = vmatpush.bf16.xpose.msra.mxu0 0
        %1771 = vmatpush.bf16.xpose.msra.mxu0 %v1762
        %1772 = vmatmul.bf16.gmra.mxu0 %v1759
        %v1773 = vpop.f32.mrf.mxu0
        %v1774 = vadd.f32 0.0, %v1773
        %v1775 = vpop.f32.mrf.mxu0
        %1776 = vdwg.mxu0
        %v1778 = vsel %vm887, %v1671, 0
        %v1781 = vsel %vm887, %v1679, 0
        %1783 = vmatpush.bf16.xpose.msra.mxu0 0
        %1784 = vmatpush.bf16.xpose.msra.mxu0 0
        %1785 = vmatpush.bf16.xpose.msra.mxu0 0
        %1786 = vmatpush.bf16.xpose.msra.mxu0 0
        %1787 = vmatpush.bf16.xpose.msra.mxu0 0
        %1788 = vmatpush.bf16.xpose.msra.mxu0 0
        %1789 = vmatpush.bf16.xpose.msra.mxu0 0
        %1790 = vmatpush.bf16.xpose.msra.mxu0 %v1781
        %1791 = vmatmul.bf16.gmra.mxu0 %v1778
        %v1792 = vpop.f32.mrf.mxu0
        %v1793 = vadd.f32 0.0, %v1792
        %v1794 = vpop.f32.mrf.mxu0
        %1795 = vdwg.mxu0
        %v1797 = vsel %vm887, %v1672, 0
        %v1800 = vsel %vm887, %v1680, 0
        %1802 = vmatpush.bf16.xpose.msra.mxu0 0
        %1803 = vmatpush.bf16.xpose.msra.mxu0 0
        %1804 = vmatpush.bf16.xpose.msra.mxu0 0
        %1805 = vmatpush.bf16.xpose.msra.mxu0 0
        %1806 = vmatpush.bf16.xpose.msra.mxu0 0
        %1807 = vmatpush.bf16.xpose.msra.mxu0 0
        %1808 = vmatpush.bf16.xpose.msra.mxu0 0
        %1809 = vmatpush.bf16.xpose.msra.mxu0 %v1800
        %1810 = vmatmul.bf16.gmra.mxu0 %v1797
        %v1811 = vpop.f32.mrf.mxu0
        %v1812 = vadd.f32 0.0, %v1811
        %v1813 = vpop.f32.mrf.mxu0
        %1814 = vdwg.mxu0
        %v1816 = vsel %vm887, %v1673, 0
        %v1819 = vsel %vm887, %v1681, 0
        %1821 = vmatpush.bf16.xpose.msra.mxu0 0
        %1822 = vmatpush.bf16.xpose.msra.mxu0 0
        %1823 = vmatpush.bf16.xpose.msra.mxu0 0
        %1824 = vmatpush.bf16.xpose.msra.mxu0 0
        %1825 = vmatpush.bf16.xpose.msra.mxu0 0
        %1826 = vmatpush.bf16.xpose.msra.mxu0 0
        %1827 = vmatpush.bf16.xpose.msra.mxu0 0
        %1828 = vmatpush.bf16.xpose.msra.mxu0 %v1819
        %1829 = vmatmul.bf16.gmra.mxu0 %v1816
        %v1830 = vpop.f32.mrf.mxu0
        %v1831 = vadd.f32 0.0, %v1830
        %v1832 = vpop.f32.mrf.mxu0
        %1833 = vdwg.mxu0
        %v1834 = vmul.f32 %v1698, 0.25
        %v1835 = vmul.f32 %v1717, 0.25
        %v1836 = vmul.f32 %v1736, 0.25
        %v1837 = vmul.f32 %v1755, 0.25
        %v1838 = vmul.f32 %v1774, 0.25
        %v1839 = vmul.f32 %v1793, 0.25
        %v1840 = vmul.f32 %v1812, 0.25
        %v1841 = vmul.f32 %v1831, 0.25
        %v1842 = vmul.f32 %v1834, %v468
        %v1843 = vmul.f32 %v1835, %v468
        %v1844 = vmul.f32 %v1836, %v468
        %v1845 = vmul.f32 %v1837, %v468
        %v1846 = vmul.f32 %v1838, %v468
        %v1847 = vmul.f32 %v1839, %v468
        %v1848 = vmul.f32 %v1840, %v468
        %v1849 = vmul.f32 %v1841, %v468
        %v1850 = vadd.f32 %v1842, %v470
        %v1851 = vadd.f32 %v1843, %v470
        %v1852 = vadd.f32 %v1844, %v470
        %v1853 = vadd.f32 %v1845, %v470
        %v1854 = vadd.f32 %v1846, %v470
        %v1855 = vadd.f32 %v1847, %v470
        %v1856 = vadd.f32 %v1848, %v470
        %v1857 = vadd.f32 %v1849, %v470
        %v1858 = vsel %vm1048, %v1850, -inf
        %1859 = vmax.xlane.f32.xlu0 %v1858
        %v1860 = vpop.xlane.xlu0 %1859
        %v1861 = vsel %vm1048, %v1851, -inf
        %1862 = vmax.xlane.f32.xlu0 %v1861
        %v1863 = vpop.xlane.xlu0 %1862
        %v1864 = vsel %vm1048, %v1852, -inf
        %1865 = vmax.xlane.f32.xlu0 %v1864
        %v1866 = vpop.xlane.xlu0 %1865
        %v1867 = vsel %vm1048, %v1853, -inf
        %1868 = vmax.xlane.f32.xlu0 %v1867
        %v1869 = vpop.xlane.xlu0 %1868
        %v1870 = vsel %vm1048, %v1854, -inf
        %1871 = vmax.xlane.f32.xlu0 %v1870
        %v1872 = vpop.xlane.xlu0 %1871
        %v1873 = vsel %vm1048, %v1855, -inf
        %1874 = vmax.xlane.f32.xlu0 %v1873
        %v1875 = vpop.xlane.xlu0 %1874
        %v1876 = vsel %vm1048, %v1856, -inf
        %1877 = vmax.xlane.f32.xlu0 %v1876
        %v1878 = vpop.xlane.xlu0 %1877
        %v1879 = vsel %vm1048, %v1857, -inf
        %1880 = vmax.xlane.f32.xlu0 %v1879
        %v1881 = vpop.xlane.xlu0 %1880
        %v1882 = vsub.f32 %v1850, %v1860
        %v1883 = vsub.f32 %v1851, %v1863
        %v1884 = vsub.f32 %v1852, %v1866
        %v1885 = vsub.f32 %v1853, %v1869
        %v1886 = vsub.f32 %v1854, %v1872
        %v1887 = vsub.f32 %v1855, %v1875
        %v1888 = vsub.f32 %v1856, %v1878
        %v1889 = vsub.f32 %v1857, %v1881
        %v1890 = vmul.f32 %v1882, 1.442695
        %v1891 = vpow.pop %v1890
        %v1892 = vmul.f32 %v1883, 1.442695
        %v1893 = vpow.pop %v1892
        %v1894 = vmul.f32 %v1884, 1.442695
        %v1895 = vpow.pop %v1894
        %v1896 = vmul.f32 %v1885, 1.442695
        %v1897 = vpow.pop %v1896
        %v1898 = vmul.f32 %v1886, 1.442695
        %v1899 = vpow.pop %v1898
        %v1900 = vmul.f32 %v1887, 1.442695
        %v1901 = vpow.pop %v1900
        %v1902 = vmul.f32 %v1888, 1.442695
        %v1903 = vpow.pop %v1902
        %v1904 = vmul.f32 %v1889, 1.442695
        %v1905 = vpow.pop %v1904
        %v1906 = vsel %vm1048, %v1891, 0.0
        %1907 = vadd.xlane.f32.xlu0 %v1906
        %v1908 = vpop.xlane.xlu0 %1907
        %v1909 = vsel %vm1048, %v1893, 0.0
        %1910 = vadd.xlane.f32.xlu0 %v1909
        %v1911 = vpop.xlane.xlu0 %1910
        %v1912 = vsel %vm1048, %v1895, 0.0
        %1913 = vadd.xlane.f32.xlu0 %v1912
        %v1914 = vpop.xlane.xlu0 %1913
        %v1915 = vsel %vm1048, %v1897, 0.0
        %1916 = vadd.xlane.f32.xlu0 %v1915
        %v1917 = vpop.xlane.xlu0 %1916
        %v1918 = vsel %vm1048, %v1899, 0.0
        %1919 = vadd.xlane.f32.xlu0 %v1918
        %v1920 = vpop.xlane.xlu0 %1919
        %v1921 = vsel %vm1048, %v1901, 0.0
        %1922 = vadd.xlane.f32.xlu0 %v1921
        %v1923 = vpop.xlane.xlu0 %1922
        %v1924 = vsel %vm1048, %v1903, 0.0
        %1925 = vadd.xlane.f32.xlu0 %v1924
        %v1926 = vpop.xlane.xlu0 %1925
        %v1927 = vsel %vm1048, %v1905, 0.0
        %1928 = vadd.xlane.f32.xlu0 %v1927
        %v1929 = vpop.xlane.xlu0 %1928
        %v1930 = vrcp.pop %v1908
        %v1931 = vrcp.pop %v1911
        %v1932 = vrcp.pop %v1914
        %v1933 = vrcp.pop %v1917
        %v1934 = vrcp.pop %v1920
        %v1935 = vrcp.pop %v1923
        %v1936 = vrcp.pop %v1926
        %v1937 = vrcp.pop %v1929
        %v1938 = vmul.f32 %v1891, %v1930
        %v1939 = vmul.f32 %v1893, %v1931
        %v1940 = vmul.f32 %v1895, %v1932
        %v1941 = vmul.f32 %v1897, %v1933
        %v1942 = vmul.f32 %v1899, %v1934
        %v1943 = vmul.f32 %v1901, %v1935
        %v1944 = vmul.f32 %v1903, %v1936
        %v1945 = vmul.f32 %v1905, %v1937
        %v1946 = vpack.c.bf16 %v1938, %v1938
        %v1947 = vpack.c.bf16 %v1939, %v1939
        %v1948 = vpack.c.bf16 %v1940, %v1940
        %v1949 = vpack.c.bf16 %v1941, %v1941
        %v1950 = vpack.c.bf16 %v1942, %v1942
        %v1951 = vpack.c.bf16 %v1943, %v1943
        %v1952 = vpack.c.bf16 %v1944, %v1944
        %v1953 = vpack.c.bf16 %v1945, %v1945
        %v1954 = vpack.c.bf16 %v1597, %v1597
        %v1955 = vpack.c.bf16 %v1646, %v1646
        %v1956 = vpack.c.bf16 %v1649, %v1649
        %v1957 = vpack.c.bf16 %v1652, %v1652
        %v1958 = vpack.c.bf16 %v1655, %v1655
        %v1959 = vpack.c.bf16 %v1658, %v1658
        %v1960 = vpack.c.bf16 %v1661, %v1661
        %v1961 = vpack.c.bf16 %v1664, %v1664
        %v1963 = vsel %vm1153, %v1946, 0
        %v1966 = vsel %vm1157, %v1954, 0
        %1968 = vmatpush.bf16.msra.mxu0 0
        %1969 = vmatpush.bf16.msra.mxu0 0
        %1970 = vmatpush.bf16.msra.mxu0 0
        %1971 = vmatpush.bf16.msra.mxu0 0
        %1972 = vmatpush.bf16.msra.mxu0 0
        %1973 = vmatpush.bf16.msra.mxu0 0
        %1974 = vmatpush.bf16.msra.mxu0 0
        %1975 = vmatpush.bf16.msra.mxu0 %v1966
        %1976 = vmatmul.bf16.gmra.mxu0 %v1963
        %v1977 = vpop.f32.mrf.mxu0
        %v1978 = vadd.f32 0.0, %v1977
        %v1979 = vpop.f32.mrf.mxu0
        %1980 = vdwg.mxu0
        %v1982 = vsel %vm1153, %v1947, 0
        %v1985 = vsel %vm1157, %v1955, 0
        %1987 = vmatpush.bf16.msra.mxu0 0
        %1988 = vmatpush.bf16.msra.mxu0 0
        %1989 = vmatpush.bf16.msra.mxu0 0
        %1990 = vmatpush.bf16.msra.mxu0 0
        %1991 = vmatpush.bf16.msra.mxu0 0
        %1992 = vmatpush.bf16.msra.mxu0 0
        %1993 = vmatpush.bf16.msra.mxu0 0
        %1994 = vmatpush.bf16.msra.mxu0 %v1985
        %1995 = vmatmul.bf16.gmra.mxu0 %v1982
        %v1996 = vpop.f32.mrf.mxu0
        %v1997 = vadd.f32 0.0, %v1996
        %v1998 = vpop.f32.mrf.mxu0
        %1999 = vdwg.mxu0
        %v2001 = vsel %vm1153, %v1948, 0
        %v2004 = vsel %vm1157, %v1956, 0
        %2006 = vmatpush.bf16.msra.mxu0 0
        %2007 = vmatpush.bf16.msra.mxu0 0
        %2008 = vmatpush.bf16.msra.mxu0 0
        %2009 = vmatpush.bf16.msra.mxu0 0
        %2010 = vmatpush.bf16.msra.mxu0 0
        %2011 = vmatpush.bf16.msra.mxu0 0
        %2012 = vmatpush.bf16.msra.mxu0 0
        %2013 = vmatpush.bf16.msra.mxu0 %v2004
        %2014 = vmatmul.bf16.gmra.mxu0 %v2001
        %v2015 = vpop.f32.mrf.mxu0
        %v2016 = vadd.f32 0.0, %v2015
        %v2017 = vpop.f32.mrf.mxu0
        %2018 = vdwg.mxu0
        %v2020 = vsel %vm1153, %v1949, 0
        %v2023 = vsel %vm1157, %v1957, 0
        %2025 = vmatpush.bf16.msra.mxu0 0
        %2026 = vmatpush.bf16.msra.mxu0 0
        %2027 = vmatpush.bf16.msra.mxu0 0
        %2028 = vmatpush.bf16.msra.mxu0 0
        %2029 = vmatpush.bf16.msra.mxu0 0
        %2030 = vmatpush.bf16.msra.mxu0 0
        %2031 = vmatpush.bf16.msra.mxu0 0
        %2032 = vmatpush.bf16.msra.mxu0 %v2023
        %2033 = vmatmul.bf16.gmra.mxu0 %v2020
        %v2034 = vpop.f32.mrf.mxu0
        %v2035 = vadd.f32 0.0, %v2034
        %v2036 = vpop.f32.mrf.mxu0
        %2037 = vdwg.mxu0
        %v2039 = vsel %vm1153, %v1950, 0
        %v2042 = vsel %vm1157, %v1958, 0
        %2044 = vmatpush.bf16.msra.mxu0 0
        %2045 = vmatpush.bf16.msra.mxu0 0
        %2046 = vmatpush.bf16.msra.mxu0 0
        %2047 = vmatpush.bf16.msra.mxu0 0
        %2048 = vmatpush.bf16.msra.mxu0 0
        %2049 = vmatpush.bf16.msra.mxu0 0
        %2050 = vmatpush.bf16.msra.mxu0 0
        %2051 = vmatpush.bf16.msra.mxu0 %v2042
        %2052 = vmatmul.bf16.gmra.mxu0 %v2039
        %v2053 = vpop.f32.mrf.mxu0
        %v2054 = vadd.f32 0.0, %v2053
        %v2055 = vpop.f32.mrf.mxu0
        %2056 = vdwg.mxu0
        %v2058 = vsel %vm1153, %v1951, 0
        %v2061 = vsel %vm1157, %v1959, 0
        %2063 = vmatpush.bf16.msra.mxu0 0
        %2064 = vmatpush.bf16.msra.mxu0 0
        %2065 = vmatpush.bf16.msra.mxu0 0
        %2066 = vmatpush.bf16.msra.mxu0 0
        %2067 = vmatpush.bf16.msra.mxu0 0
        %2068 = vmatpush.bf16.msra.mxu0 0
        %2069 = vmatpush.bf16.msra.mxu0 0
        %2070 = vmatpush.bf16.msra.mxu0 %v2061
        %2071 = vmatmul.bf16.gmra.mxu0 %v2058
        %v2072 = vpop.f32.mrf.mxu0
        %v2073 = vadd.f32 0.0, %v2072
        %v2074 = vpop.f32.mrf.mxu0
        %2075 = vdwg.mxu0
        %v2077 = vsel %vm1153, %v1952, 0
        %v2080 = vsel %vm1157, %v1960, 0
        %2082 = vmatpush.bf16.msra.mxu0 0
        %2083 = vmatpush.bf16.msra.mxu0 0
        %2084 = vmatpush.bf16.msra.mxu0 0
        %2085 = vmatpush.bf16.msra.mxu0 0
        %2086 = vmatpush.bf16.msra.mxu0 0
        %2087 = vmatpush.bf16.msra.mxu0 0
        %2088 = vmatpush.bf16.msra.mxu0 0
        %2089 = vmatpush.bf16.msra.mxu0 %v2080
        %2090 = vmatmul.bf16.gmra.mxu0 %v2077
        %v2091 = vpop.f32.mrf.mxu0
        %v2092 = vadd.f32 0.0, %v2091
        %v2093 = vpop.f32.mrf.mxu0
        %2094 = vdwg.mxu0
        %v2096 = vsel %vm1153, %v1953, 0
        %v2099 = vsel %vm1157, %v1961, 0
        %2101 = vmatpush.bf16.msra.mxu0 0
        %2102 = vmatpush.bf16.msra.mxu0 0
        %2103 = vmatpush.bf16.msra.mxu0 0
        %2104 = vmatpush.bf16.msra.mxu0 0
        %2105 = vmatpush.bf16.msra.mxu0 0
        %2106 = vmatpush.bf16.msra.mxu0 0
        %2107 = vmatpush.bf16.msra.mxu0 0
        %2108 = vmatpush.bf16.msra.mxu0 %v2099
        %2109 = vmatmul.bf16.gmra.mxu0 %v2096
        %v2110 = vpop.f32.mrf.mxu0
        %v2111 = vadd.f32 0.0, %v2110
        %v2112 = vpop.f32.mrf.mxu0
        %2113 = vdwg.mxu0
        %2115 = vrot.lane.b32.xlu0 %v1997, 16
        %v2116 = vpop.permute.xlu0 %2115
        %2119 = vrot.lane.b32.xlu0 %v2016, 32
        %v2120 = vpop.permute.xlu0 %2119
        %2123 = vrot.lane.b32.xlu0 %v2035, 48
        %v2124 = vpop.permute.xlu0 %2123
        %2127 = vrot.lane.b32.xlu0 %v2054, 64
        %v2128 = vpop.permute.xlu0 %2127
        %2131 = vrot.lane.b32.xlu0 %v2073, 80
        %v2132 = vpop.permute.xlu0 %2131
        %2135 = vrot.lane.b32.xlu0 %v2092, 96
        %v2136 = vpop.permute.xlu0 %2135
        %2139 = vrot.lane.b32.xlu0 %v2111, 112
        %v2140 = vpop.permute.xlu0 %2139
        %v2142 = vsel %vm887, %v1978, %v2116
        %v2143 = vsel %vm1336, %v2142, %v2120
        %v2144 = vsel %vm1338, %v2143, %v2124
        %v2145 = vsel %vm1340, %v2144, %v2128
        %v2146 = vsel %vm1342, %v2145, %v2132
        %v2147 = vsel %vm1344, %v2146, %v2136
        %v2148 = vsel %vm1346, %v2147, %v2140
        %v2149 = vpack.c.bf16 %v2148, %v2148
        %v2150 = vperm.slane %v585, 5
        %v2151 = vunpack.c.h.b16 %v474
        %v2152 = vunpack.c.h.b16 %v478
        %v2153 = vunpack.c.h.b16 %v482
        %v2154 = vunpack.c.h.b16 %v486
        %v2155 = vunpack.c.h.b16 %v490
        %v2156 = vunpack.c.h.b16 %v494
        %v2157 = vunpack.c.h.b16 %v498
        %v2158 = vunpack.c.h.b16 %v502
        %v2159 = vunpack.c.h.b16 %v506
        %v2160 = vunpack.c.h.b16 %v510
        %v2161 = vunpack.c.h.b16 %v514
        %v2162 = vunpack.c.h.b16 %v518
        %v2163 = vunpack.c.h.b16 %v522
        %v2164 = vunpack.c.h.b16 %v526
        %v2165 = vunpack.c.h.b16 %v530
        %v2166 = vunpack.c.h.b16 %v534
        %v2167 = vpack.c.b16 %v2152, %v2151
        %v2168 = vpack.c.b16 %v2154, %v2153
        %v2169 = vpack.c.b16 %v2156, %v2155
        %v2170 = vpack.c.b16 %v2158, %v2157
        %v2171 = vpack.c.b16 %v2160, %v2159
        %v2172 = vpack.c.b16 %v2162, %v2161
        %v2173 = vpack.c.b16 %v2164, %v2163
        %v2174 = vpack.c.b16 %v2166, %v2165
        %2183 = vmatpush.bf16.msra.mxu0 %v2174
        %2184 = vmatpush.bf16.msra.mxu0 %v2173
        %2185 = vmatpush.bf16.msra.mxu0 %v2172
        %2186 = vmatpush.bf16.msra.mxu0 %v2171
        %2187 = vmatpush.bf16.msra.mxu0 %v2170
        %2188 = vmatpush.bf16.msra.mxu0 %v2169
        %2189 = vmatpush.bf16.msra.mxu0 %v2168
        %2190 = vmatpush.bf16.msra.mxu0 %v2167
        %2191 = vmatmul.bf16.gmra.mxu0 %v2149
        %v2192 = vpop.f32.mrf.mxu0
        %v2193 = vadd.f32 %v2150, %v2192
        %v2194 = vpop.f32.mrf.mxu0
        %2195 = vdwg.mxu0
        %v2196 = vadd.f32 %v464, %v2193
        %v2197 = vsel %vm586, %v2196, 0.0
        %2198 = vadd.xlane.f32.xlu0 %v2197
        %v2199 = vpop.xlane.xlu0 %2198
        %v2200 = vmul.f32 %v2199, %v596
        %v2201 = vsub.f32 %v2196, %v2200
        %v2202 = vmul.f32 %v2201, %v2201
        %v2203 = vsel %vm586, %v2202, 0.0
        %2204 = vadd.xlane.f32.xlu0 %v2203
        %v2205 = vpop.xlane.xlu0 %2204
        %v2206 = vmul.f32 %v2205, %v609
        %v2207 = vrsqrt.pop %v2206
        %v2208 = vmul.f32 %v2207, %v2206
        %v2209 = vmul.f32 %v2208, %v2207
        %v2210 = vmul.f32 0.5, %v2209
        %v2211 = vsub.f32 1.5, %v2210
        %v2212 = vmul.f32 %v2207, %v2211
        %v2213 = vmul.f32 %v2206, %v2212
        %vm2214 = vcmp.eq.f32.partialorder %v2206, inf
        %v2215 = vsel %vm2214, %v2206, %v2213
        %vm2216 = vcmp.eq.f32.partialorder %v2206, 0.0
        %v2217 = vand.u32 %v2206, 2147483648
        %v2218 = vsel %vm2216, %v2217, %v2215
        %v2219 = vadd.f32 %v2218, 1e-06
        %v2220 = vrcp.pop %v2219
        %v2221 = vmul.f32 %v2201, %v2220
        %v2222 = vperm.slane %v584, 4
        %v2223 = vmul.f32 %v2222, %v2221
        %v2224 = vperm.slane %v584, 5
        %v2225 = vadd.f32 %v2223, %v2224
        %v2226 = vpack.c.bf16 %v2225, %v2225
        %v2228 = vperm.slane %v583, 0
        %v2229 = vperm.slane %v583, 1
        %v2248 = vunpack.c.l.b16 %v535
        %v2249 = vunpack.c.h.b16 %v535
        %v2250 = vunpack.c.l.b16 %v536
        %v2251 = vunpack.c.h.b16 %v536
        %v2252 = vunpack.c.l.b16 %v537
        %v2253 = vunpack.c.h.b16 %v537
        %v2254 = vunpack.c.l.b16 %v538
        %v2255 = vunpack.c.h.b16 %v538
        %v2256 = vunpack.c.l.b16 %v539
        %v2257 = vunpack.c.h.b16 %v539
        %v2258 = vunpack.c.l.b16 %v540
        %v2259 = vunpack.c.h.b16 %v540
        %v2260 = vunpack.c.l.b16 %v541
        %v2261 = vunpack.c.h.b16 %v541
        %v2262 = vunpack.c.l.b16 %v542
        %v2263 = vunpack.c.h.b16 %v542
        %v2264 = vunpack.c.l.b16 %v543
        %v2265 = vunpack.c.h.b16 %v543
        %v2266 = vunpack.c.l.b16 %v544
        %v2267 = vunpack.c.h.b16 %v544
        %v2268 = vunpack.c.l.b16 %v545
        %v2269 = vunpack.c.h.b16 %v545
        %v2270 = vunpack.c.l.b16 %v546
        %v2271 = vunpack.c.h.b16 %v546
        %v2272 = vunpack.c.l.b16 %v547
        %v2273 = vunpack.c.h.b16 %v547
        %v2274 = vunpack.c.l.b16 %v548
        %v2275 = vunpack.c.h.b16 %v548
        %v2276 = vunpack.c.l.b16 %v549
        %v2277 = vunpack.c.h.b16 %v549
        %v2278 = vunpack.c.l.b16 %v550
        %v2279 = vunpack.c.h.b16 %v550
        %v2280 = vpack.c.b16 %v2250, %v2248
        %v2281 = vpack.c.b16 %v2251, %v2249
        %v2282 = vpack.c.b16 %v2254, %v2252
        %v2283 = vpack.c.b16 %v2255, %v2253
        %v2284 = vpack.c.b16 %v2258, %v2256
        %v2285 = vpack.c.b16 %v2259, %v2257
        %v2286 = vpack.c.b16 %v2262, %v2260
        %v2287 = vpack.c.b16 %v2263, %v2261
        %v2288 = vpack.c.b16 %v2266, %v2264
        %v2289 = vpack.c.b16 %v2267, %v2265
        %v2290 = vpack.c.b16 %v2270, %v2268
        %v2291 = vpack.c.b16 %v2271, %v2269
        %v2292 = vpack.c.b16 %v2274, %v2272
        %v2293 = vpack.c.b16 %v2275, %v2273
        %v2294 = vpack.c.b16 %v2278, %v2276
        %v2295 = vpack.c.b16 %v2279, %v2277
        %2312 = vmatpush.bf16.msra.mxu0 %v2294
        %2313 = vmatpush.bf16.msra.mxu0 %v2292
        %2314 = vmatpush.bf16.msra.mxu0 %v2290
        %2315 = vmatpush.bf16.msra.mxu0 %v2288
        %2316 = vmatpush.bf16.msra.mxu0 %v2286
        %2317 = vmatpush.bf16.msra.mxu0 %v2284
        %2318 = vmatpush.bf16.msra.mxu0 %v2282
        %2319 = vmatpush.bf16.msra.mxu0 %v2280
        %2320 = vmatmul.bf16.gmra.mxu0 %v2226
        %v2321 = vpop.f32.mrf.mxu0
        %v2322 = vadd.f32 %v2228, %v2321
        %v2323 = vpop.f32.mrf.mxu0
        %2324 = vdwg.mxu0
        %2325 = vmatpush.bf16.msra.mxu0 %v2295
        %2326 = vmatpush.bf16.msra.mxu0 %v2293
        %2327 = vmatpush.bf16.msra.mxu0 %v2291
        %2328 = vmatpush.bf16.msra.mxu0 %v2289
        %2329 = vmatpush.bf16.msra.mxu0 %v2287
        %2330 = vmatpush.bf16.msra.mxu0 %v2285
        %2331 = vmatpush.bf16.msra.mxu0 %v2283
        %2332 = vmatpush.bf16.msra.mxu0 %v2281
        %2333 = vmatmul.bf16.gmra.mxu0 %v2226
        %v2334 = vpop.f32.mrf.mxu0
        %v2335 = vadd.f32 %v2229, %v2334
        %v2336 = vpop.f32.mrf.mxu0
        %2337 = vdwg.mxu0
        %v2338 = vmax.f32 %v2322, 0.0
        %v2339 = vmax.f32 %v2335, 0.0
        %v2340 = vpack.c.bf16 %v2338, %v2338
        %v2341 = vpack.c.bf16 %v2339, %v2339
        %v2374 = vunpack.c.l.b16 %v551
        %v2375 = vunpack.c.l.b16 %v552
        %v2376 = vunpack.c.l.b16 %v553
        %v2377 = vunpack.c.l.b16 %v554
        %v2378 = vunpack.c.l.b16 %v555
        %v2379 = vunpack.c.l.b16 %v556
        %v2380 = vunpack.c.l.b16 %v557
        %v2381 = vunpack.c.l.b16 %v558
        %v2382 = vunpack.c.l.b16 %v559
        %v2383 = vunpack.c.l.b16 %v560
        %v2384 = vunpack.c.l.b16 %v561
        %v2385 = vunpack.c.l.b16 %v562
        %v2386 = vunpack.c.l.b16 %v563
        %v2387 = vunpack.c.l.b16 %v564
        %v2388 = vunpack.c.l.b16 %v565
        %v2389 = vunpack.c.l.b16 %v566
        %v2390 = vunpack.c.l.b16 %v567
        %v2391 = vunpack.c.l.b16 %v568
        %v2392 = vunpack.c.l.b16 %v569
        %v2393 = vunpack.c.l.b16 %v570
        %v2394 = vunpack.c.l.b16 %v571
        %v2395 = vunpack.c.l.b16 %v572
        %v2396 = vunpack.c.l.b16 %v573
        %v2397 = vunpack.c.l.b16 %v574
        %v2398 = vunpack.c.l.b16 %v575
        %v2399 = vunpack.c.l.b16 %v576
        %v2400 = vunpack.c.l.b16 %v577
        %v2401 = vunpack.c.l.b16 %v578
        %v2402 = vunpack.c.l.b16 %v579
        %v2403 = vunpack.c.l.b16 %v580
        %v2404 = vunpack.c.l.b16 %v581
        %v2405 = vunpack.c.l.b16 %v582
        %v2406 = vpack.c.b16 %v2375, %v2374
        %v2407 = vpack.c.b16 %v2377, %v2376
        %v2408 = vpack.c.b16 %v2379, %v2378
        %v2409 = vpack.c.b16 %v2381, %v2380
        %v2410 = vpack.c.b16 %v2383, %v2382
        %v2411 = vpack.c.b16 %v2385, %v2384
        %v2412 = vpack.c.b16 %v2387, %v2386
        %v2413 = vpack.c.b16 %v2389, %v2388
        %v2414 = vpack.c.b16 %v2391, %v2390
        %v2415 = vpack.c.b16 %v2393, %v2392
        %v2416 = vpack.c.b16 %v2395, %v2394
        %v2417 = vpack.c.b16 %v2397, %v2396
        %v2418 = vpack.c.b16 %v2399, %v2398
        %v2419 = vpack.c.b16 %v2401, %v2400
        %v2420 = vpack.c.b16 %v2403, %v2402
        %v2421 = vpack.c.b16 %v2405, %v2404
        %2438 = vmatpush.bf16.msra.mxu0 %v2413
        %2439 = vmatpush.bf16.msra.mxu0 %v2412
        %2440 = vmatpush.bf16.msra.mxu0 %v2411
        %2441 = vmatpush.bf16.msra.mxu0 %v2410
        %2442 = vmatpush.bf16.msra.mxu0 %v2409
        %2443 = vmatpush.bf16.msra.mxu0 %v2408
        %2444 = vmatpush.bf16.msra.mxu0 %v2407
        %2445 = vmatpush.bf16.msra.mxu0 %v2406
        %2446 = vmatmul.bf16.gmra.mxu0 %v2340
        %v2447 = vpop.f32.mrf.mxu0
        %v2448 = vadd.f32 0.0, %v2447
        %v2449 = vpop.f32.mrf.mxu0
        %2450 = vdwg.mxu0
        %2451 = vmatpush.bf16.msra.mxu0 %v2421
        %2452 = vmatpush.bf16.msra.mxu0 %v2420
        %2453 = vmatpush.bf16.msra.mxu0 %v2419
        %2454 = vmatpush.bf16.msra.mxu0 %v2418
        %2455 = vmatpush.bf16.msra.mxu0 %v2417
        %2456 = vmatpush.bf16.msra.mxu0 %v2416
        %2457 = vmatpush.bf16.msra.mxu0 %v2415
        %2458 = vmatpush.bf16.msra.mxu0 %v2414
        %2459 = vmatmul.bf16.gmra.mxu0 %v2341
        %v2460 = vpop.f32.mrf.mxu0
        %v2461 = vadd.f32 %v2448, %v2460
        %v2462 = vpop.f32.mrf.mxu0
        %2463 = vdwg.mxu0
        %v2464 = vadd.f32 %v2225, %v2461
        %v2465 = vperm.slane %v585, 6
        %v2466 = vadd.f32 %v2464, %v2465
        %2467 = vst [vmem:[%s9] sm:$0xf] %v2466
        // Predicated region
        $region73: #{transformer_forward.3} parent=55 // pred_check
          %p2468 = pneg %p253
        $region74: #{transformer_forward.3} parent=55 // pred_check_branch
          %2470 = sbr.rel (%p2468) target = $region76
        $region75: #{transformer_forward.3} parent=55 // pred_region
          _
        $region76: #{transformer_forward.3} parent=55 // pred_fallthru
          _
        // Predicated region
        $region77: #{transformer_forward.3} parent=55 // pred_check
          %p2471 = pneg %p253
        $region78: #{transformer_forward.3} parent=55 // pred_check_branch
          %2473 = sbr.rel (%p2471) target = $region80
        $region79: #{transformer_forward.3} parent=55 // pred_region
          _
        $region80: #{transformer_forward.3} parent=55 // pred_fallthru
          _
      $region56: #{transformer_forward.3} parent=5 // pred_fallthru
        _
      %p2474 = scmp.le.s32.totalorder 2, %s21
      // Predicated region
      $region81: #{transformer_forward.3} parent=5 // pred_check
        %p2475 = pneg %p2474
      $region82: #{transformer_forward.3} parent=5 // pred_check_branch
        %2477 = sbr.rel (%p2475) target = $region84
      $region83: #{transformer_forward.3} parent=5 // pred_region
        %s2478 = ssub.s32 %s21, 2
      $region84: #{transformer_forward.3} parent=5 // pred_fallthru
        _
    $region6: #{transformer_forward.3} parent=1 // loop_footer
      %s25 = sadd.s32 1, %s21
    $region7: #{transformer_forward.3} parent=1 // loop_footer_branch
      %20 = sbr.rel target = $region3
    $region8: #{transformer_forward.3} parent=1 // loop_exit
      _
    %2479 = vsyncpa [#allocation3], 1
    %s2480 = scalar_lea.sflag [#allocation3], 1
    %2481 = vsyncpa %s2480, 1
    %2482 = vsyncpa [#allocation5], 1
    %s2483 = scalar_lea.sflag [#allocation5], 1
    %2484 = vsyncpa %s2483, 1

</llo_original>
